<compile_context>
chip_gen: v7x
topology: tpu7x:2x2x1
jax: 0.10.0
libtpu: 0.0.40
codegen_flags: <defaults>
</compile_context>

<pallas_src>
import functools
import math

import jax
import jax.numpy as jnp
from jax.experimental import pallas as pl
from jax.experimental.pallas import tpu as pltpu

NEG_SLOPE = 0.2   # LeakyReLU(0.2) from the module
ATTN_DIM = 128    # SelfAttention(input_dim, 128, n_col, head) hidden dim


def _attn_disc_kernel(x_ref, wqkv_ref, bqkv_ref, wof_ref, bof_ref, o_ref, *,
                      num_heads):
    # x_ref: [TB, n_col, d_in]; weights are VMEM-resident bf16, biases f32.
    tb, n_col, d_in = x_ref.shape
    d3 = wqkv_ref.shape[1]
    d_attn = d3 // 3
    dh = d_attn // num_heads
    d_out = o_ref.shape[-1]

    # --- fused Q/K/V projection: one MXU pass with N = 3*d_attn = 384 --------
    x2 = x_ref[...].reshape(tb * n_col, d_in).astype(jnp.bfloat16)
    qkv = jnp.dot(x2, wqkv_ref[...], preferred_element_type=jnp.float32)
    qkv = (qkv + bqkv_ref[...]).astype(jnp.bfloat16).reshape(tb, n_col, d3)

    # --- per-head scaled-dot-product attention (softmax over columns) --------
    # TODO(synk): SelfAttention source is not in the spec; implemented as
    # standard multi-head scaled-dot-product attention (hidden dim 128 split
    # over `head` heads, output projection back to input_dim).
    # The 1/sqrt(dh) scale is pre-folded into Wq/bq in the wrapper, and the fc
    # layer is folded into the attention output projection (Wof = Wo @ Wfc,
    # bof = bo @ Wfc + bfc).  Each head's context multiplies a sublane-aligned
    # 32-row slice of Wof and accumulates -> no lane-dim concatenate.
    y = bof_ref[...]                                   # (1, d_out), broadcasts
    for h in range(num_heads):
        q_h = qkv[:, :, h * dh:(h + 1) * dh]
        k_h = qkv[:, :, d_attn + h * dh:d_attn + (h + 1) * dh]
        v_h = qkv[:, :, 2 * d_attn + h * dh:2 * d_attn + (h + 1) * dh]
        s = jnp.einsum('bnd,bmd->bnm', q_h, k_h,
                       preferred_element_type=jnp.float32)
        s = s - jnp.max(s, axis=-1, keepdims=True)
        p = jnp.exp(s)
        p = p * pl.reciprocal(jnp.sum(p, axis=-1, keepdims=True), approx=True)
        ctx_h = jnp.einsum('bnm,bmd->bnd', p.astype(jnp.bfloat16), v_h,
                           preferred_element_type=jnp.float32)
        ctx_h = ctx_h.reshape(tb * n_col, dh).astype(jnp.bfloat16)
        y = y + jnp.dot(ctx_h, wof_ref[h * dh:(h + 1) * dh, :],
                        preferred_element_type=jnp.float32)

    # --- LeakyReLU(0.2); Dropout(0.1) is identity in eval mode ----------------
    y = jnp.where(y >= 0, y, NEG_SLOPE * y)
    o_ref[...] = y.reshape(tb, n_col, d_out).astype(o_ref.dtype)
    # TODO(synk): Dropout(p=0.1) training-mode masking (prng) omitted; eval-mode forward.


def _pick_batch_tile(b, tb_target):
    """Largest divisor of b <= tb_target, preferring >= 2 grid steps (v7x TCs)."""
    divisors = [d for d in range(1, b + 1) if b % d == 0 and d <= tb_target]
    if not divisors:
        return 1
    multi = [d for d in divisors if b // d >= 2]
    return max(multi) if multi else max(divisors)


def attention_discriminator_forward(x, params, *, num_heads, tb=128):
    """x: [batch, n_col, input_dim] -> [batch, n_col, output_dim] (eval mode)."""
    wq, bq, wk, bk, wv, bv, wo, bo, wfc, bfc = params
    b, n_col, d_in = x.shape
    d_attn = wq.shape[1]
    d_out = wfc.shape[1]
    dh = d_attn // num_heads
    scale = 1.0 / math.sqrt(dh)

    # ---- parameter prep (weights only; no HBM pass over activations) ---------
    wqkv = jnp.concatenate([wq * scale, wk, wv], axis=1).astype(jnp.bfloat16)
    bqkv = jnp.concatenate([bq * scale, bk, bv], axis=1)      # f32 [1, 3*d_attn]
    wof = jnp.dot(wo, wfc).astype(jnp.bfloat16)               # [d_attn, d_out]
    bof = jnp.dot(bo, wfc) + bfc                               # f32 [1, d_out]

    # Batch tile: a divisor of batch (no wrapper pad / slice passes), with at
    # least 2 grid steps where possible so the "parallel" axis megacore-splits.
    tb = _pick_batch_tile(b, min(tb, b))

    def resident(shape):
        # Same block every grid step -> stays VMEM-resident.
        # (pl.Buffered(1) would halve the resident footprint on v7x; skipped
        #  for portability -- negligible at these dims.)
        return pl.BlockSpec(shape, lambda i: (0,) * len(shape))

    kernel = functools.partial(_attn_disc_kernel, num_heads=num_heads)
    return pl.pallas_call(
        kernel,
        out_shape=jax.ShapeDtypeStruct((b, n_col, d_out), x.dtype),
        grid=(b // tb,),
        in_specs=[
            pl.BlockSpec((tb, n_col, d_in), lambda i: (i, 0, 0)),     # x tile
            resident((d_in, 3 * d_attn)), resident((1, 3 * d_attn)),  # Wqkv, bqkv
            resident((d_attn, d_out)), resident((1, d_out)),          # Wo@Wfc, bof
        ],
        out_specs=pl.BlockSpec((tb, n_col, d_out), lambda i: (i, 0, 0)),
        compiler_params=pltpu.CompilerParams(
            dimension_semantics=("parallel",),   # megacore split on v7x
        ),
    )(x, wqkv, bqkv, wof, bof)


def init_params(key, d_in, d_attn, d_out):
    """Deterministic synthetic parameters (PyTorch Linear-style uniform init)."""
    ks = jax.random.split(key, 10)

    def linear(kw, kb, fan_in, fan_out):
        bound = 1.0 / math.sqrt(fan_in)
        w = jax.random.uniform(kw, (fan_in, fan_out), jnp.float32, -bound, bound)
        b = jax.random.uniform(kb, (1, fan_out), jnp.float32, -bound, bound)
        return w, b

    wq, bq = linear(ks[0], ks[1], d_in, d_attn)
    wk, bk = linear(ks[2], ks[3], d_in, d_attn)
    wv, bv = linear(ks[4], ks[5], d_in, d_attn)
    wo, bo = linear(ks[6], ks[7], d_attn, d_in)
    wfc, bfc = linear(ks[8], ks[9], d_in, d_out)
    return (wq, bq, wk, bk, wv, bv, wo, bo, wfc, bfc)


def reference_forward(x, params, *, num_heads):
    """Pure-JAX f32 reference of the same forward math (for the self-check)."""
    wq, bq, wk, bk, wv, bv, wo, bo, wfc, bfc = params
    b, n, _ = x.shape
    d_attn = wq.shape[1]
    dh = d_attn // num_heads

    q = x @ wq + bq
    k = x @ wk + bk
    v = x @ wv + bv
    qh = q.reshape(b, n, num_heads, dh).transpose(0, 2, 1, 3)
    kh = k.reshape(b, n, num_heads, dh).transpose(0, 2, 1, 3)
    vh = v.reshape(b, n, num_heads, dh).transpose(0, 2, 1, 3)
    s = jnp.einsum('bhnd,bhmd->bhnm', qh, kh) / math.sqrt(dh)
    p = jax.nn.softmax(s, axis=-1)
    ctx = jnp.einsum('bhnm,bhmd->bhnd', p, vh)
    ctx = ctx.transpose(0, 2, 1, 3).reshape(b, n, d_attn)
    attn_out = ctx @ wo + bo
    y = attn_out @ wfc + bfc
    return jnp.where(y >= 0, y, NEG_SLOPE * y)


if __name__ == "__main__":
    key = jax.random.PRNGKey(0)
    kx, kp = jax.random.split(key)

    # Small shapes consistent with the module (attention hidden dim fixed = 128):
    batch, n_col, input_dim, output_dim, head = 8, 16, 128, 128, 4

    x = jax.random.normal(kx, (batch, n_col, input_dim), dtype=jnp.float32)
    params = init_params(kp, input_dim, ATTN_DIM, output_dim)

    out = attention_discriminator_forward(x, params, num_heads=head)
    out = jax.block_until_ready(out)

    ref = reference_forward(x, params, num_heads=head)
    assert out.shape == (batch, n_col, output_dim)
    # bf16 MXU operands with f32 accumulation -> loose tolerance vs f32 reference.
    assert jnp.allclose(out, ref, atol=5e-2, rtol=5e-2), (
        float(jnp.max(jnp.abs(out - ref))))

    print("KERNEL_OK")
</pallas_src>

<mosaic_0001>
module attributes {stable_mosaic.version = 11 : i64} {
  func.func @_attn_disc_kernel(%arg0: i32, %arg1: memref<4x16x128xf32, #tpu.memory_space<vmem>>, %arg2: memref<128x384xbf16, #tpu.memory_space<vmem>>, %arg3: memref<1x384xf32, #tpu.memory_space<vmem>>, %arg4: memref<128x128xbf16, #tpu.memory_space<vmem>>, %arg5: memref<1x128xf32, #tpu.memory_space<vmem>>, %arg6: memref<4x16x128xf32, #tpu.memory_space<vmem>>) attributes {dimension_semantics = [#tpu.dimension_semantics<parallel>], iteration_bounds = array<i64: 2>, scalar_prefetch = 0 : i64, scratch_operands = 0 : i64, tpu.core_type = #tpu.core_type<tc>, window_params = [{transform_indices = @transform_0, window_bounds = array<i64: 4, 16, 128>}, {pipeline_mode = #tpu.pipeline_mode<synchronous>, transform_indices = @transform_1, window_bounds = array<i64: 128, 384>}, {pipeline_mode = #tpu.pipeline_mode<synchronous>, transform_indices = @transform_2, window_bounds = array<i64: 1, 384>}, {pipeline_mode = #tpu.pipeline_mode<synchronous>, transform_indices = @transform_3, window_bounds = array<i64: 128, 128>}, {pipeline_mode = #tpu.pipeline_mode<synchronous>, transform_indices = @transform_4, window_bounds = array<i64: 1, 128>}, {transform_indices = @transform_5, window_bounds = array<i64: 4, 16, 128>}]} {
    %c0 = arith.constant 0 : index
    %c0_0 = arith.constant 0 : index
    %c0_1 = arith.constant 0 : index
    %0 = vector.load %arg1[%c0, %c0_0, %c0_1] : memref<4x16x128xf32, #tpu.memory_space<vmem>>, vector<4x16x128xf32>
    %1 = vector.shape_cast %0 : vector<4x16x128xf32> to vector<64x128xf32>
    %2 = arith.truncf %1 : vector<64x128xf32> to vector<64x128xbf16>
    %c0_2 = arith.constant 0 : index
    %c0_3 = arith.constant 0 : index
    %3 = vector.load %arg2[%c0_2, %c0_3] : memref<128x384xbf16, #tpu.memory_space<vmem>>, vector<128x384xbf16>
    %cst = arith.constant dense<0.000000e+00> : vector<64x384xf32>
    %4 = tpu.matmul %2, %3, %cst {dimension_numbers = #tpu.dot_dimension_numbers<[1], [0], [0], [1], [0, 0, 1, 1], [], []>} : vector<64x128xbf16>, vector<128x384xbf16>, vector<64x384xf32> -> vector<64x384xf32>
    %c0_4 = arith.constant 0 : index
    %c0_5 = arith.constant 0 : index
    %5 = vector.load %arg3[%c0_4, %c0_5] : memref<1x384xf32, #tpu.memory_space<vmem>>, vector<1x384xf32>
    %6 = vector.broadcast %5 : vector<1x384xf32> to vector<64x384xf32>
    %7 = arith.addf %4, %6 : vector<64x384xf32>
    %8 = arith.truncf %7 : vector<64x384xf32> to vector<64x384xbf16>
    %9 = vector.shape_cast %8 : vector<64x384xbf16> to vector<4x16x384xbf16>
    %c0_6 = arith.constant 0 : index
    %c0_7 = arith.constant 0 : index
    %10 = vector.load %arg5[%c0_6, %c0_7] : memref<1x128xf32, #tpu.memory_space<vmem>>, vector<1x128xf32>
    %11 = vector.extract_strided_slice %9 {offsets = [0, 0, 0], sizes = [4, 16, 32], strides = [1, 1, 1]} : vector<4x16x384xbf16> to vector<4x16x32xbf16>
    %12 = vector.extract_strided_slice %9 {offsets = [0, 0, 128], sizes = [4, 16, 32], strides = [1, 1, 1]} : vector<4x16x384xbf16> to vector<4x16x32xbf16>
    %13 = vector.extract_strided_slice %9 {offsets = [0, 0, 256], sizes = [4, 16, 32], strides = [1, 1, 1]} : vector<4x16x384xbf16> to vector<4x16x32xbf16>
    "tpu.trace_start"() <{level = 10 : i32, message = "bnd,bmd->bnm"}> : () -> ()
    %cst_8 = arith.constant dense<0.000000e+00> : vector<4x16x16xf32>
    %14 = tpu.matmul %11, %12, %cst_8 {dimension_numbers = #tpu.dot_dimension_numbers<[2], [2], [1], [1], [0, 0, 0, 1, 1, 1], [0], [0]>} : vector<4x16x32xbf16>, vector<4x16x32xbf16>, vector<4x16x16xf32> -> vector<4x16x16xf32>
    "tpu.trace_stop"() : () -> ()
    %cst_9 = arith.constant dense<0xFF800000> : vector<4x16xf32>
    %15 = vector.multi_reduction <maximumf>, %14, %cst_9 [2] : vector<4x16x16xf32> to vector<4x16xf32>
    %16 = vector.shape_cast %15 : vector<4x16xf32> to vector<4x16x1xf32>
    %17 = vector.broadcast %16 : vector<4x16x1xf32> to vector<4x16x16xf32>
    %18 = arith.subf %14, %17 : vector<4x16x16xf32>
    %19 = math.exp %18 : vector<4x16x16xf32>
    %cst_10 = arith.constant dense<0.000000e+00> : vector<4x16xf32>
    %20 = vector.multi_reduction <add>, %19, %cst_10 [2] : vector<4x16x16xf32> to vector<4x16xf32>
    %21 = vector.shape_cast %20 : vector<4x16xf32> to vector<4x16x1xf32>
    %22 = tpu.reciprocal %21 {approx = true} : vector<4x16x1xf32> -> vector<4x16x1xf32>
    %23 = vector.broadcast %22 : vector<4x16x1xf32> to vector<4x16x16xf32>
    %24 = arith.mulf %19, %23 : vector<4x16x16xf32>
    %25 = arith.truncf %24 : vector<4x16x16xf32> to vector<4x16x16xbf16>
    "tpu.trace_start"() <{level = 10 : i32, message = "bnm,bmd->bnd"}> : () -> ()
    %cst_11 = arith.constant dense<0.000000e+00> : vector<4x16x32xf32>
    %26 = tpu.matmul %25, %13, %cst_11 {dimension_numbers = #tpu.dot_dimension_numbers<[2], [1], [1], [2], [0, 0, 0, 1, 1, 2], [0], [0]>} : vector<4x16x16xbf16>, vector<4x16x32xbf16>, vector<4x16x32xf32> -> vector<4x16x32xf32>
    "tpu.trace_stop"() : () -> ()
    %27 = vector.shape_cast %26 : vector<4x16x32xf32> to vector<64x32xf32>
    %28 = arith.truncf %27 : vector<64x32xf32> to vector<64x32xbf16>
    %c0_12 = arith.constant 0 : index
    %c0_13 = arith.constant 0 : index
    %29 = vector.load %arg4[%c0_12, %c0_13] : memref<128x128xbf16, #tpu.memory_space<vmem>>, vector<32x128xbf16>
    %cst_14 = arith.constant dense<0.000000e+00> : vector<64x128xf32>
    %30 = tpu.matmul %28, %29, %cst_14 {dimension_numbers = #tpu.dot_dimension_numbers<[1], [0], [0], [1], [0, 0, 1, 1], [], []>} : vector<64x32xbf16>, vector<32x128xbf16>, vector<64x128xf32> -> vector<64x128xf32>
    %31 = vector.broadcast %10 : vector<1x128xf32> to vector<64x128xf32>
    %32 = arith.addf %31, %30 : vector<64x128xf32>
    %33 = vector.extract_strided_slice %9 {offsets = [0, 0, 32], sizes = [4, 16, 32], strides = [1, 1, 1]} : vector<4x16x384xbf16> to vector<4x16x32xbf16>
    %34 = vector.extract_strided_slice %9 {offsets = [0, 0, 160], sizes = [4, 16, 32], strides = [1, 1, 1]} : vector<4x16x384xbf16> to vector<4x16x32xbf16>
    %35 = vector.extract_strided_slice %9 {offsets = [0, 0, 288], sizes = [4, 16, 32], strides = [1, 1, 1]} : vector<4x16x384xbf16> to vector<4x16x32xbf16>
    "tpu.trace_start"() <{level = 10 : i32, message = "bnd,bmd->bnm"}> : () -> ()
    %cst_15 = arith.constant dense<0.000000e+00> : vector<4x16x16xf32>
    %36 = tpu.matmul %33, %34, %cst_15 {dimension_numbers = #tpu.dot_dimension_numbers<[2], [2], [1], [1], [0, 0, 0, 1, 1, 1], [0], [0]>} : vector<4x16x32xbf16>, vector<4x16x32xbf16>, vector<4x16x16xf32> -> vector<4x16x16xf32>
    "tpu.trace_stop"() : () -> ()
    %cst_16 = arith.constant dense<0xFF800000> : vector<4x16xf32>
    %37 = vector.multi_reduction <maximumf>, %36, %cst_16 [2] : vector<4x16x16xf32> to vector<4x16xf32>
    %38 = vector.shape_cast %37 : vector<4x16xf32> to vector<4x16x1xf32>
    %39 = vector.broadcast %38 : vector<4x16x1xf32> to vector<4x16x16xf32>
    %40 = arith.subf %36, %39 : vector<4x16x16xf32>
    %41 = math.exp %40 : vector<4x16x16xf32>
    %cst_17 = arith.constant dense<0.000000e+00> : vector<4x16xf32>
    %42 = vector.multi_reduction <add>, %41, %cst_17 [2] : vector<4x16x16xf32> to vector<4x16xf32>
    %43 = vector.shape_cast %42 : vector<4x16xf32> to vector<4x16x1xf32>
    %44 = tpu.reciprocal %43 {approx = true} : vector<4x16x1xf32> -> vector<4x16x1xf32>
    %45 = vector.broadcast %44 : vector<4x16x1xf32> to vector<4x16x16xf32>
    %46 = arith.mulf %41, %45 : vector<4x16x16xf32>
    %47 = arith.truncf %46 : vector<4x16x16xf32> to vector<4x16x16xbf16>
    "tpu.trace_start"() <{level = 10 : i32, message = "bnm,bmd->bnd"}> : () -> ()
    %cst_18 = arith.constant dense<0.000000e+00> : vector<4x16x32xf32>
    %48 = tpu.matmul %47, %35, %cst_18 {dimension_numbers = #tpu.dot_dimension_numbers<[2], [1], [1], [2], [0, 0, 0, 1, 1, 2], [0], [0]>} : vector<4x16x16xbf16>, vector<4x16x32xbf16>, vector<4x16x32xf32> -> vector<4x16x32xf32>
    "tpu.trace_stop"() : () -> ()
    %49 = vector.shape_cast %48 : vector<4x16x32xf32> to vector<64x32xf32>
    %50 = arith.truncf %49 : vector<64x32xf32> to vector<64x32xbf16>
    %c32 = arith.constant 32 : index
    %c0_19 = arith.constant 0 : index
    %51 = vector.load %arg4[%c32, %c0_19] : memref<128x128xbf16, #tpu.memory_space<vmem>>, vector<32x128xbf16>
    %cst_20 = arith.constant dense<0.000000e+00> : vector<64x128xf32>
    %52 = tpu.matmul %50, %51, %cst_20 {dimension_numbers = #tpu.dot_dimension_numbers<[1], [0], [0], [1], [0, 0, 1, 1], [], []>} : vector<64x32xbf16>, vector<32x128xbf16>, vector<64x128xf32> -> vector<64x128xf32>
    %53 = arith.addf %32, %52 : vector<64x128xf32>
    %54 = vector.extract_strided_slice %9 {offsets = [0, 0, 64], sizes = [4, 16, 32], strides = [1, 1, 1]} : vector<4x16x384xbf16> to vector<4x16x32xbf16>
    %55 = vector.extract_strided_slice %9 {offsets = [0, 0, 192], sizes = [4, 16, 32], strides = [1, 1, 1]} : vector<4x16x384xbf16> to vector<4x16x32xbf16>
    %56 = vector.extract_strided_slice %9 {offsets = [0, 0, 320], sizes = [4, 16, 32], strides = [1, 1, 1]} : vector<4x16x384xbf16> to vector<4x16x32xbf16>
    "tpu.trace_start"() <{level = 10 : i32, message = "bnd,bmd->bnm"}> : () -> ()
    %cst_21 = arith.constant dense<0.000000e+00> : vector<4x16x16xf32>
    %57 = tpu.matmul %54, %55, %cst_21 {dimension_numbers = #tpu.dot_dimension_numbers<[2], [2], [1], [1], [0, 0, 0, 1, 1, 1], [0], [0]>} : vector<4x16x32xbf16>, vector<4x16x32xbf16>, vector<4x16x16xf32> -> vector<4x16x16xf32>
    "tpu.trace_stop"() : () -> ()
    %cst_22 = arith.constant dense<0xFF800000> : vector<4x16xf32>
    %58 = vector.multi_reduction <maximumf>, %57, %cst_22 [2] : vector<4x16x16xf32> to vector<4x16xf32>
    %59 = vector.shape_cast %58 : vector<4x16xf32> to vector<4x16x1xf32>
    %60 = vector.broadcast %59 : vector<4x16x1xf32> to vector<4x16x16xf32>
    %61 = arith.subf %57, %60 : vector<4x16x16xf32>
    %62 = math.exp %61 : vector<4x16x16xf32>
    %cst_23 = arith.constant dense<0.000000e+00> : vector<4x16xf32>
    %63 = vector.multi_reduction <add>, %62, %cst_23 [2] : vector<4x16x16xf32> to vector<4x16xf32>
    %64 = vector.shape_cast %63 : vector<4x16xf32> to vector<4x16x1xf32>
    %65 = tpu.reciprocal %64 {approx = true} : vector<4x16x1xf32> -> vector<4x16x1xf32>
    %66 = vector.broadcast %65 : vector<4x16x1xf32> to vector<4x16x16xf32>
    %67 = arith.mulf %62, %66 : vector<4x16x16xf32>
    %68 = arith.truncf %67 : vector<4x16x16xf32> to vector<4x16x16xbf16>
    "tpu.trace_start"() <{level = 10 : i32, message = "bnm,bmd->bnd"}> : () -> ()
    %cst_24 = arith.constant dense<0.000000e+00> : vector<4x16x32xf32>
    %69 = tpu.matmul %68, %56, %cst_24 {dimension_numbers = #tpu.dot_dimension_numbers<[2], [1], [1], [2], [0, 0, 0, 1, 1, 2], [0], [0]>} : vector<4x16x16xbf16>, vector<4x16x32xbf16>, vector<4x16x32xf32> -> vector<4x16x32xf32>
    "tpu.trace_stop"() : () -> ()
    %70 = vector.shape_cast %69 : vector<4x16x32xf32> to vector<64x32xf32>
    %71 = arith.truncf %70 : vector<64x32xf32> to vector<64x32xbf16>
    %c64 = arith.constant 64 : index
    %c0_25 = arith.constant 0 : index
    %72 = vector.load %arg4[%c64, %c0_25] : memref<128x128xbf16, #tpu.memory_space<vmem>>, vector<32x128xbf16>
    %cst_26 = arith.constant dense<0.000000e+00> : vector<64x128xf32>
    %73 = tpu.matmul %71, %72, %cst_26 {dimension_numbers = #tpu.dot_dimension_numbers<[1], [0], [0], [1], [0, 0, 1, 1], [], []>} : vector<64x32xbf16>, vector<32x128xbf16>, vector<64x128xf32> -> vector<64x128xf32>
    %74 = arith.addf %53, %73 : vector<64x128xf32>
    %75 = vector.extract_strided_slice %9 {offsets = [0, 0, 96], sizes = [4, 16, 32], strides = [1, 1, 1]} : vector<4x16x384xbf16> to vector<4x16x32xbf16>
    %76 = vector.extract_strided_slice %9 {offsets = [0, 0, 224], sizes = [4, 16, 32], strides = [1, 1, 1]} : vector<4x16x384xbf16> to vector<4x16x32xbf16>
    %77 = vector.extract_strided_slice %9 {offsets = [0, 0, 352], sizes = [4, 16, 32], strides = [1, 1, 1]} : vector<4x16x384xbf16> to vector<4x16x32xbf16>
    "tpu.trace_start"() <{level = 10 : i32, message = "bnd,bmd->bnm"}> : () -> ()
    %cst_27 = arith.constant dense<0.000000e+00> : vector<4x16x16xf32>
    %78 = tpu.matmul %75, %76, %cst_27 {dimension_numbers = #tpu.dot_dimension_numbers<[2], [2], [1], [1], [0, 0, 0, 1, 1, 1], [0], [0]>} : vector<4x16x32xbf16>, vector<4x16x32xbf16>, vector<4x16x16xf32> -> vector<4x16x16xf32>
    "tpu.trace_stop"() : () -> ()
    %cst_28 = arith.constant dense<0xFF800000> : vector<4x16xf32>
    %79 = vector.multi_reduction <maximumf>, %78, %cst_28 [2] : vector<4x16x16xf32> to vector<4x16xf32>
    %80 = vector.shape_cast %79 : vector<4x16xf32> to vector<4x16x1xf32>
    %81 = vector.broadcast %80 : vector<4x16x1xf32> to vector<4x16x16xf32>
    %82 = arith.subf %78, %81 : vector<4x16x16xf32>
    %83 = math.exp %82 : vector<4x16x16xf32>
    %cst_29 = arith.constant dense<0.000000e+00> : vector<4x16xf32>
    %84 = vector.multi_reduction <add>, %83, %cst_29 [2] : vector<4x16x16xf32> to vector<4x16xf32>
    %85 = vector.shape_cast %84 : vector<4x16xf32> to vector<4x16x1xf32>
    %86 = tpu.reciprocal %85 {approx = true} : vector<4x16x1xf32> -> vector<4x16x1xf32>
    %87 = vector.broadcast %86 : vector<4x16x1xf32> to vector<4x16x16xf32>
    %88 = arith.mulf %83, %87 : vector<4x16x16xf32>
    %89 = arith.truncf %88 : vector<4x16x16xf32> to vector<4x16x16xbf16>
    "tpu.trace_start"() <{level = 10 : i32, message = "bnm,bmd->bnd"}> : () -> ()
    %cst_30 = arith.constant dense<0.000000e+00> : vector<4x16x32xf32>
    %90 = tpu.matmul %89, %77, %cst_30 {dimension_numbers = #tpu.dot_dimension_numbers<[2], [1], [1], [2], [0, 0, 0, 1, 1, 2], [0], [0]>} : vector<4x16x16xbf16>, vector<4x16x32xbf16>, vector<4x16x32xf32> -> vector<4x16x32xf32>
    "tpu.trace_stop"() : () -> ()
    %91 = vector.shape_cast %90 : vector<4x16x32xf32> to vector<64x32xf32>
    %92 = arith.truncf %91 : vector<64x32xf32> to vector<64x32xbf16>
    %c96 = arith.constant 96 : index
    %c0_31 = arith.constant 0 : index
    %93 = vector.load %arg4[%c96, %c0_31] : memref<128x128xbf16, #tpu.memory_space<vmem>>, vector<32x128xbf16>
    %cst_32 = arith.constant dense<0.000000e+00> : vector<64x128xf32>
    %94 = tpu.matmul %92, %93, %cst_32 {dimension_numbers = #tpu.dot_dimension_numbers<[1], [0], [0], [1], [0, 0, 1, 1], [], []>} : vector<64x32xbf16>, vector<32x128xbf16>, vector<64x128xf32> -> vector<64x128xf32>
    %95 = arith.addf %74, %94 : vector<64x128xf32>
    %cst_33 = arith.constant 0.000000e+00 : f32
    %96 = vector.broadcast %cst_33 : f32 to vector<64x128xf32>
    %97 = arith.cmpf oge, %95, %96 : vector<64x128xf32>
    %cst_34 = arith.constant 2.000000e-01 : f32
    %98 = vector.broadcast %cst_34 : f32 to vector<64x128xf32>
    %99 = arith.mulf %98, %95 : vector<64x128xf32>
    %100 = arith.select %97, %95, %99 : vector<64x128xi1>, vector<64x128xf32>
    %101 = vector.shape_cast %100 : vector<64x128xf32> to vector<4x16x128xf32>
    %c0_35 = arith.constant 0 : index
    %c0_36 = arith.constant 0 : index
    %c0_37 = arith.constant 0 : index
    %102 = vector.load %arg6[%c0_35, %c0_36, %c0_37] : memref<4x16x128xf32, #tpu.memory_space<vmem>>, vector<4x16x128xf32>
    tpu.vector_store %arg6[%c0_35, %c0_36, %c0_37], %101 {strides = array<i32>} : memref<4x16x128xf32, #tpu.memory_space<vmem>>, vector<4x16x128xf32>,
    return
  }
  func.func @transform_0(%arg0: i32) -> (i32, i32, i32) {
    %c0_i32 = arith.constant 0 : i32
    %c0_i32_0 = arith.constant 0 : i32
    %c0_i32_1 = arith.constant 0 : i32
    return %arg0, %c0_i32, %c0_i32_0 : i32, i32, i32
  }
  func.func @transform_1(%arg0: i32) -> (i32, i32) {
    %c0_i32 = arith.constant 0 : i32
    %c0_i32_0 = arith.constant 0 : i32
    %c0_i32_1 = arith.constant 0 : i32
    return %c0_i32, %c0_i32_0 : i32, i32
  }
  func.func @transform_2(%arg0: i32) -> (i32, i32) {
    %c0_i32 = arith.constant 0 : i32
    %c0_i32_0 = arith.constant 0 : i32
    %c0_i32_1 = arith.constant 0 : i32
    return %c0_i32, %c0_i32_0 : i32, i32
  }
  func.func @transform_3(%arg0: i32) -> (i32, i32) {
    %c0_i32 = arith.constant 0 : i32
    %c0_i32_0 = arith.constant 0 : i32
    %c0_i32_1 = arith.constant 0 : i32
    return %c0_i32, %c0_i32_0 : i32, i32
  }
  func.func @transform_4(%arg0: i32) -> (i32, i32) {
    %c0_i32 = arith.constant 0 : i32
    %c0_i32_0 = arith.constant 0 : i32
    %c0_i32_1 = arith.constant 0 : i32
    return %c0_i32, %c0_i32_0 : i32, i32
  }
  func.func @transform_5(%arg0: i32) -> (i32, i32, i32) {
    %c0_i32 = arith.constant 0 : i32
    %c0_i32_0 = arith.constant 0 : i32
    %c0_i32_1 = arith.constant 0 : i32
    return %arg0, %c0_i32, %c0_i32_0 : i32, i32, i32
  }
}

</mosaic_0001>

<llo_original>
// kernel: tpu_custom_call.1
$region0: #{tpu_custom_call.1}
  #allocation0 [shape = 'u32[]', space=smem, size = 0x4, offset = 0x4, fixed_abs, tag = 'smem constant byte address 0x4 - core index']
  #allocation1 [shape = 'u32[144,128]{1,0:T(1,128)}', space=vmem, size = 0x12000, scoped, tag = 'internal scratch']
  %s0 = inlined_call_operand.hbm [shape: f32[8,16,128], index: 0, kind: input, shape index: {}]
  %s1 = inlined_call_operand.hbm [shape: bf16[128,384], index: 1, kind: input, shape index: {}]
  %s2 = inlined_call_operand.vmem [shape: f32[1,384], index: 2, kind: input, shape index: {}]
  %s3 = inlined_call_operand.hbm [shape: bf16[128,128], index: 3, kind: input, shape index: {}]
  %s4 = inlined_call_operand.vmem [shape: f32[1,128], index: 4, kind: input, shape index: {}]
  %s5 = inlined_call_operand.hbm [shape: f32[8,16,128], index: 5, kind: output, shape index: {}]
  %s6 = sld [smem:[#allocation0]]
  $region65: #{tpu_custom_call.1} parent=0
    _
  %s8 = ssub.s32 1, %s6
  %s9 = scalar_select 0, %s8, %s6
  $region1: #{tpu_custom_call.1} parent=0
    #allocation2 [shape = 'u8[65536]{0}', space=vmem, size = 0x10000, scoped, tag = 'input window, operand 0']
    #allocation3 [shape = 's32[2]{0}', space=sflag, size = 0x8, scoped, tag = 'scoped memory for tpu_custom_call.1']
    #allocation4 [shape = 's32[2]{0}', space=sflag, size = 0x8, scoped, tag = 'scoped memory for tpu_custom_call.1']
    #allocation5 [shape = 'u8[98304]{0}', space=vmem, size = 0x18000, scoped, tag = 'input window, operand 1, single buffered']
    #allocation6 [shape = 's32[1]{0}', space=sflag, size = 0x4, scoped, tag = 'scoped memory for tpu_custom_call.1']
    #allocation7 [shape = 'u8[32768]{0}', space=vmem, size = 0x8000, scoped, tag = 'input window, operand 3, single buffered']
    #allocation8 [shape = 'u8[65536]{0}', space=vmem, size = 0x10000, scoped, tag = 'output window, operand 0']
    %10 = vsyncpa [#allocation3], 0
    %s11 = scalar_lea.sflag [#allocation3], 1
    %12 = vsyncpa %s11, 0
    %13 = vsyncpa [#allocation6], 0
    %14 = vsyncpa [#allocation4], 0
    %s15 = scalar_lea.sflag [#allocation4], 1
    %16 = vsyncpa %s15, 0
    loop: start=0, step=1, limit=4
    $region2: #{tpu_custom_call.1} parent=1 // loop_pre_header
      _
    $region3: #{tpu_custom_call.1} parent=1 // loop_header
      %s18 = sphi 0, %s22
      %p19 = scmp.ge.s32.totalorder %s18, 4
      %s28 = sphi 0, %s30
      %s31 = sphi 0, %s28
      %s32 = sphi 0, %s31
      %s48 = sphi 0, %s32
      %s52 = sphi 0, %s52
      %s54 = sphi 0, %s52
      %s55 = sphi 0, %s54
      %s69 = sphi 0, %s55
      %s73 = sphi 0, %s73
      %s75 = sphi 0, %s73
      %s76 = sphi 0, %s75
      %s90 = sphi 0, %s76
      %s94 = sphi 0, %s94
      %s96 = sphi 0, %s94
      %s97 = sphi 0, %s96
      %s111 = sphi 0, %s97
      %s115 = sphi 0, %s115
      %s117 = sphi 0, %s115
      %s118 = sphi 0, %s117
      %s132 = sphi 0, %s118
      %s138 = sphi 0, %s140
      %s141 = sphi 0, %s138
      %s142 = sphi 0, %s141
      %s158 = sphi 0, %s142
    $region4: #{tpu_custom_call.1} parent=1 // loop_header_branch
      %21 = sbr.rel (%p19) target = $region8
    $region5: #{tpu_custom_call.1} parent=1 // loop_body
      %s23 = ssub.s32 %s18, 1
      %s24 = ssub.s32 %s18, 2
      %s25 = sadd.s32 %s18, 1
      %s26 = ssub.s32 %s18, %s25
      %p27 = scmp.eq.s32.totalorder %s26, 0
      %s29 = sadd.s32 %s28, 1
      %s30 = scalar_select %p27, %s28, %s29
      %p33 = pneg %p27
      %p34 = scmp.eq.s32.totalorder %s18, 1
      %p35 = por %p33, %p34
      %p36 = scmp.ne.s32.totalorder %s28, %s31
      %p37 = scmp.eq.s32.totalorder %s18, 0
      %p38 = por %p36, %p37
      %p39 = scmp.ne.s32.totalorder %s28, %s31
      %p40 = scmp.eq.s32.totalorder %s23, 1
      %p41 = por %p39, %p40
      %p42 = scmp.ne.s32.totalorder %s31, %s32
      %p43 = scmp.eq.s32.totalorder %s23, 0
      %p44 = por %p42, %p43
      %p45 = scmp.ne.s32.totalorder %s31, %s32
      %p46 = scmp.eq.s32.totalorder %s24, 1
      %p47 = por %p45, %p46
      %p49 = scmp.ne.s32.totalorder %s32, %s48
      %p50 = scmp.eq.s32.totalorder %s24, 0
      %p51 = por %p49, %p50
      %s53 = sadd.s32 %s52, 1
      %p56 = scmp.eq.s32.totalorder %s18, 1
      %p57 = scmp.ne.s32.totalorder %s52, %s54
      %p58 = scmp.eq.s32.totalorder %s18, 0
      %p59 = por %p57, %p58
      %p60 = scmp.ne.s32.totalorder %s52, %s54
      %p61 = scmp.eq.s32.totalorder %s23, 1
      %p62 = por %p60, %p61
      %p63 = scmp.ne.s32.totalorder %s54, %s55
      %p64 = scmp.eq.s32.totalorder %s23, 0
      %p65 = por %p63, %p64
      %p66 = scmp.ne.s32.totalorder %s54, %s55
      %p67 = scmp.eq.s32.totalorder %s24, 1
      %p68 = por %p66, %p67
      %p70 = scmp.ne.s32.totalorder %s55, %s69
      %p71 = scmp.eq.s32.totalorder %s24, 0
      %p72 = por %p70, %p71
      %s74 = sadd.s32 %s73, 1
      %p77 = scmp.eq.s32.totalorder %s18, 1
      %p78 = scmp.ne.s32.totalorder %s73, %s75
      %p79 = scmp.eq.s32.totalorder %s18, 0
      %p80 = por %p78, %p79
      %p81 = scmp.ne.s32.totalorder %s73, %s75
      %p82 = scmp.eq.s32.totalorder %s23, 1
      %p83 = por %p81, %p82
      %p84 = scmp.ne.s32.totalorder %s75, %s76
      %p85 = scmp.eq.s32.totalorder %s23, 0
      %p86 = por %p84, %p85
      %p87 = scmp.ne.s32.totalorder %s75, %s76
      %p88 = scmp.eq.s32.totalorder %s24, 1
      %p89 = por %p87, %p88
      %p91 = scmp.ne.s32.totalorder %s76, %s90
      %p92 = scmp.eq.s32.totalorder %s24, 0
      %p93 = por %p91, %p92
      %s95 = sadd.s32 %s94, 1
      %p98 = scmp.eq.s32.totalorder %s18, 1
      %p99 = scmp.ne.s32.totalorder %s94, %s96
      %p100 = scmp.eq.s32.totalorder %s18, 0
      %p101 = por %p99, %p100
      %p102 = scmp.ne.s32.totalorder %s94, %s96
      %p103 = scmp.eq.s32.totalorder %s23, 1
      %p104 = por %p102, %p103
      %p105 = scmp.ne.s32.totalorder %s96, %s97
      %p106 = scmp.eq.s32.totalorder %s23, 0
      %p107 = por %p105, %p106
      %p108 = scmp.ne.s32.totalorder %s96, %s97
      %p109 = scmp.eq.s32.totalorder %s24, 1
      %p110 = por %p108, %p109
      %p112 = scmp.ne.s32.totalorder %s97, %s111
      %p113 = scmp.eq.s32.totalorder %s24, 0
      %p114 = por %p112, %p113
      %s116 = sadd.s32 %s115, 1
      %p119 = scmp.eq.s32.totalorder %s18, 1
      %p120 = scmp.ne.s32.totalorder %s115, %s117
      %p121 = scmp.eq.s32.totalorder %s18, 0
      %p122 = por %p120, %p121
      %p123 = scmp.ne.s32.totalorder %s115, %s117
      %p124 = scmp.eq.s32.totalorder %s23, 1
      %p125 = por %p123, %p124
      %p126 = scmp.ne.s32.totalorder %s117, %s118
      %p127 = scmp.eq.s32.totalorder %s23, 0
      %p128 = por %p126, %p127
      %p129 = scmp.ne.s32.totalorder %s117, %s118
      %p130 = scmp.eq.s32.totalorder %s24, 1
      %p131 = por %p129, %p130
      %p133 = scmp.ne.s32.totalorder %s118, %s132
      %p134 = scmp.eq.s32.totalorder %s24, 0
      %p135 = por %p133, %p134
      %s136 = ssub.s32 %s18, %s25
      %p137 = scmp.eq.s32.totalorder %s136, 0
      %s139 = sadd.s32 %s138, 1
      %s140 = scalar_select %p137, %s138, %s139
      %p143 = pneg %p137
      %p144 = scmp.eq.s32.totalorder %s18, 1
      %p145 = por %p143, %p144
      %p146 = scmp.ne.s32.totalorder %s138, %s141
      %p147 = scmp.eq.s32.totalorder %s18, 0
      %p148 = por %p146, %p147
      %p149 = scmp.ne.s32.totalorder %s138, %s141
      %p150 = scmp.eq.s32.totalorder %s23, 1
      %p151 = por %p149, %p150
      %p152 = scmp.ne.s32.totalorder %s141, %s142
      %p153 = scmp.eq.s32.totalorder %s23, 0
      %p154 = por %p152, %p153
      %p155 = scmp.ne.s32.totalorder %s141, %s142
      %p156 = scmp.eq.s32.totalorder %s24, 1
      %p157 = por %p155, %p156
      %p159 = scmp.ne.s32.totalorder %s142, %s158
      %p160 = scmp.eq.s32.totalorder %s24, 0
      %p161 = por %p159, %p160
      %p162 = scmp.le.s32.totalorder 1, %s18
      %p163 = scmp.lt.s32.totalorder %s18, 3
      %p164 = pnand %p162, %p163
      %p165 = pneg %p164
      // Predicated region
      $region9: #{tpu_custom_call.1} parent=5 // pred_check
        _
      $region10: #{tpu_custom_call.1} parent=5 // pred_check_branch
        %167 = sbr.rel (%p164) target = $region12
      $region11: #{tpu_custom_call.1} parent=5 // pred_region
        %s168 = ssub.s32 %s18, 1
        // Predicated region
        $region13: #{tpu_custom_call.1} parent=11 // pred_check
          %p169 = pneg %p65
        $region14: #{tpu_custom_call.1} parent=11 // pred_check_branch
          %171 = sbr.rel (%p169) target = $region16
        $region15: #{tpu_custom_call.1} parent=11 // pred_region
          %s173 = ssub.s32 3072, 3072
          %174 = vsyncadd [#allocation6], %s173
          %s175 = sshll.u32 [#allocation5], 4
          %s176 = int_to_ptr.vmem [resolvable:$true] %s175
          %181 = dma.hbm_to_vmem [thread:$0]  %s1, 3072, %s176, [#allocation6], 192, 192, 12
        $region16: #{tpu_custom_call.1} parent=11 // pred_fallthru
          _
        // Predicated region
        $region17: #{tpu_custom_call.1} parent=11 // pred_check
          %p182 = pneg %p86
        $region18: #{tpu_custom_call.1} parent=11 // pred_check_branch
          %184 = sbr.rel (%p182) target = $region20
        $region19: #{tpu_custom_call.1} parent=11 // pred_region
          _
        $region20: #{tpu_custom_call.1} parent=11 // pred_fallthru
          _
        // Predicated region
        $region21: #{tpu_custom_call.1} parent=11 // pred_check
          %p185 = pneg %p107
        $region22: #{tpu_custom_call.1} parent=11 // pred_check_branch
          %187 = sbr.rel (%p185) target = $region24
        $region23: #{tpu_custom_call.1} parent=11 // pred_region
          %s189 = ssub.s32 1024, 1024
          %190 = vsyncadd [#allocation6], %s189
          %s191 = sshll.u32 [#allocation7], 4
          %s192 = int_to_ptr.vmem [resolvable:$true] %s191
          %197 = dma.hbm_to_vmem [thread:$0]  %s3, 1024, %s192, [#allocation6], 64, 64, 4
        $region24: #{tpu_custom_call.1} parent=11 // pred_fallthru
          _
        // Predicated region
        $region25: #{tpu_custom_call.1} parent=11 // pred_check
          %p198 = pneg %p128
        $region26: #{tpu_custom_call.1} parent=11 // pred_check_branch
          %200 = sbr.rel (%p198) target = $region28
        $region27: #{tpu_custom_call.1} parent=11 // pred_region
          _
        $region28: #{tpu_custom_call.1} parent=11 // pred_fallthru
          _
      $region12: #{tpu_custom_call.1} parent=5 // pred_fallthru
        _
      %p201 = scmp.lt.s32.totalorder %s18, 2
      // Predicated region
      $region29: #{tpu_custom_call.1} parent=5 // pred_check
        %p202 = pneg %p201
      $region30: #{tpu_custom_call.1} parent=5 // pred_check_branch
        %204 = sbr.rel (%p202) target = $region32
      $region31: #{tpu_custom_call.1} parent=5 // pred_region
        // Predicated region
        $region33: #{tpu_custom_call.1} parent=31 // pred_check
          %p205 = pneg %p38
        $region34: #{tpu_custom_call.1} parent=31 // pred_check_branch
          %207 = sbr.rel (%p205) target = $region36
        $region35: #{tpu_custom_call.1} parent=31 // pred_region
          %s208 = sand.u32 %s28, 1
          %s209 = scalar_lea.sflag [#allocation3], %s208
          %s210 = sand.u32 %s28, 1
          %s211 = smul.addr %s210, 64
          %s212 = scalar_lea.vmem [#allocation2], %s211
          %s213 = smul.u32 4, %s18
          %s215 = ssub.s32 1024, 1024
          %216 = vsyncadd %s209, %s215
          %s217 = smul.addr %s213, 2
          %s218 = smul.addr %s217, 128
          %s219 = scalar_lea.hbm %s0, %s218
          %s220 = sshll.u32 %s212, 4
          %s221 = int_to_ptr.vmem [resolvable:$true] %s220
          %226 = dma.hbm_to_vmem [thread:$0]  %s219, 1024, %s221, %s209, 128, 128, 8
        $region36: #{tpu_custom_call.1} parent=31 // pred_fallthru
          _
      $region32: #{tpu_custom_call.1} parent=5 // pred_fallthru
        _
      %p227 = scmp.le.s32.totalorder 1, %s18
      %p228 = scmp.lt.s32.totalorder %s18, 3
      %p229 = pnand %p227, %p228
      %p230 = pneg %p229
      // Predicated region
      $region37: #{tpu_custom_call.1} parent=5 // pred_check
        _
      $region38: #{tpu_custom_call.1} parent=5 // pred_check_branch
        %232 = sbr.rel (%p229) target = $region40
      $region39: #{tpu_custom_call.1} parent=5 // pred_region
        %s233 = ssub.s32 %s18, 1
        %s234 = sand.u32 %s31, 1
        %s235 = scalar_lea.sflag [#allocation3], %s234
        %s236 = sand.u32 %s31, 1
        %s237 = smul.addr %s236, 64
        %s238 = scalar_lea.vmem [#allocation2], %s237
        // Predicated region
        $region41: #{tpu_custom_call.1} parent=39 // pred_check
          %p239 = pneg %p44
        $region42: #{tpu_custom_call.1} parent=39 // pred_check_branch
          %241 = sbr.rel (%p239) target = $region44
        $region43: #{tpu_custom_call.1} parent=39 // pred_region
          %242 = dma.done %s235, 1024
        $region44: #{tpu_custom_call.1} parent=39 // pred_fallthru
          _
        // Predicated region
        $region45: #{tpu_custom_call.1} parent=39 // pred_check
          %p243 = pneg %p65
        $region46: #{tpu_custom_call.1} parent=39 // pred_check_branch
          %245 = sbr.rel (%p243) target = $region48
        $region47: #{tpu_custom_call.1} parent=39 // pred_region
          %246 = dma.done [#allocation6], 3072
        $region48: #{tpu_custom_call.1} parent=39 // pred_fallthru
          _
        // Predicated region
        $region49: #{tpu_custom_call.1} parent=39 // pred_check
          %p247 = pneg %p107
        $region50: #{tpu_custom_call.1} parent=39 // pred_check_branch
          %249 = sbr.rel (%p247) target = $region52
        $region51: #{tpu_custom_call.1} parent=39 // pred_region
          %250 = dma.done [#allocation6], 1024
        $region52: #{tpu_custom_call.1} parent=39 // pred_fallthru
          _
        %s251 = sand.u32 %s31, 1
        %s252 = scalar_lea.sflag [#allocation3], %s251
        %s253 = sand.u32 %s31, 1
        %s254 = smul.addr %s253, 64
        %s255 = scalar_lea.vmem [#allocation2], %s254
        %p256 = pneg %p44
        %p257 = pneg %p41
        %p258 = pneg %p65
        %p259 = pneg %p62
        %p260 = pneg %p86
        %p261 = pneg %p83
        %p262 = pneg %p107
        %p263 = pneg %p104
        %p264 = pneg %p128
        %p265 = pneg %p125
        %p266 = pneg %p154
        %p267 = pneg %p151
        %s268 = sand.u32 %s141, 1
        %s269 = scalar_lea.sflag [#allocation4], %s268
        %s270 = sand.u32 %s141, 1
        %s271 = smul.addr %s270, 64
        %s272 = scalar_lea.vmem [#allocation8], %s271
        %s273 = smul.u32 4, %s23
        %s274 = smul.u32 4, %s23
        %v276 = vld [vmem:[%s238] sm:$0xff]
        %v277 = vld [vmem:[%s238 + $0x8] sm:$0xff]
        %v278 = vld [vmem:[%s238 + $0x10] sm:$0xff]
        %v279 = vld [vmem:[%s238 + $0x18] sm:$0xff]
        %v280 = vld [vmem:[%s238 + $0x20] sm:$0xff]
        %v281 = vld [vmem:[%s238 + $0x28] sm:$0xff]
        %v282 = vld [vmem:[%s238 + $0x30] sm:$0xff]
        %v283 = vld [vmem:[%s238 + $0x38] sm:$0xff]
        %v284 = vpack.c.bf16 %v277, %v276
        %v285 = vpack.c.bf16 %v279, %v278
        %v286 = vpack.c.bf16 %v281, %v280
        %v287 = vpack.c.bf16 %v283, %v282
        %v288 = vld [vmem:[#allocation5] sm:$0xff]
        %v289 = vld [vmem:[#allocation5 + $0x8] sm:$0xf]
        %v290 = vld [vmem:[#allocation5 + $0xc] sm:$0xff]
        %v291 = vld [vmem:[#allocation5 + $0x14] sm:$0xf]
        %v292 = vld [vmem:[#allocation5 + $0x18] sm:$0xff]
        %v293 = vld [vmem:[#allocation5 + $0x20] sm:$0xf]
        %v294 = vld [vmem:[#allocation5 + $0x24] sm:$0xff]
        %v295 = vld [vmem:[#allocation5 + $0x2c] sm:$0xf]
        %v296 = vld [vmem:[#allocation5 + $0x30] sm:$0xff]
        %v297 = vld [vmem:[#allocation5 + $0x38] sm:$0xf]
        %v298 = vld [vmem:[#allocation5 + $0x3c] sm:$0xff]
        %v299 = vld [vmem:[#allocation5 + $0x44] sm:$0xf]
        %v300 = vld [vmem:[#allocation5 + $0x48] sm:$0xff]
        %v301 = vld [vmem:[#allocation5 + $0x50] sm:$0xf]
        %v302 = vld [vmem:[#allocation5 + $0x54] sm:$0xff]
        %v303 = vld [vmem:[#allocation5 + $0x5c] sm:$0xf]
        %v304 = vld [vmem:[#allocation5 + $0x60] sm:$0xff]
        %v305 = vld [vmem:[#allocation5 + $0x68] sm:$0xf]
        %v306 = vld [vmem:[#allocation5 + $0x6c] sm:$0xff]
        %v307 = vld [vmem:[#allocation5 + $0x74] sm:$0xf]
        %v308 = vld [vmem:[#allocation5 + $0x78] sm:$0xff]
        %v309 = vld [vmem:[#allocation5 + $0x80] sm:$0xf]
        %v310 = vld [vmem:[#allocation5 + $0x84] sm:$0xff]
        %v311 = vld [vmem:[#allocation5 + $0x8c] sm:$0xf]
        %v312 = vld [vmem:[#allocation5 + $0x90] sm:$0xff]
        %v313 = vld [vmem:[#allocation5 + $0x98] sm:$0xf]
        %v314 = vld [vmem:[#allocation5 + $0x9c] sm:$0xff]
        %v315 = vld [vmem:[#allocation5 + $0xa4] sm:$0xf]
        %v316 = vld [vmem:[#allocation5 + $0xa8] sm:$0xff]
        %v317 = vld [vmem:[#allocation5 + $0xb0] sm:$0xf]
        %v318 = vld [vmem:[#allocation5 + $0xb4] sm:$0xff]
        %v319 = vld [vmem:[#allocation5 + $0xbc] sm:$0xf]
        %v320 = vld [vmem:[%s2] sm:$0x7]
        %v322 = vlaneseq
        %v323 = vshrl.u32 %v322, 7
        %v324 = vsub.s32 0, %v323
        %v325 = vrot.slane %v320, %v324
        %v326 = vlaneseq
        %v327 = vshrl.u32 %v326, 7
        %v328 = vsub.s32 1, %v327
        %v329 = vrot.slane %v320, %v328
        %v330 = vlaneseq
        %v331 = vshrl.u32 %v330, 7
        %v332 = vsub.s32 2, %v331
        %v333 = vrot.slane %v320, %v332
        %v369 = vunpack.c.l.b16 %v288
        %v370 = vunpack.c.h.b16 %v288
        %v371 = vunpack.c.l.b16 %v289
        %v372 = vunpack.c.l.b16 %v290
        %v373 = vunpack.c.h.b16 %v290
        %v374 = vunpack.c.l.b16 %v291
        %v375 = vunpack.c.l.b16 %v292
        %v376 = vunpack.c.h.b16 %v292
        %v377 = vunpack.c.l.b16 %v293
        %v378 = vunpack.c.l.b16 %v294
        %v379 = vunpack.c.h.b16 %v294
        %v380 = vunpack.c.l.b16 %v295
        %v381 = vunpack.c.l.b16 %v296
        %v382 = vunpack.c.h.b16 %v296
        %v383 = vunpack.c.l.b16 %v297
        %v384 = vunpack.c.l.b16 %v298
        %v385 = vunpack.c.h.b16 %v298
        %v386 = vunpack.c.l.b16 %v299
        %v387 = vunpack.c.l.b16 %v300
        %v388 = vunpack.c.h.b16 %v300
        %v389 = vunpack.c.l.b16 %v301
        %v390 = vunpack.c.l.b16 %v302
        %v391 = vunpack.c.h.b16 %v302
        %v392 = vunpack.c.l.b16 %v303
        %v393 = vunpack.c.l.b16 %v304
        %v394 = vunpack.c.h.b16 %v304
        %v395 = vunpack.c.l.b16 %v305
        %v396 = vunpack.c.l.b16 %v306
        %v397 = vunpack.c.h.b16 %v306
        %v398 = vunpack.c.l.b16 %v307
        %v399 = vunpack.c.l.b16 %v308
        %v400 = vunpack.c.h.b16 %v308
        %v401 = vunpack.c.l.b16 %v309
        %v402 = vunpack.c.l.b16 %v310
        %v403 = vunpack.c.h.b16 %v310
        %v404 = vunpack.c.l.b16 %v311
        %v405 = vunpack.c.l.b16 %v312
        %v406 = vunpack.c.h.b16 %v312
        %v407 = vunpack.c.l.b16 %v313
        %v408 = vunpack.c.l.b16 %v314
        %v409 = vunpack.c.h.b16 %v314
        %v410 = vunpack.c.l.b16 %v315
        %v411 = vunpack.c.l.b16 %v316
        %v412 = vunpack.c.h.b16 %v316
        %v413 = vunpack.c.l.b16 %v317
        %v414 = vunpack.c.l.b16 %v318
        %v415 = vunpack.c.h.b16 %v318
        %v416 = vunpack.c.l.b16 %v319
        %v417 = vpack.c.b16 %v372, %v369
        %v418 = vpack.c.b16 %v373, %v370
        %v419 = vpack.c.b16 %v374, %v371
        %v420 = vpack.c.b16 %v378, %v375
        %v421 = vpack.c.b16 %v379, %v376
        %v422 = vpack.c.b16 %v380, %v377
        %v423 = vpack.c.b16 %v384, %v381
        %v424 = vpack.c.b16 %v385, %v382
        %v425 = vpack.c.b16 %v386, %v383
        %v426 = vpack.c.b16 %v390, %v387
        %v427 = vpack.c.b16 %v391, %v388
        %v428 = vpack.c.b16 %v392, %v389
        %v429 = vpack.c.b16 %v396, %v393
        %v430 = vpack.c.b16 %v397, %v394
        %v431 = vpack.c.b16 %v398, %v395
        %v432 = vpack.c.b16 %v402, %v399
        %v433 = vpack.c.b16 %v403, %v400
        %v434 = vpack.c.b16 %v404, %v401
        %v435 = vpack.c.b16 %v408, %v405
        %v436 = vpack.c.b16 %v409, %v406
        %v437 = vpack.c.b16 %v410, %v407
        %v438 = vpack.c.b16 %v414, %v411
        %v439 = vpack.c.b16 %v415, %v412
        %v440 = vpack.c.b16 %v416, %v413
        %465 = vmatprep.subr.bf16.mxu0 %v418
        %466 = vmatpush1.bf16.msra.mxu0 %v417
        %467 = vmatprep.subr.bf16.mxu0 %v421
        %468 = vmatpush1.bf16.msra.mxu0 %v420
        %469 = vmatprep.subr.bf16.mxu0 %v424
        %470 = vmatpush1.bf16.msra.mxu0 %v423
        %471 = vmatprep.subr.bf16.mxu0 %v427
        %472 = vmatpush1.bf16.msra.mxu0 %v426
        %473 = vmatprep.subr.bf16.mxu0 %v430
        %474 = vmatpush1.bf16.msra.mxu0 %v429
        %475 = vmatprep.subr.bf16.mxu0 %v433
        %476 = vmatpush1.bf16.msra.mxu0 %v432
        %477 = vmatprep.subr.bf16.mxu0 %v436
        %478 = vmatpush1.bf16.msra.mxu0 %v435
        %479 = vmatprep.subr.bf16.mxu0 %v439
        %480 = vmatpush1.bf16.msra.mxu0 %v438
        %481 = vmatprep.subr.bf16.mxu0 0
        %482 = vmatpush1.bf16.msra.mxu0 0
        %483 = vmatprep.subr.bf16.mxu0 0
        %484 = vmatpush1.bf16.msra.mxu0 0
        %485 = vmatprep.subr.bf16.mxu0 0
        %486 = vmatpush1.bf16.msra.mxu0 0
        %487 = vmatprep.subr.bf16.mxu0 0
        %488 = vmatpush1.bf16.msra.mxu0 0
        %489 = vmatprep.subr.bf16.mxu0 0
        %490 = vmatpush1.bf16.msra.mxu0 0
        %491 = vmatprep.subr.bf16.mxu0 0
        %492 = vmatpush1.bf16.msra.mxu0 0
        %493 = vmatprep.subr.bf16.mxu0 0
        %494 = vmatpush1.bf16.msra.mxu0 0
        %495 = vmatprep.subr.bf16.mxu0 0
        %496 = vmatpush1.bf16.msra.mxu0 0
        %497 = vmatprep.mubr.bf16.mxu0 0
        %498 = vmatmul.mubr.bf16.gmra.mrb[0].mxu0 %v284
        %v499 = vpop.f32.mrb[0].mxu0
        %v500 = vadd.f32 %v325, %v499
        %v501 = vpop.f32.mrb[0].mxu0
        %v502 = vadd.f32 %v329, %v501
        %v503 = vpop.f32.mrb[0].mxu0
        %v504 = vadd.f32 %v325, %v503
        %v505 = vpop.f32.mrb[0].mxu0
        %v506 = vadd.f32 %v329, %v505
        %507 = vmatprep.mubr.bf16.mxu0 0
        %508 = vmatmul.mubr.bf16.gmra.mrb[0].mxu0 %v285
        %v509 = vpop.f32.mrb[0].mxu0
        %v510 = vadd.f32 %v325, %v509
        %v511 = vpop.f32.mrb[0].mxu0
        %v512 = vadd.f32 %v329, %v511
        %v513 = vpop.f32.mrb[0].mxu0
        %v514 = vadd.f32 %v325, %v513
        %v515 = vpop.f32.mrb[0].mxu0
        %v516 = vadd.f32 %v329, %v515
        %517 = vmatprep.mubr.bf16.mxu0 0
        %518 = vmatmul.mubr.bf16.gmra.mrb[0].mxu0 %v286
        %v519 = vpop.f32.mrb[0].mxu0
        %v520 = vadd.f32 %v325, %v519
        %v521 = vpop.f32.mrb[0].mxu0
        %v522 = vadd.f32 %v329, %v521
        %v523 = vpop.f32.mrb[0].mxu0
        %v524 = vadd.f32 %v325, %v523
        %v525 = vpop.f32.mrb[0].mxu0
        %v526 = vadd.f32 %v329, %v525
        %527 = vmatprep.mubr.bf16.mxu0 0
        %528 = vmatmul.mubr.bf16.gmra.mrb[0].mxu0 %v287
        %v529 = vpop.f32.mrb[0].mxu0
        %v530 = vadd.f32 %v325, %v529
        %v531 = vpop.f32.mrb[0].mxu0
        %v532 = vadd.f32 %v329, %v531
        %v533 = vpop.f32.mrb[0].mxu0
        %v534 = vadd.f32 %v325, %v533
        %v535 = vpop.f32.mrb[0].mxu0
        %v536 = vadd.f32 %v329, %v535
        %537 = vdwg.mxu0
        %538 = vmatprep.subr.bf16.mxu0 0
        %539 = vmatpush1.bf16.msra.mxu0 %v419
        %540 = vmatprep.subr.bf16.mxu0 0
        %541 = vmatpush1.bf16.msra.mxu0 %v422
        %542 = vmatprep.subr.bf16.mxu0 0
        %543 = vmatpush1.bf16.msra.mxu0 %v425
        %544 = vmatprep.subr.bf16.mxu0 0
        %545 = vmatpush1.bf16.msra.mxu0 %v428
        %546 = vmatprep.subr.bf16.mxu0 0
        %547 = vmatpush1.bf16.msra.mxu0 %v431
        %548 = vmatprep.subr.bf16.mxu0 0
        %549 = vmatpush1.bf16.msra.mxu0 %v434
        %550 = vmatprep.subr.bf16.mxu0 0
        %551 = vmatpush1.bf16.msra.mxu0 %v437
        %552 = vmatprep.subr.bf16.mxu0 0
        %553 = vmatpush1.bf16.msra.mxu0 %v440
        %554 = vmatprep.subr.bf16.mxu0 0
        %555 = vmatpush1.bf16.msra.mxu0 0
        %556 = vmatprep.subr.bf16.mxu0 0
        %557 = vmatpush1.bf16.msra.mxu0 0
        %558 = vmatprep.subr.bf16.mxu0 0
        %559 = vmatpush1.bf16.msra.mxu0 0
        %560 = vmatprep.subr.bf16.mxu0 0
        %561 = vmatpush1.bf16.msra.mxu0 0
        %562 = vmatprep.subr.bf16.mxu0 0
        %563 = vmatpush1.bf16.msra.mxu0 0
        %564 = vmatprep.subr.bf16.mxu0 0
        %565 = vmatpush1.bf16.msra.mxu0 0
        %566 = vmatprep.subr.bf16.mxu0 0
        %567 = vmatpush1.bf16.msra.mxu0 0
        %568 = vmatprep.subr.bf16.mxu0 0
        %569 = vmatpush1.bf16.msra.mxu0 0
        %570 = vmatprep.mubr.bf16.mxu0 0
        %571 = vmatmul.mubr.bf16.gmra.mrb[0].mxu0 %v284
        %v572 = vpop.f32.mrb[0].mxu0
        %v573 = vadd.f32 %v333, %v572
        %v574 = vpop.f32.mrb[0].mxu0
        %v575 = vpop.f32.mrb[0].mxu0
        %v576 = vadd.f32 %v333, %v575
        %v577 = vpop.f32.mrb[0].mxu0
        %578 = vmatprep.mubr.bf16.mxu0 0
        %579 = vmatmul.mubr.bf16.gmra.mrb[0].mxu0 %v285
        %v580 = vpop.f32.mrb[0].mxu0
        %v581 = vadd.f32 %v333, %v580
        %v582 = vpop.f32.mrb[0].mxu0
        %v583 = vpop.f32.mrb[0].mxu0
        %v584 = vadd.f32 %v333, %v583
        %v585 = vpop.f32.mrb[0].mxu0
        %586 = vmatprep.mubr.bf16.mxu0 0
        %587 = vmatmul.mubr.bf16.gmra.mrb[0].mxu0 %v286
        %v588 = vpop.f32.mrb[0].mxu0
        %v589 = vadd.f32 %v333, %v588
        %v590 = vpop.f32.mrb[0].mxu0
        %v591 = vpop.f32.mrb[0].mxu0
        %v592 = vadd.f32 %v333, %v591
        %v593 = vpop.f32.mrb[0].mxu0
        %594 = vmatprep.mubr.bf16.mxu0 0
        %595 = vmatmul.mubr.bf16.gmra.mrb[0].mxu0 %v287
        %v596 = vpop.f32.mrb[0].mxu0
        %v597 = vadd.f32 %v333, %v596
        %v598 = vpop.f32.mrb[0].mxu0
        %v599 = vpop.f32.mrb[0].mxu0
        %v600 = vadd.f32 %v333, %v599
        %v601 = vpop.f32.mrb[0].mxu0
        %602 = vdwg.mxu0
        %v603 = vpack.c.bf16 %v504, %v500
        %v604 = vpack.c.bf16 %v506, %v502
        %v605 = vpack.c.bf16 %v576, %v573
        %v606 = vpack.c.bf16 %v514, %v510
        %v607 = vpack.c.bf16 %v516, %v512
        %v608 = vpack.c.bf16 %v584, %v581
        %v609 = vpack.c.bf16 %v524, %v520
        %v610 = vpack.c.bf16 %v526, %v522
        %v611 = vpack.c.bf16 %v592, %v589
        %v612 = vpack.c.bf16 %v534, %v530
        %v613 = vpack.c.bf16 %v536, %v532
        %v614 = vpack.c.bf16 %v600, %v597
        %v615 = vld [vmem:[%s4] sm:$0x1]
        %vm616 = vcmask 261120
        %v618 = vsel %vm616, %v603, 0
        %v621 = vsel %vm616, %v604, 0
        %623 = vmatprep.subr.bf16.mxu0 0
        %624 = vmatpush1.bf16.xpose.msra.mxu0 %v621
        %625 = vmatprep.subr.bf16.mxu0 0
        %626 = vmatpush1.bf16.xpose.msra.mxu0 0
        %627 = vmatprep.subr.bf16.mxu0 0
        %628 = vmatpush1.bf16.xpose.msra.mxu0 0
        %629 = vmatprep.subr.bf16.mxu0 0
        %630 = vmatpush1.bf16.xpose.msra.mxu0 0
        %631 = vmatprep.subr.bf16.mxu0 0
        %632 = vmatpush1.bf16.xpose.msra.mxu0 0
        %633 = vmatprep.subr.bf16.mxu0 0
        %634 = vmatpush1.bf16.xpose.msra.mxu0 0
        %635 = vmatprep.subr.bf16.mxu0 0
        %636 = vmatpush1.bf16.xpose.msra.mxu0 0
        %637 = vmatprep.subr.bf16.mxu0 0
        %638 = vmatpush1.bf16.xpose.msra.mxu0 0
        %639 = vmatprep.subr.bf16.mxu0 0
        %640 = vmatpush1.bf16.xpose.msra.mxu0 0
        %641 = vmatprep.subr.bf16.mxu0 0
        %642 = vmatpush1.bf16.xpose.msra.mxu0 0
        %643 = vmatprep.subr.bf16.mxu0 0
        %644 = vmatpush1.bf16.xpose.msra.mxu0 0
        %645 = vmatprep.subr.bf16.mxu0 0
        %646 = vmatpush1.bf16.xpose.msra.mxu0 0
        %647 = vmatprep.subr.bf16.mxu0 0
        %648 = vmatpush1.bf16.xpose.msra.mxu0 0
        %649 = vmatprep.subr.bf16.mxu0 0
        %650 = vmatpush1.bf16.xpose.msra.mxu0 0
        %651 = vmatprep.subr.bf16.mxu0 0
        %652 = vmatpush1.bf16.xpose.msra.mxu0 0
        %653 = vmatprep.subr.bf16.mxu0 0
        %654 = vmatpush1.bf16.xpose.msra.mxu0 0
        %655 = vmatprep.mubr.bf16.mxu0 0
        %656 = vmatmul.mubr.bf16.gmra.mrb[0].mxu0 %v618
        %v657 = vpop.f32.mrb[0].mxu0
        %v658 = vadd.f32 0.0, %v657
        %v659 = vpop.f32.mrb[0].mxu0
        %v660 = vpop.f32.mrb[0].mxu0
        %v661 = vadd.f32 0.0, %v660
        %v662 = vpop.f32.mrb[0].mxu0
        %663 = vdwg.mxu0
        %v665 = vsel %vm616, %v606, 0
        %v668 = vsel %vm616, %v607, 0
        %670 = vmatprep.subr.bf16.mxu0 0
        %671 = vmatpush1.bf16.xpose.msra.mxu0 %v668
        %672 = vmatprep.subr.bf16.mxu0 0
        %673 = vmatpush1.bf16.xpose.msra.mxu0 0
        %674 = vmatprep.subr.bf16.mxu0 0
        %675 = vmatpush1.bf16.xpose.msra.mxu0 0
        %676 = vmatprep.subr.bf16.mxu0 0
        %677 = vmatpush1.bf16.xpose.msra.mxu0 0
        %678 = vmatprep.subr.bf16.mxu0 0
        %679 = vmatpush1.bf16.xpose.msra.mxu0 0
        %680 = vmatprep.subr.bf16.mxu0 0
        %681 = vmatpush1.bf16.xpose.msra.mxu0 0
        %682 = vmatprep.subr.bf16.mxu0 0
        %683 = vmatpush1.bf16.xpose.msra.mxu0 0
        %684 = vmatprep.subr.bf16.mxu0 0
        %685 = vmatpush1.bf16.xpose.msra.mxu0 0
        %686 = vmatprep.subr.bf16.mxu0 0
        %687 = vmatpush1.bf16.xpose.msra.mxu0 0
        %688 = vmatprep.subr.bf16.mxu0 0
        %689 = vmatpush1.bf16.xpose.msra.mxu0 0
        %690 = vmatprep.subr.bf16.mxu0 0
        %691 = vmatpush1.bf16.xpose.msra.mxu0 0
        %692 = vmatprep.subr.bf16.mxu0 0
        %693 = vmatpush1.bf16.xpose.msra.mxu0 0
        %694 = vmatprep.subr.bf16.mxu0 0
        %695 = vmatpush1.bf16.xpose.msra.mxu0 0
        %696 = vmatprep.subr.bf16.mxu0 0
        %697 = vmatpush1.bf16.xpose.msra.mxu0 0
        %698 = vmatprep.subr.bf16.mxu0 0
        %699 = vmatpush1.bf16.xpose.msra.mxu0 0
        %700 = vmatprep.subr.bf16.mxu0 0
        %701 = vmatpush1.bf16.xpose.msra.mxu0 0
        %702 = vmatprep.mubr.bf16.mxu0 0
        %703 = vmatmul.mubr.bf16.gmra.mrb[0].mxu0 %v665
        %v704 = vpop.f32.mrb[0].mxu0
        %v705 = vadd.f32 0.0, %v704
        %v706 = vpop.f32.mrb[0].mxu0
        %v707 = vpop.f32.mrb[0].mxu0
        %v708 = vadd.f32 0.0, %v707
        %v709 = vpop.f32.mrb[0].mxu0
        %710 = vdwg.mxu0
        %v712 = vsel %vm616, %v609, 0
        %v715 = vsel %vm616, %v610, 0
        %717 = vmatprep.subr.bf16.mxu0 0
        %718 = vmatpush1.bf16.xpose.msra.mxu0 %v715
        %719 = vmatprep.subr.bf16.mxu0 0
        %720 = vmatpush1.bf16.xpose.msra.mxu0 0
        %721 = vmatprep.subr.bf16.mxu0 0
        %722 = vmatpush1.bf16.xpose.msra.mxu0 0
        %723 = vmatprep.subr.bf16.mxu0 0
        %724 = vmatpush1.bf16.xpose.msra.mxu0 0
        %725 = vmatprep.subr.bf16.mxu0 0
        %726 = vmatpush1.bf16.xpose.msra.mxu0 0
        %727 = vmatprep.subr.bf16.mxu0 0
        %728 = vmatpush1.bf16.xpose.msra.mxu0 0
        %729 = vmatprep.subr.bf16.mxu0 0
        %730 = vmatpush1.bf16.xpose.msra.mxu0 0
        %731 = vmatprep.subr.bf16.mxu0 0
        %732 = vmatpush1.bf16.xpose.msra.mxu0 0
        %733 = vmatprep.subr.bf16.mxu0 0
        %734 = vmatpush1.bf16.xpose.msra.mxu0 0
        %735 = vmatprep.subr.bf16.mxu0 0
        %736 = vmatpush1.bf16.xpose.msra.mxu0 0
        %737 = vmatprep.subr.bf16.mxu0 0
        %738 = vmatpush1.bf16.xpose.msra.mxu0 0
        %739 = vmatprep.subr.bf16.mxu0 0
        %740 = vmatpush1.bf16.xpose.msra.mxu0 0
        %741 = vmatprep.subr.bf16.mxu0 0
        %742 = vmatpush1.bf16.xpose.msra.mxu0 0
        %743 = vmatprep.subr.bf16.mxu0 0
        %744 = vmatpush1.bf16.xpose.msra.mxu0 0
        %745 = vmatprep.subr.bf16.mxu0 0
        %746 = vmatpush1.bf16.xpose.msra.mxu0 0
        %747 = vmatprep.subr.bf16.mxu0 0
        %748 = vmatpush1.bf16.xpose.msra.mxu0 0
        %749 = vmatprep.mubr.bf16.mxu0 0
        %750 = vmatmul.mubr.bf16.gmra.mrb[0].mxu0 %v712
        %v751 = vpop.f32.mrb[0].mxu0
        %v752 = vadd.f32 0.0, %v751
        %v753 = vpop.f32.mrb[0].mxu0
        %v754 = vpop.f32.mrb[0].mxu0
        %v755 = vadd.f32 0.0, %v754
        %v756 = vpop.f32.mrb[0].mxu0
        %757 = vdwg.mxu0
        %v759 = vsel %vm616, %v612, 0
        %v762 = vsel %vm616, %v613, 0
        %764 = vmatprep.subr.bf16.mxu0 0
        %765 = vmatpush1.bf16.xpose.msra.mxu0 %v762
        %766 = vmatprep.subr.bf16.mxu0 0
        %767 = vmatpush1.bf16.xpose.msra.mxu0 0
        %768 = vmatprep.subr.bf16.mxu0 0
        %769 = vmatpush1.bf16.xpose.msra.mxu0 0
        %770 = vmatprep.subr.bf16.mxu0 0
        %771 = vmatpush1.bf16.xpose.msra.mxu0 0
        %772 = vmatprep.subr.bf16.mxu0 0
        %773 = vmatpush1.bf16.xpose.msra.mxu0 0
        %774 = vmatprep.subr.bf16.mxu0 0
        %775 = vmatpush1.bf16.xpose.msra.mxu0 0
        %776 = vmatprep.subr.bf16.mxu0 0
        %777 = vmatpush1.bf16.xpose.msra.mxu0 0
        %778 = vmatprep.subr.bf16.mxu0 0
        %779 = vmatpush1.bf16.xpose.msra.mxu0 0
        %780 = vmatprep.subr.bf16.mxu0 0
        %781 = vmatpush1.bf16.xpose.msra.mxu0 0
        %782 = vmatprep.subr.bf16.mxu0 0
        %783 = vmatpush1.bf16.xpose.msra.mxu0 0
        %784 = vmatprep.subr.bf16.mxu0 0
        %785 = vmatpush1.bf16.xpose.msra.mxu0 0
        %786 = vmatprep.subr.bf16.mxu0 0
        %787 = vmatpush1.bf16.xpose.msra.mxu0 0
        %788 = vmatprep.subr.bf16.mxu0 0
        %789 = vmatpush1.bf16.xpose.msra.mxu0 0
        %790 = vmatprep.subr.bf16.mxu0 0
        %791 = vmatpush1.bf16.xpose.msra.mxu0 0
        %792 = vmatprep.subr.bf16.mxu0 0
        %793 = vmatpush1.bf16.xpose.msra.mxu0 0
        %794 = vmatprep.subr.bf16.mxu0 0
        %795 = vmatpush1.bf16.xpose.msra.mxu0 0
        %796 = vmatprep.mubr.bf16.mxu0 0
        %797 = vmatmul.mubr.bf16.gmra.mrb[0].mxu0 %v759
        %v798 = vpop.f32.mrb[0].mxu0
        %v799 = vadd.f32 0.0, %v798
        %v800 = vpop.f32.mrb[0].mxu0
        %v801 = vpop.f32.mrb[0].mxu0
        %v802 = vadd.f32 0.0, %v801
        %v803 = vpop.f32.mrb[0].mxu0
        %804 = vdwg.mxu0
        %vm805 = vcmask 130048
        %v806 = vsel %vm805, %v658, -inf
        %807 = vmax.xlane.f32.xlu0 %v806
        %v808 = vpop.xlane.xlu0 %807
        %v809 = vsel %vm805, %v661, -inf
        %810 = vmax.xlane.f32.xlu0 %v809
        %v811 = vpop.xlane.xlu0 %810
        %v812 = vsel %vm805, %v705, -inf
        %813 = vmax.xlane.f32.xlu0 %v812
        %v814 = vpop.xlane.xlu0 %813
        %v815 = vsel %vm805, %v708, -inf
        %816 = vmax.xlane.f32.xlu0 %v815
        %v817 = vpop.xlane.xlu0 %816
        %v818 = vsel %vm805, %v752, -inf
        %819 = vmax.xlane.f32.xlu0 %v818
        %v820 = vpop.xlane.xlu0 %819
        %v821 = vsel %vm805, %v755, -inf
        %822 = vmax.xlane.f32.xlu0 %v821
        %v823 = vpop.xlane.xlu0 %822
        %v824 = vsel %vm805, %v799, -inf
        %825 = vmax.xlane.f32.xlu0 %v824
        %v826 = vpop.xlane.xlu0 %825
        %v827 = vsel %vm805, %v802, -inf
        %828 = vmax.xlane.f32.xlu0 %v827
        %v829 = vpop.xlane.xlu0 %828
        %v830 = vsub.f32 %v658, %v808
        %v831 = vsub.f32 %v661, %v811
        %v832 = vsub.f32 %v705, %v814
        %v833 = vsub.f32 %v708, %v817
        %v834 = vsub.f32 %v752, %v820
        %v835 = vsub.f32 %v755, %v823
        %v836 = vsub.f32 %v799, %v826
        %v837 = vsub.f32 %v802, %v829
        %v838 = vmul.f32 %v830, 1.442695
        %v839 = vpow.pop %v838
        %v840 = vmul.f32 %v831, 1.442695
        %v841 = vpow.pop %v840
        %v842 = vmul.f32 %v832, 1.442695
        %v843 = vpow.pop %v842
        %v844 = vmul.f32 %v833, 1.442695
        %v845 = vpow.pop %v844
        %v846 = vmul.f32 %v834, 1.442695
        %v847 = vpow.pop %v846
        %v848 = vmul.f32 %v835, 1.442695
        %v849 = vpow.pop %v848
        %v850 = vmul.f32 %v836, 1.442695
        %v851 = vpow.pop %v850
        %v852 = vmul.f32 %v837, 1.442695
        %v853 = vpow.pop %v852
        %v854 = vsel %vm805, %v839, 0.0
        %855 = vadd.xlane.f32.xlu0 %v854
        %v856 = vpop.xlane.xlu0 %855
        %v857 = vsel %vm805, %v841, 0.0
        %858 = vadd.xlane.f32.xlu0 %v857
        %v859 = vpop.xlane.xlu0 %858
        %v860 = vsel %vm805, %v843, 0.0
        %861 = vadd.xlane.f32.xlu0 %v860
        %v862 = vpop.xlane.xlu0 %861
        %v863 = vsel %vm805, %v845, 0.0
        %864 = vadd.xlane.f32.xlu0 %v863
        %v865 = vpop.xlane.xlu0 %864
        %v866 = vsel %vm805, %v847, 0.0
        %867 = vadd.xlane.f32.xlu0 %v866
        %v868 = vpop.xlane.xlu0 %867
        %v869 = vsel %vm805, %v849, 0.0
        %870 = vadd.xlane.f32.xlu0 %v869
        %v871 = vpop.xlane.xlu0 %870
        %v872 = vsel %vm805, %v851, 0.0
        %873 = vadd.xlane.f32.xlu0 %v872
        %v874 = vpop.xlane.xlu0 %873
        %v875 = vsel %vm805, %v853, 0.0
        %876 = vadd.xlane.f32.xlu0 %v875
        %v877 = vpop.xlane.xlu0 %876
        %v878 = vrcp.pop %v856
        %v879 = vrcp.pop %v859
        %v880 = vrcp.pop %v862
        %v881 = vrcp.pop %v865
        %v882 = vrcp.pop %v868
        %v883 = vrcp.pop %v871
        %v884 = vrcp.pop %v874
        %v885 = vrcp.pop %v877
        %v886 = vmul.f32 %v839, %v878
        %v887 = vmul.f32 %v841, %v879
        %v888 = vmul.f32 %v843, %v880
        %v889 = vmul.f32 %v845, %v881
        %v890 = vmul.f32 %v847, %v882
        %v891 = vmul.f32 %v849, %v883
        %v892 = vmul.f32 %v851, %v884
        %v893 = vmul.f32 %v853, %v885
        %v894 = vpack.c.bf16 %v887, %v886
        %v895 = vpack.c.bf16 %v889, %v888
        %v896 = vpack.c.bf16 %v891, %v890
        %v897 = vpack.c.bf16 %v893, %v892
        %v899 = vsel %vm805, %v894, 0
        %901 = vmatprep.subr.bf16.mxu0 0
        %902 = vmatpush1.bf16.msra.mxu0 %v605
        %903 = vmatprep.subr.bf16.mxu0 0
        %904 = vmatpush1.bf16.msra.mxu0 0
        %905 = vmatprep.subr.bf16.mxu0 0
        %906 = vmatpush1.bf16.msra.mxu0 0
        %907 = vmatprep.subr.bf16.mxu0 0
        %908 = vmatpush1.bf16.msra.mxu0 0
        %909 = vmatprep.subr.bf16.mxu0 0
        %910 = vmatpush1.bf16.msra.mxu0 0
        %911 = vmatprep.subr.bf16.mxu0 0
        %912 = vmatpush1.bf16.msra.mxu0 0
        %913 = vmatprep.subr.bf16.mxu0 0
        %914 = vmatpush1.bf16.msra.mxu0 0
        %915 = vmatprep.subr.bf16.mxu0 0
        %916 = vmatpush1.bf16.msra.mxu0 0
        %917 = vmatprep.subr.bf16.mxu0 0
        %918 = vmatpush1.bf16.msra.mxu0 0
        %919 = vmatprep.subr.bf16.mxu0 0
        %920 = vmatpush1.bf16.msra.mxu0 0
        %921 = vmatprep.subr.bf16.mxu0 0
        %922 = vmatpush1.bf16.msra.mxu0 0
        %923 = vmatprep.subr.bf16.mxu0 0
        %924 = vmatpush1.bf16.msra.mxu0 0
        %925 = vmatprep.subr.bf16.mxu0 0
        %926 = vmatpush1.bf16.msra.mxu0 0
        %927 = vmatprep.subr.bf16.mxu0 0
        %928 = vmatpush1.bf16.msra.mxu0 0
        %929 = vmatprep.subr.bf16.mxu0 0
        %930 = vmatpush1.bf16.msra.mxu0 0
        %931 = vmatprep.subr.bf16.mxu0 0
        %932 = vmatpush1.bf16.msra.mxu0 0
        %933 = vmatprep.mubr.bf16.mxu0 0
        %934 = vmatmul.mubr.bf16.gmra.mrb[0].mxu0 %v899
        %v935 = vpop.f32.mrb[0].mxu0
        %v936 = vadd.f32 0.0, %v935
        %v937 = vpop.f32.mrb[0].mxu0
        %v938 = vpop.f32.mrb[0].mxu0
        %v939 = vadd.f32 0.0, %v938
        %v940 = vpop.f32.mrb[0].mxu0
        %941 = vdwg.mxu0
        %v943 = vsel %vm805, %v895, 0
        %945 = vmatprep.subr.bf16.mxu0 0
        %946 = vmatpush1.bf16.msra.mxu0 %v608
        %947 = vmatprep.subr.bf16.mxu0 0
        %948 = vmatpush1.bf16.msra.mxu0 0
        %949 = vmatprep.subr.bf16.mxu0 0
        %950 = vmatpush1.bf16.msra.mxu0 0
        %951 = vmatprep.subr.bf16.mxu0 0
        %952 = vmatpush1.bf16.msra.mxu0 0
        %953 = vmatprep.subr.bf16.mxu0 0
        %954 = vmatpush1.bf16.msra.mxu0 0
        %955 = vmatprep.subr.bf16.mxu0 0
        %956 = vmatpush1.bf16.msra.mxu0 0
        %957 = vmatprep.subr.bf16.mxu0 0
        %958 = vmatpush1.bf16.msra.mxu0 0
        %959 = vmatprep.subr.bf16.mxu0 0
        %960 = vmatpush1.bf16.msra.mxu0 0
        %961 = vmatprep.subr.bf16.mxu0 0
        %962 = vmatpush1.bf16.msra.mxu0 0
        %963 = vmatprep.subr.bf16.mxu0 0
        %964 = vmatpush1.bf16.msra.mxu0 0
        %965 = vmatprep.subr.bf16.mxu0 0
        %966 = vmatpush1.bf16.msra.mxu0 0
        %967 = vmatprep.subr.bf16.mxu0 0
        %968 = vmatpush1.bf16.msra.mxu0 0
        %969 = vmatprep.subr.bf16.mxu0 0
        %970 = vmatpush1.bf16.msra.mxu0 0
        %971 = vmatprep.subr.bf16.mxu0 0
        %972 = vmatpush1.bf16.msra.mxu0 0
        %973 = vmatprep.subr.bf16.mxu0 0
        %974 = vmatpush1.bf16.msra.mxu0 0
        %975 = vmatprep.subr.bf16.mxu0 0
        %976 = vmatpush1.bf16.msra.mxu0 0
        %977 = vmatprep.mubr.bf16.mxu0 0
        %978 = vmatmul.mubr.bf16.gmra.mrb[0].mxu0 %v943
        %v979 = vpop.f32.mrb[0].mxu0
        %v980 = vadd.f32 0.0, %v979
        %v981 = vpop.f32.mrb[0].mxu0
        %v982 = vpop.f32.mrb[0].mxu0
        %v983 = vadd.f32 0.0, %v982
        %v984 = vpop.f32.mrb[0].mxu0
        %985 = vdwg.mxu0
        %v987 = vsel %vm805, %v896, 0
        %989 = vmatprep.subr.bf16.mxu0 0
        %990 = vmatpush1.bf16.msra.mxu0 %v611
        %991 = vmatprep.subr.bf16.mxu0 0
        %992 = vmatpush1.bf16.msra.mxu0 0
        %993 = vmatprep.subr.bf16.mxu0 0
        %994 = vmatpush1.bf16.msra.mxu0 0
        %995 = vmatprep.subr.bf16.mxu0 0
        %996 = vmatpush1.bf16.msra.mxu0 0
        %997 = vmatprep.subr.bf16.mxu0 0
        %998 = vmatpush1.bf16.msra.mxu0 0
        %999 = vmatprep.subr.bf16.mxu0 0
        %1000 = vmatpush1.bf16.msra.mxu0 0
        %1001 = vmatprep.subr.bf16.mxu0 0
        %1002 = vmatpush1.bf16.msra.mxu0 0
        %1003 = vmatprep.subr.bf16.mxu0 0
        %1004 = vmatpush1.bf16.msra.mxu0 0
        %1005 = vmatprep.subr.bf16.mxu0 0
        %1006 = vmatpush1.bf16.msra.mxu0 0
        %1007 = vmatprep.subr.bf16.mxu0 0
        %1008 = vmatpush1.bf16.msra.mxu0 0
        %1009 = vmatprep.subr.bf16.mxu0 0
        %1010 = vmatpush1.bf16.msra.mxu0 0
        %1011 = vmatprep.subr.bf16.mxu0 0
        %1012 = vmatpush1.bf16.msra.mxu0 0
        %1013 = vmatprep.subr.bf16.mxu0 0
        %1014 = vmatpush1.bf16.msra.mxu0 0
        %1015 = vmatprep.subr.bf16.mxu0 0
        %1016 = vmatpush1.bf16.msra.mxu0 0
        %1017 = vmatprep.subr.bf16.mxu0 0
        %1018 = vmatpush1.bf16.msra.mxu0 0
        %1019 = vmatprep.subr.bf16.mxu0 0
        %1020 = vmatpush1.bf16.msra.mxu0 0
        %1021 = vmatprep.mubr.bf16.mxu0 0
        %1022 = vmatmul.mubr.bf16.gmra.mrb[0].mxu0 %v987
        %v1023 = vpop.f32.mrb[0].mxu0
        %v1024 = vadd.f32 0.0, %v1023
        %v1025 = vpop.f32.mrb[0].mxu0
        %v1026 = vpop.f32.mrb[0].mxu0
        %v1027 = vadd.f32 0.0, %v1026
        %v1028 = vpop.f32.mrb[0].mxu0
        %1029 = vdwg.mxu0
        %v1031 = vsel %vm805, %v897, 0
        %1033 = vmatprep.subr.bf16.mxu0 0
        %1034 = vmatpush1.bf16.msra.mxu0 %v614
        %1035 = vmatprep.subr.bf16.mxu0 0
        %1036 = vmatpush1.bf16.msra.mxu0 0
        %1037 = vmatprep.subr.bf16.mxu0 0
        %1038 = vmatpush1.bf16.msra.mxu0 0
        %1039 = vmatprep.subr.bf16.mxu0 0
        %1040 = vmatpush1.bf16.msra.mxu0 0
        %1041 = vmatprep.subr.bf16.mxu0 0
        %1042 = vmatpush1.bf16.msra.mxu0 0
        %1043 = vmatprep.subr.bf16.mxu0 0
        %1044 = vmatpush1.bf16.msra.mxu0 0
        %1045 = vmatprep.subr.bf16.mxu0 0
        %1046 = vmatpush1.bf16.msra.mxu0 0
        %1047 = vmatprep.subr.bf16.mxu0 0
        %1048 = vmatpush1.bf16.msra.mxu0 0
        %1049 = vmatprep.subr.bf16.mxu0 0
        %1050 = vmatpush1.bf16.msra.mxu0 0
        %1051 = vmatprep.subr.bf16.mxu0 0
        %1052 = vmatpush1.bf16.msra.mxu0 0
        %1053 = vmatprep.subr.bf16.mxu0 0
        %1054 = vmatpush1.bf16.msra.mxu0 0
        %1055 = vmatprep.subr.bf16.mxu0 0
        %1056 = vmatpush1.bf16.msra.mxu0 0
        %1057 = vmatprep.subr.bf16.mxu0 0
        %1058 = vmatpush1.bf16.msra.mxu0 0
        %1059 = vmatprep.subr.bf16.mxu0 0
        %1060 = vmatpush1.bf16.msra.mxu0 0
        %1061 = vmatprep.subr.bf16.mxu0 0
        %1062 = vmatpush1.bf16.msra.mxu0 0
        %1063 = vmatprep.subr.bf16.mxu0 0
        %1064 = vmatpush1.bf16.msra.mxu0 0
        %1065 = vmatprep.mubr.bf16.mxu0 0
        %1066 = vmatmul.mubr.bf16.gmra.mrb[0].mxu0 %v1031
        %v1067 = vpop.f32.mrb[0].mxu0
        %v1068 = vadd.f32 0.0, %v1067
        %v1069 = vpop.f32.mrb[0].mxu0
        %v1070 = vpop.f32.mrb[0].mxu0
        %v1071 = vadd.f32 0.0, %v1070
        %v1072 = vpop.f32.mrb[0].mxu0
        %1073 = vdwg.mxu0
        %v1074 = vpack.c.bf16 %v939, %v936
        %v1075 = vpack.c.bf16 %v983, %v980
        %v1076 = vpack.c.bf16 %v1027, %v1024
        %v1077 = vpack.c.bf16 %v1071, %v1068
        %v1078 = vld [vmem:[#allocation7] sm:$0xf]
        %v1079 = vld [vmem:[#allocation7 + $0x4] sm:$0xf]
        %v1080 = vld [vmem:[#allocation7 + $0x8] sm:$0xf]
        %v1081 = vld [vmem:[#allocation7 + $0xc] sm:$0xf]
        %v1086 = vunpack.c.l.b16 %v1078
        %v1087 = vunpack.c.l.b16 %v1079
        %v1088 = vunpack.c.l.b16 %v1080
        %v1089 = vunpack.c.l.b16 %v1081
        %v1090 = vpack.c.b16 %v1087, %v1086
        %v1091 = vpack.c.b16 %v1089, %v1088
        %v1095 = vsel %vm616, %v1074, 0
        %v1098 = vsel %vm616, %v1075, 0
        %v1101 = vsel %vm616, %v1076, 0
        %v1104 = vsel %vm616, %v1077, 0
        %1106 = vmatprep.subr.bf16.mxu0 0
        %1107 = vmatpush1.bf16.msra.mxu0 %v1090
        %1108 = vmatprep.subr.bf16.mxu0 0
        %1109 = vmatpush1.bf16.msra.mxu0 %v1091
        %1110 = vmatprep.subr.bf16.mxu0 0
        %1111 = vmatpush1.bf16.msra.mxu0 0
        %1112 = vmatprep.subr.bf16.mxu0 0
        %1113 = vmatpush1.bf16.msra.mxu0 0
        %1114 = vmatprep.subr.bf16.mxu0 0
        %1115 = vmatpush1.bf16.msra.mxu0 0
        %1116 = vmatprep.subr.bf16.mxu0 0
        %1117 = vmatpush1.bf16.msra.mxu0 0
        %1118 = vmatprep.subr.bf16.mxu0 0
        %1119 = vmatpush1.bf16.msra.mxu0 0
        %1120 = vmatprep.subr.bf16.mxu0 0
        %1121 = vmatpush1.bf16.msra.mxu0 0
        %1122 = vmatprep.subr.bf16.mxu0 0
        %1123 = vmatpush1.bf16.msra.mxu0 0
        %1124 = vmatprep.subr.bf16.mxu0 0
        %1125 = vmatpush1.bf16.msra.mxu0 0
        %1126 = vmatprep.subr.bf16.mxu0 0
        %1127 = vmatpush1.bf16.msra.mxu0 0
        %1128 = vmatprep.subr.bf16.mxu0 0
        %1129 = vmatpush1.bf16.msra.mxu0 0
        %1130 = vmatprep.subr.bf16.mxu0 0
        %1131 = vmatpush1.bf16.msra.mxu0 0
        %1132 = vmatprep.subr.bf16.mxu0 0
        %1133 = vmatpush1.bf16.msra.mxu0 0
        %1134 = vmatprep.subr.bf16.mxu0 0
        %1135 = vmatpush1.bf16.msra.mxu0 0
        %1136 = vmatprep.subr.bf16.mxu0 0
        %1137 = vmatpush1.bf16.msra.mxu0 0
        %1138 = vmatprep.mubr.bf16.mxu0 0
        %1139 = vmatmul.mubr.bf16.gmra.mrb[0].mxu0 %v1095
        %v1140 = vpop.f32.mrb[0].mxu0
        %v1141 = vadd.f32 0.0, %v1140
        %v1142 = vpop.f32.mrb[0].mxu0
        %v1143 = vpop.f32.mrb[0].mxu0
        %v1144 = vadd.f32 0.0, %v1143
        %v1145 = vpop.f32.mrb[0].mxu0
        %1146 = vmatprep.mubr.bf16.mxu0 0
        %1147 = vmatmul.mubr.bf16.gmra.mrb[0].mxu0 %v1098
        %v1148 = vpop.f32.mrb[0].mxu0
        %v1149 = vadd.f32 0.0, %v1148
        %v1150 = vpop.f32.mrb[0].mxu0
        %v1151 = vpop.f32.mrb[0].mxu0
        %v1152 = vadd.f32 0.0, %v1151
        %v1153 = vpop.f32.mrb[0].mxu0
        %1154 = vmatprep.mubr.bf16.mxu0 0
        %1155 = vmatmul.mubr.bf16.gmra.mrb[0].mxu0 %v1101
        %v1156 = vpop.f32.mrb[0].mxu0
        %v1157 = vadd.f32 0.0, %v1156
        %v1158 = vpop.f32.mrb[0].mxu0
        %v1159 = vpop.f32.mrb[0].mxu0
        %v1160 = vadd.f32 0.0, %v1159
        %v1161 = vpop.f32.mrb[0].mxu0
        %1162 = vmatprep.mubr.bf16.mxu0 0
        %1163 = vmatmul.mubr.bf16.gmra.mrb[0].mxu0 %v1104
        %v1164 = vpop.f32.mrb[0].mxu0
        %v1165 = vadd.f32 0.0, %v1164
        %v1166 = vpop.f32.mrb[0].mxu0
        %v1167 = vpop.f32.mrb[0].mxu0
        %v1168 = vadd.f32 0.0, %v1167
        %v1169 = vpop.f32.mrb[0].mxu0
        %1170 = vdwg.mxu0
        %v1172 = vlaneseq
        %v1173 = vshrl.u32 %v1172, 7
        %v1174 = vsub.s32 0, %v1173
        %v1175 = vrot.slane %v615, %v1174
        %v1177 = vadd.f32 %v1175, %v1141
        %v1178 = vadd.f32 %v1175, %v1144
        %v1179 = vadd.f32 %v1175, %v1149
        %v1180 = vadd.f32 %v1175, %v1152
        %v1181 = vadd.f32 %v1175, %v1157
        %v1182 = vadd.f32 %v1175, %v1160
        %v1183 = vadd.f32 %v1175, %v1165
        %v1184 = vadd.f32 %v1175, %v1168
        %1186 = vrot.lane.b32.xlu0 %v603, 96
        %v1187 = vpop.permute.xlu0 %1186
        %1189 = vrot.lane.b32.xlu0 %v604, 96
        %v1190 = vpop.permute.xlu0 %1189
        %v1192 = vsel %vm616, %v1187, 0
        %v1195 = vsel %vm616, %v1190, 0
        %1197 = vmatprep.subr.bf16.mxu0 0
        %1198 = vmatpush1.bf16.xpose.msra.mxu0 %v1195
        %1199 = vmatprep.subr.bf16.mxu0 0
        %1200 = vmatpush1.bf16.xpose.msra.mxu0 0
        %1201 = vmatprep.subr.bf16.mxu0 0
        %1202 = vmatpush1.bf16.xpose.msra.mxu0 0
        %1203 = vmatprep.subr.bf16.mxu0 0
        %1204 = vmatpush1.bf16.xpose.msra.mxu0 0
        %1205 = vmatprep.subr.bf16.mxu0 0
        %1206 = vmatpush1.bf16.xpose.msra.mxu0 0
        %1207 = vmatprep.subr.bf16.mxu0 0
        %1208 = vmatpush1.bf16.xpose.msra.mxu0 0
        %1209 = vmatprep.subr.bf16.mxu0 0
        %1210 = vmatpush1.bf16.xpose.msra.mxu0 0
        %1211 = vmatprep.subr.bf16.mxu0 0
        %1212 = vmatpush1.bf16.xpose.msra.mxu0 0
        %1213 = vmatprep.subr.bf16.mxu0 0
        %1214 = vmatpush1.bf16.xpose.msra.mxu0 0
        %1215 = vmatprep.subr.bf16.mxu0 0
        %1216 = vmatpush1.bf16.xpose.msra.mxu0 0
        %1217 = vmatprep.subr.bf16.mxu0 0
        %1218 = vmatpush1.bf16.xpose.msra.mxu0 0
        %1219 = vmatprep.subr.bf16.mxu0 0
        %1220 = vmatpush1.bf16.xpose.msra.mxu0 0
        %1221 = vmatprep.subr.bf16.mxu0 0
        %1222 = vmatpush1.bf16.xpose.msra.mxu0 0
        %1223 = vmatprep.subr.bf16.mxu0 0
        %1224 = vmatpush1.bf16.xpose.msra.mxu0 0
        %1225 = vmatprep.subr.bf16.mxu0 0
        %1226 = vmatpush1.bf16.xpose.msra.mxu0 0
        %1227 = vmatprep.subr.bf16.mxu0 0
        %1228 = vmatpush1.bf16.xpose.msra.mxu0 0
        %1229 = vmatprep.mubr.bf16.mxu0 0
        %1230 = vmatmul.mubr.bf16.gmra.mrb[0].mxu0 %v1192
        %v1231 = vpop.f32.mrb[0].mxu0
        %v1232 = vadd.f32 0.0, %v1231
        %v1233 = vpop.f32.mrb[0].mxu0
        %v1234 = vpop.f32.mrb[0].mxu0
        %v1235 = vadd.f32 0.0, %v1234
        %v1236 = vpop.f32.mrb[0].mxu0
        %1237 = vdwg.mxu0
        %1239 = vrot.lane.b32.xlu0 %v606, 96
        %v1240 = vpop.permute.xlu0 %1239
        %1242 = vrot.lane.b32.xlu0 %v607, 96
        %v1243 = vpop.permute.xlu0 %1242
        %v1245 = vsel %vm616, %v1240, 0
        %v1248 = vsel %vm616, %v1243, 0
        %1250 = vmatprep.subr.bf16.mxu0 0
        %1251 = vmatpush1.bf16.xpose.msra.mxu0 %v1248
        %1252 = vmatprep.subr.bf16.mxu0 0
        %1253 = vmatpush1.bf16.xpose.msra.mxu0 0
        %1254 = vmatprep.subr.bf16.mxu0 0
        %1255 = vmatpush1.bf16.xpose.msra.mxu0 0
        %1256 = vmatprep.subr.bf16.mxu0 0
        %1257 = vmatpush1.bf16.xpose.msra.mxu0 0
        %1258 = vmatprep.subr.bf16.mxu0 0
        %1259 = vmatpush1.bf16.xpose.msra.mxu0 0
        %1260 = vmatprep.subr.bf16.mxu0 0
        %1261 = vmatpush1.bf16.xpose.msra.mxu0 0
        %1262 = vmatprep.subr.bf16.mxu0 0
        %1263 = vmatpush1.bf16.xpose.msra.mxu0 0
        %1264 = vmatprep.subr.bf16.mxu0 0
        %1265 = vmatpush1.bf16.xpose.msra.mxu0 0
        %1266 = vmatprep.subr.bf16.mxu0 0
        %1267 = vmatpush1.bf16.xpose.msra.mxu0 0
        %1268 = vmatprep.subr.bf16.mxu0 0
        %1269 = vmatpush1.bf16.xpose.msra.mxu0 0
        %1270 = vmatprep.subr.bf16.mxu0 0
        %1271 = vmatpush1.bf16.xpose.msra.mxu0 0
        %1272 = vmatprep.subr.bf16.mxu0 0
        %1273 = vmatpush1.bf16.xpose.msra.mxu0 0
        %1274 = vmatprep.subr.bf16.mxu0 0
        %1275 = vmatpush1.bf16.xpose.msra.mxu0 0
        %1276 = vmatprep.subr.bf16.mxu0 0
        %1277 = vmatpush1.bf16.xpose.msra.mxu0 0
        %1278 = vmatprep.subr.bf16.mxu0 0
        %1279 = vmatpush1.bf16.xpose.msra.mxu0 0
        %1280 = vmatprep.subr.bf16.mxu0 0
        %1281 = vmatpush1.bf16.xpose.msra.mxu0 0
        %1282 = vmatprep.mubr.bf16.mxu0 0
        %1283 = vmatmul.mubr.bf16.gmra.mrb[0].mxu0 %v1245
        %v1284 = vpop.f32.mrb[0].mxu0
        %v1285 = vadd.f32 0.0, %v1284
        %v1286 = vpop.f32.mrb[0].mxu0
        %v1287 = vpop.f32.mrb[0].mxu0
        %v1288 = vadd.f32 0.0, %v1287
        %v1289 = vpop.f32.mrb[0].mxu0
        %1290 = vdwg.mxu0
        %1292 = vrot.lane.b32.xlu0 %v609, 96
        %v1293 = vpop.permute.xlu0 %1292
        %1295 = vrot.lane.b32.xlu0 %v610, 96
        %v1296 = vpop.permute.xlu0 %1295
        %v1298 = vsel %vm616, %v1293, 0
        %v1301 = vsel %vm616, %v1296, 0
        %1303 = vmatprep.subr.bf16.mxu0 0
        %1304 = vmatpush1.bf16.xpose.msra.mxu0 %v1301
        %1305 = vmatprep.subr.bf16.mxu0 0
        %1306 = vmatpush1.bf16.xpose.msra.mxu0 0
        %1307 = vmatprep.subr.bf16.mxu0 0
        %1308 = vmatpush1.bf16.xpose.msra.mxu0 0
        %1309 = vmatprep.subr.bf16.mxu0 0
        %1310 = vmatpush1.bf16.xpose.msra.mxu0 0
        %1311 = vmatprep.subr.bf16.mxu0 0
        %1312 = vmatpush1.bf16.xpose.msra.mxu0 0
        %1313 = vmatprep.subr.bf16.mxu0 0
        %1314 = vmatpush1.bf16.xpose.msra.mxu0 0
        %1315 = vmatprep.subr.bf16.mxu0 0
        %1316 = vmatpush1.bf16.xpose.msra.mxu0 0
        %1317 = vmatprep.subr.bf16.mxu0 0
        %1318 = vmatpush1.bf16.xpose.msra.mxu0 0
        %1319 = vmatprep.subr.bf16.mxu0 0
        %1320 = vmatpush1.bf16.xpose.msra.mxu0 0
        %1321 = vmatprep.subr.bf16.mxu0 0
        %1322 = vmatpush1.bf16.xpose.msra.mxu0 0
        %1323 = vmatprep.subr.bf16.mxu0 0
        %1324 = vmatpush1.bf16.xpose.msra.mxu0 0
        %1325 = vmatprep.subr.bf16.mxu0 0
        %1326 = vmatpush1.bf16.xpose.msra.mxu0 0
        %1327 = vmatprep.subr.bf16.mxu0 0
        %1328 = vmatpush1.bf16.xpose.msra.mxu0 0
        %1329 = vmatprep.subr.bf16.mxu0 0
        %1330 = vmatpush1.bf16.xpose.msra.mxu0 0
        %1331 = vmatprep.subr.bf16.mxu0 0
        %1332 = vmatpush1.bf16.xpose.msra.mxu0 0
        %1333 = vmatprep.subr.bf16.mxu0 0
        %1334 = vmatpush1.bf16.xpose.msra.mxu0 0
        %1335 = vmatprep.mubr.bf16.mxu0 0
        %1336 = vmatmul.mubr.bf16.gmra.mrb[0].mxu0 %v1298
        %v1337 = vpop.f32.mrb[0].mxu0
        %v1338 = vadd.f32 0.0, %v1337
        %v1339 = vpop.f32.mrb[0].mxu0
        %v1340 = vpop.f32.mrb[0].mxu0
        %v1341 = vadd.f32 0.0, %v1340
        %v1342 = vpop.f32.mrb[0].mxu0
        %1343 = vdwg.mxu0
        %1345 = vrot.lane.b32.xlu0 %v612, 96
        %v1346 = vpop.permute.xlu0 %1345
        %1348 = vrot.lane.b32.xlu0 %v613, 96
        %v1349 = vpop.permute.xlu0 %1348
        %v1351 = vsel %vm616, %v1346, 0
        %v1354 = vsel %vm616, %v1349, 0
        %1356 = vmatprep.subr.bf16.mxu0 0
        %1357 = vmatpush1.bf16.xpose.msra.mxu0 %v1354
        %1358 = vmatprep.subr.bf16.mxu0 0
        %1359 = vmatpush1.bf16.xpose.msra.mxu0 0
        %1360 = vmatprep.subr.bf16.mxu0 0
        %1361 = vmatpush1.bf16.xpose.msra.mxu0 0
        %1362 = vmatprep.subr.bf16.mxu0 0
        %1363 = vmatpush1.bf16.xpose.msra.mxu0 0
        %1364 = vmatprep.subr.bf16.mxu0 0
        %1365 = vmatpush1.bf16.xpose.msra.mxu0 0
        %1366 = vmatprep.subr.bf16.mxu0 0
        %1367 = vmatpush1.bf16.xpose.msra.mxu0 0
        %1368 = vmatprep.subr.bf16.mxu0 0
        %1369 = vmatpush1.bf16.xpose.msra.mxu0 0
        %1370 = vmatprep.subr.bf16.mxu0 0
        %1371 = vmatpush1.bf16.xpose.msra.mxu0 0
        %1372 = vmatprep.subr.bf16.mxu0 0
        %1373 = vmatpush1.bf16.xpose.msra.mxu0 0
        %1374 = vmatprep.subr.bf16.mxu0 0
        %1375 = vmatpush1.bf16.xpose.msra.mxu0 0
        %1376 = vmatprep.subr.bf16.mxu0 0
        %1377 = vmatpush1.bf16.xpose.msra.mxu0 0
        %1378 = vmatprep.subr.bf16.mxu0 0
        %1379 = vmatpush1.bf16.xpose.msra.mxu0 0
        %1380 = vmatprep.subr.bf16.mxu0 0
        %1381 = vmatpush1.bf16.xpose.msra.mxu0 0
        %1382 = vmatprep.subr.bf16.mxu0 0
        %1383 = vmatpush1.bf16.xpose.msra.mxu0 0
        %1384 = vmatprep.subr.bf16.mxu0 0
        %1385 = vmatpush1.bf16.xpose.msra.mxu0 0
        %1386 = vmatprep.subr.bf16.mxu0 0
        %1387 = vmatpush1.bf16.xpose.msra.mxu0 0
        %1388 = vmatprep.mubr.bf16.mxu0 0
        %1389 = vmatmul.mubr.bf16.gmra.mrb[0].mxu0 %v1351
        %v1390 = vpop.f32.mrb[0].mxu0
        %v1391 = vadd.f32 0.0, %v1390
        %v1392 = vpop.f32.mrb[0].mxu0
        %v1393 = vpop.f32.mrb[0].mxu0
        %v1394 = vadd.f32 0.0, %v1393
        %v1395 = vpop.f32.mrb[0].mxu0
        %1396 = vdwg.mxu0
        %v1397 = vsel %vm805, %v1232, -inf
        %1398 = vmax.xlane.f32.xlu0 %v1397
        %v1399 = vpop.xlane.xlu0 %1398
        %v1400 = vsel %vm805, %v1235, -inf
        %1401 = vmax.xlane.f32.xlu0 %v1400
        %v1402 = vpop.xlane.xlu0 %1401
        %v1403 = vsel %vm805, %v1285, -inf
        %1404 = vmax.xlane.f32.xlu0 %v1403
        %v1405 = vpop.xlane.xlu0 %1404
        %v1406 = vsel %vm805, %v1288, -inf
        %1407 = vmax.xlane.f32.xlu0 %v1406
        %v1408 = vpop.xlane.xlu0 %1407
        %v1409 = vsel %vm805, %v1338, -inf
        %1410 = vmax.xlane.f32.xlu0 %v1409
        %v1411 = vpop.xlane.xlu0 %1410
        %v1412 = vsel %vm805, %v1341, -inf
        %1413 = vmax.xlane.f32.xlu0 %v1412
        %v1414 = vpop.xlane.xlu0 %1413
        %v1415 = vsel %vm805, %v1391, -inf
        %1416 = vmax.xlane.f32.xlu0 %v1415
        %v1417 = vpop.xlane.xlu0 %1416
        %v1418 = vsel %vm805, %v1394, -inf
        %1419 = vmax.xlane.f32.xlu0 %v1418
        %v1420 = vpop.xlane.xlu0 %1419
        %v1421 = vsub.f32 %v1232, %v1399
        %v1422 = vsub.f32 %v1235, %v1402
        %v1423 = vsub.f32 %v1285, %v1405
        %v1424 = vsub.f32 %v1288, %v1408
        %v1425 = vsub.f32 %v1338, %v1411
        %v1426 = vsub.f32 %v1341, %v1414
        %v1427 = vsub.f32 %v1391, %v1417
        %v1428 = vsub.f32 %v1394, %v1420
        %v1429 = vmul.f32 %v1421, 1.442695
        %v1430 = vpow.pop %v1429
        %v1431 = vmul.f32 %v1422, 1.442695
        %v1432 = vpow.pop %v1431
        %v1433 = vmul.f32 %v1423, 1.442695
        %v1434 = vpow.pop %v1433
        %v1435 = vmul.f32 %v1424, 1.442695
        %v1436 = vpow.pop %v1435
        %v1437 = vmul.f32 %v1425, 1.442695
        %v1438 = vpow.pop %v1437
        %v1439 = vmul.f32 %v1426, 1.442695
        %v1440 = vpow.pop %v1439
        %v1441 = vmul.f32 %v1427, 1.442695
        %v1442 = vpow.pop %v1441
        %v1443 = vmul.f32 %v1428, 1.442695
        %v1444 = vpow.pop %v1443
        %v1445 = vsel %vm805, %v1430, 0.0
        %1446 = vadd.xlane.f32.xlu0 %v1445
        %v1447 = vpop.xlane.xlu0 %1446
        %v1448 = vsel %vm805, %v1432, 0.0
        %1449 = vadd.xlane.f32.xlu0 %v1448
        %v1450 = vpop.xlane.xlu0 %1449
        %v1451 = vsel %vm805, %v1434, 0.0
        %1452 = vadd.xlane.f32.xlu0 %v1451
        %v1453 = vpop.xlane.xlu0 %1452
        %v1454 = vsel %vm805, %v1436, 0.0
        %1455 = vadd.xlane.f32.xlu0 %v1454
        %v1456 = vpop.xlane.xlu0 %1455
        %v1457 = vsel %vm805, %v1438, 0.0
        %1458 = vadd.xlane.f32.xlu0 %v1457
        %v1459 = vpop.xlane.xlu0 %1458
        %v1460 = vsel %vm805, %v1440, 0.0
        %1461 = vadd.xlane.f32.xlu0 %v1460
        %v1462 = vpop.xlane.xlu0 %1461
        %v1463 = vsel %vm805, %v1442, 0.0
        %1464 = vadd.xlane.f32.xlu0 %v1463
        %v1465 = vpop.xlane.xlu0 %1464
        %v1466 = vsel %vm805, %v1444, 0.0
        %1467 = vadd.xlane.f32.xlu0 %v1466
        %v1468 = vpop.xlane.xlu0 %1467
        %v1469 = vrcp.pop %v1447
        %v1470 = vrcp.pop %v1450
        %v1471 = vrcp.pop %v1453
        %v1472 = vrcp.pop %v1456
        %v1473 = vrcp.pop %v1459
        %v1474 = vrcp.pop %v1462
        %v1475 = vrcp.pop %v1465
        %v1476 = vrcp.pop %v1468
        %v1477 = vmul.f32 %v1430, %v1469
        %v1478 = vmul.f32 %v1432, %v1470
        %v1479 = vmul.f32 %v1434, %v1471
        %v1480 = vmul.f32 %v1436, %v1472
        %v1481 = vmul.f32 %v1438, %v1473
        %v1482 = vmul.f32 %v1440, %v1474
        %v1483 = vmul.f32 %v1442, %v1475
        %v1484 = vmul.f32 %v1444, %v1476
        %v1485 = vpack.c.bf16 %v1478, %v1477
        %v1486 = vpack.c.bf16 %v1480, %v1479
        %v1487 = vpack.c.bf16 %v1482, %v1481
        %v1488 = vpack.c.bf16 %v1484, %v1483
        %1490 = vrot.lane.b32.xlu0 %v605, 96
        %v1491 = vpop.permute.xlu0 %1490
        %v1494 = vsel %vm805, %v1485, 0
        %1496 = vmatprep.subr.bf16.mxu0 0
        %1497 = vmatpush1.bf16.msra.mxu0 %v1491
        %1498 = vmatprep.subr.bf16.mxu0 0
        %1499 = vmatpush1.bf16.msra.mxu0 0
        %1500 = vmatprep.subr.bf16.mxu0 0
        %1501 = vmatpush1.bf16.msra.mxu0 0
        %1502 = vmatprep.subr.bf16.mxu0 0
        %1503 = vmatpush1.bf16.msra.mxu0 0
        %1504 = vmatprep.subr.bf16.mxu0 0
        %1505 = vmatpush1.bf16.msra.mxu0 0
        %1506 = vmatprep.subr.bf16.mxu0 0
        %1507 = vmatpush1.bf16.msra.mxu0 0
        %1508 = vmatprep.subr.bf16.mxu0 0
        %1509 = vmatpush1.bf16.msra.mxu0 0
        %1510 = vmatprep.subr.bf16.mxu0 0
        %1511 = vmatpush1.bf16.msra.mxu0 0
        %1512 = vmatprep.subr.bf16.mxu0 0
        %1513 = vmatpush1.bf16.msra.mxu0 0
        %1514 = vmatprep.subr.bf16.mxu0 0
        %1515 = vmatpush1.bf16.msra.mxu0 0
        %1516 = vmatprep.subr.bf16.mxu0 0
        %1517 = vmatpush1.bf16.msra.mxu0 0
        %1518 = vmatprep.subr.bf16.mxu0 0
        %1519 = vmatpush1.bf16.msra.mxu0 0
        %1520 = vmatprep.subr.bf16.mxu0 0
        %1521 = vmatpush1.bf16.msra.mxu0 0
        %1522 = vmatprep.subr.bf16.mxu0 0
        %1523 = vmatpush1.bf16.msra.mxu0 0
        %1524 = vmatprep.subr.bf16.mxu0 0
        %1525 = vmatpush1.bf16.msra.mxu0 0
        %1526 = vmatprep.subr.bf16.mxu0 0
        %1527 = vmatpush1.bf16.msra.mxu0 0
        %1528 = vmatprep.mubr.bf16.mxu0 0
        %1529 = vmatmul.mubr.bf16.gmra.mrb[0].mxu0 %v1494
        %v1530 = vpop.f32.mrb[0].mxu0
        %v1531 = vadd.f32 0.0, %v1530
        %v1532 = vpop.f32.mrb[0].mxu0
        %v1533 = vpop.f32.mrb[0].mxu0
        %v1534 = vadd.f32 0.0, %v1533
        %v1535 = vpop.f32.mrb[0].mxu0
        %1536 = vdwg.mxu0
        %1538 = vrot.lane.b32.xlu0 %v608, 96
        %v1539 = vpop.permute.xlu0 %1538
        %v1542 = vsel %vm805, %v1486, 0
        %1544 = vmatprep.subr.bf16.mxu0 0
        %1545 = vmatpush1.bf16.msra.mxu0 %v1539
        %1546 = vmatprep.subr.bf16.mxu0 0
        %1547 = vmatpush1.bf16.msra.mxu0 0
        %1548 = vmatprep.subr.bf16.mxu0 0
        %1549 = vmatpush1.bf16.msra.mxu0 0
        %1550 = vmatprep.subr.bf16.mxu0 0
        %1551 = vmatpush1.bf16.msra.mxu0 0
        %1552 = vmatprep.subr.bf16.mxu0 0
        %1553 = vmatpush1.bf16.msra.mxu0 0
        %1554 = vmatprep.subr.bf16.mxu0 0
        %1555 = vmatpush1.bf16.msra.mxu0 0
        %1556 = vmatprep.subr.bf16.mxu0 0
        %1557 = vmatpush1.bf16.msra.mxu0 0
        %1558 = vmatprep.subr.bf16.mxu0 0
        %1559 = vmatpush1.bf16.msra.mxu0 0
        %1560 = vmatprep.subr.bf16.mxu0 0
        %1561 = vmatpush1.bf16.msra.mxu0 0
        %1562 = vmatprep.subr.bf16.mxu0 0
        %1563 = vmatpush1.bf16.msra.mxu0 0
        %1564 = vmatprep.subr.bf16.mxu0 0
        %1565 = vmatpush1.bf16.msra.mxu0 0
        %1566 = vmatprep.subr.bf16.mxu0 0
        %1567 = vmatpush1.bf16.msra.mxu0 0
        %1568 = vmatprep.subr.bf16.mxu0 0
        %1569 = vmatpush1.bf16.msra.mxu0 0
        %1570 = vmatprep.subr.bf16.mxu0 0
        %1571 = vmatpush1.bf16.msra.mxu0 0
        %1572 = vmatprep.subr.bf16.mxu0 0
        %1573 = vmatpush1.bf16.msra.mxu0 0
        %1574 = vmatprep.subr.bf16.mxu0 0
        %1575 = vmatpush1.bf16.msra.mxu0 0
        %1576 = vmatprep.mubr.bf16.mxu0 0
        %1577 = vmatmul.mubr.bf16.gmra.mrb[0].mxu0 %v1542
        %v1578 = vpop.f32.mrb[0].mxu0
        %v1579 = vadd.f32 0.0, %v1578
        %v1580 = vpop.f32.mrb[0].mxu0
        %v1581 = vpop.f32.mrb[0].mxu0
        %v1582 = vadd.f32 0.0, %v1581
        %v1583 = vpop.f32.mrb[0].mxu0
        %1584 = vdwg.mxu0
        %1586 = vrot.lane.b32.xlu0 %v611, 96
        %v1587 = vpop.permute.xlu0 %1586
        %v1590 = vsel %vm805, %v1487, 0
        %1592 = vmatprep.subr.bf16.mxu0 0
        %1593 = vmatpush1.bf16.msra.mxu0 %v1587
        %1594 = vmatprep.subr.bf16.mxu0 0
        %1595 = vmatpush1.bf16.msra.mxu0 0
        %1596 = vmatprep.subr.bf16.mxu0 0
        %1597 = vmatpush1.bf16.msra.mxu0 0
        %1598 = vmatprep.subr.bf16.mxu0 0
        %1599 = vmatpush1.bf16.msra.mxu0 0
        %1600 = vmatprep.subr.bf16.mxu0 0
        %1601 = vmatpush1.bf16.msra.mxu0 0
        %1602 = vmatprep.subr.bf16.mxu0 0
        %1603 = vmatpush1.bf16.msra.mxu0 0
        %1604 = vmatprep.subr.bf16.mxu0 0
        %1605 = vmatpush1.bf16.msra.mxu0 0
        %1606 = vmatprep.subr.bf16.mxu0 0
        %1607 = vmatpush1.bf16.msra.mxu0 0
        %1608 = vmatprep.subr.bf16.mxu0 0
        %1609 = vmatpush1.bf16.msra.mxu0 0
        %1610 = vmatprep.subr.bf16.mxu0 0
        %1611 = vmatpush1.bf16.msra.mxu0 0
        %1612 = vmatprep.subr.bf16.mxu0 0
        %1613 = vmatpush1.bf16.msra.mxu0 0
        %1614 = vmatprep.subr.bf16.mxu0 0
        %1615 = vmatpush1.bf16.msra.mxu0 0
        %1616 = vmatprep.subr.bf16.mxu0 0
        %1617 = vmatpush1.bf16.msra.mxu0 0
        %1618 = vmatprep.subr.bf16.mxu0 0
        %1619 = vmatpush1.bf16.msra.mxu0 0
        %1620 = vmatprep.subr.bf16.mxu0 0
        %1621 = vmatpush1.bf16.msra.mxu0 0
        %1622 = vmatprep.subr.bf16.mxu0 0
        %1623 = vmatpush1.bf16.msra.mxu0 0
        %1624 = vmatprep.mubr.bf16.mxu0 0
        %1625 = vmatmul.mubr.bf16.gmra.mrb[0].mxu0 %v1590
        %v1626 = vpop.f32.mrb[0].mxu0
        %v1627 = vadd.f32 0.0, %v1626
        %v1628 = vpop.f32.mrb[0].mxu0
        %v1629 = vpop.f32.mrb[0].mxu0
        %v1630 = vadd.f32 0.0, %v1629
        %v1631 = vpop.f32.mrb[0].mxu0
        %1632 = vdwg.mxu0
        %1634 = vrot.lane.b32.xlu0 %v614, 96
        %v1635 = vpop.permute.xlu0 %1634
        %v1638 = vsel %vm805, %v1488, 0
        %1640 = vmatprep.subr.bf16.mxu0 0
        %1641 = vmatpush1.bf16.msra.mxu0 %v1635
        %1642 = vmatprep.subr.bf16.mxu0 0
        %1643 = vmatpush1.bf16.msra.mxu0 0
        %1644 = vmatprep.subr.bf16.mxu0 0
        %1645 = vmatpush1.bf16.msra.mxu0 0
        %1646 = vmatprep.subr.bf16.mxu0 0
        %1647 = vmatpush1.bf16.msra.mxu0 0
        %1648 = vmatprep.subr.bf16.mxu0 0
        %1649 = vmatpush1.bf16.msra.mxu0 0
        %1650 = vmatprep.subr.bf16.mxu0 0
        %1651 = vmatpush1.bf16.msra.mxu0 0
        %1652 = vmatprep.subr.bf16.mxu0 0
        %1653 = vmatpush1.bf16.msra.mxu0 0
        %1654 = vmatprep.subr.bf16.mxu0 0
        %1655 = vmatpush1.bf16.msra.mxu0 0
        %1656 = vmatprep.subr.bf16.mxu0 0
        %1657 = vmatpush1.bf16.msra.mxu0 0
        %1658 = vmatprep.subr.bf16.mxu0 0
        %1659 = vmatpush1.bf16.msra.mxu0 0
        %1660 = vmatprep.subr.bf16.mxu0 0
        %1661 = vmatpush1.bf16.msra.mxu0 0
        %1662 = vmatprep.subr.bf16.mxu0 0
        %1663 = vmatpush1.bf16.msra.mxu0 0
        %1664 = vmatprep.subr.bf16.mxu0 0
        %1665 = vmatpush1.bf16.msra.mxu0 0
        %1666 = vmatprep.subr.bf16.mxu0 0
        %1667 = vmatpush1.bf16.msra.mxu0 0
        %1668 = vmatprep.subr.bf16.mxu0 0
        %1669 = vmatpush1.bf16.msra.mxu0 0
        %1670 = vmatprep.subr.bf16.mxu0 0
        %1671 = vmatpush1.bf16.msra.mxu0 0
        %1672 = vmatprep.mubr.bf16.mxu0 0
        %1673 = vmatmul.mubr.bf16.gmra.mrb[0].mxu0 %v1638
        %v1674 = vpop.f32.mrb[0].mxu0
        %v1675 = vadd.f32 0.0, %v1674
        %v1676 = vpop.f32.mrb[0].mxu0
        %v1677 = vpop.f32.mrb[0].mxu0
        %v1678 = vadd.f32 0.0, %v1677
        %v1679 = vpop.f32.mrb[0].mxu0
        %1680 = vdwg.mxu0
        %v1681 = vpack.c.bf16 %v1534, %v1531
        %v1682 = vpack.c.bf16 %v1582, %v1579
        %v1683 = vpack.c.bf16 %v1630, %v1627
        %v1684 = vpack.c.bf16 %v1678, %v1675
        %v1685 = vld [vmem:[#allocation7 + $0x10] sm:$0xf]
        %v1686 = vld [vmem:[#allocation7 + $0x14] sm:$0xf]
        %v1687 = vld [vmem:[#allocation7 + $0x18] sm:$0xf]
        %v1688 = vld [vmem:[#allocation7 + $0x1c] sm:$0xf]
        %v1693 = vunpack.c.l.b16 %v1685
        %v1694 = vunpack.c.l.b16 %v1686
        %v1695 = vunpack.c.l.b16 %v1687
        %v1696 = vunpack.c.l.b16 %v1688
        %v1697 = vpack.c.b16 %v1694, %v1693
        %v1698 = vpack.c.b16 %v1696, %v1695
        %v1702 = vsel %vm616, %v1681, 0
        %v1705 = vsel %vm616, %v1682, 0
        %v1708 = vsel %vm616, %v1683, 0
        %v1711 = vsel %vm616, %v1684, 0
        %1713 = vmatprep.subr.bf16.mxu0 0
        %1714 = vmatpush1.bf16.msra.mxu0 %v1697
        %1715 = vmatprep.subr.bf16.mxu0 0
        %1716 = vmatpush1.bf16.msra.mxu0 %v1698
        %1717 = vmatprep.subr.bf16.mxu0 0
        %1718 = vmatpush1.bf16.msra.mxu0 0
        %1719 = vmatprep.subr.bf16.mxu0 0
        %1720 = vmatpush1.bf16.msra.mxu0 0
        %1721 = vmatprep.subr.bf16.mxu0 0
        %1722 = vmatpush1.bf16.msra.mxu0 0
        %1723 = vmatprep.subr.bf16.mxu0 0
        %1724 = vmatpush1.bf16.msra.mxu0 0
        %1725 = vmatprep.subr.bf16.mxu0 0
        %1726 = vmatpush1.bf16.msra.mxu0 0
        %1727 = vmatprep.subr.bf16.mxu0 0
        %1728 = vmatpush1.bf16.msra.mxu0 0
        %1729 = vmatprep.subr.bf16.mxu0 0
        %1730 = vmatpush1.bf16.msra.mxu0 0
        %1731 = vmatprep.subr.bf16.mxu0 0
        %1732 = vmatpush1.bf16.msra.mxu0 0
        %1733 = vmatprep.subr.bf16.mxu0 0
        %1734 = vmatpush1.bf16.msra.mxu0 0
        %1735 = vmatprep.subr.bf16.mxu0 0
        %1736 = vmatpush1.bf16.msra.mxu0 0
        %1737 = vmatprep.subr.bf16.mxu0 0
        %1738 = vmatpush1.bf16.msra.mxu0 0
        %1739 = vmatprep.subr.bf16.mxu0 0
        %1740 = vmatpush1.bf16.msra.mxu0 0
        %1741 = vmatprep.subr.bf16.mxu0 0
        %1742 = vmatpush1.bf16.msra.mxu0 0
        %1743 = vmatprep.subr.bf16.mxu0 0
        %1744 = vmatpush1.bf16.msra.mxu0 0
        %1745 = vmatprep.mubr.bf16.mxu0 0
        %1746 = vmatmul.mubr.bf16.gmra.mrb[0].mxu0 %v1702
        %v1747 = vpop.f32.mrb[0].mxu0
        %v1748 = vadd.f32 0.0, %v1747
        %v1749 = vpop.f32.mrb[0].mxu0
        %v1750 = vpop.f32.mrb[0].mxu0
        %v1751 = vadd.f32 0.0, %v1750
        %v1752 = vpop.f32.mrb[0].mxu0
        %1753 = vmatprep.mubr.bf16.mxu0 0
        %1754 = vmatmul.mubr.bf16.gmra.mrb[0].mxu0 %v1705
        %v1755 = vpop.f32.mrb[0].mxu0
        %v1756 = vadd.f32 0.0, %v1755
        %v1757 = vpop.f32.mrb[0].mxu0
        %v1758 = vpop.f32.mrb[0].mxu0
        %v1759 = vadd.f32 0.0, %v1758
        %v1760 = vpop.f32.mrb[0].mxu0
        %1761 = vmatprep.mubr.bf16.mxu0 0
        %1762 = vmatmul.mubr.bf16.gmra.mrb[0].mxu0 %v1708
        %v1763 = vpop.f32.mrb[0].mxu0
        %v1764 = vadd.f32 0.0, %v1763
        %v1765 = vpop.f32.mrb[0].mxu0
        %v1766 = vpop.f32.mrb[0].mxu0
        %v1767 = vadd.f32 0.0, %v1766
        %v1768 = vpop.f32.mrb[0].mxu0
        %1769 = vmatprep.mubr.bf16.mxu0 0
        %1770 = vmatmul.mubr.bf16.gmra.mrb[0].mxu0 %v1711
        %v1771 = vpop.f32.mrb[0].mxu0
        %v1772 = vadd.f32 0.0, %v1771
        %v1773 = vpop.f32.mrb[0].mxu0
        %v1774 = vpop.f32.mrb[0].mxu0
        %v1775 = vadd.f32 0.0, %v1774
        %v1776 = vpop.f32.mrb[0].mxu0
        %1777 = vdwg.mxu0
        %v1778 = vadd.f32 %v1177, %v1748
        %v1779 = vadd.f32 %v1178, %v1751
        %v1780 = vadd.f32 %v1179, %v1756
        %v1781 = vadd.f32 %v1180, %v1759
        %v1782 = vadd.f32 %v1181, %v1764
        %v1783 = vadd.f32 %v1182, %v1767
        %v1784 = vadd.f32 %v1183, %v1772
        %v1785 = vadd.f32 %v1184, %v1775
        %1786 = vrot.lane.b32.xlu0 %v603, 64
        %v1787 = vpop.permute.xlu0 %1786
        %1788 = vrot.lane.b32.xlu0 %v604, 64
        %v1789 = vpop.permute.xlu0 %1788
        %v1791 = vsel %vm616, %v1787, 0
        %v1794 = vsel %vm616, %v1789, 0
        %1796 = vmatprep.subr.bf16.mxu0 0
        %1797 = vmatpush1.bf16.xpose.msra.mxu0 %v1794
        %1798 = vmatprep.subr.bf16.mxu0 0
        %1799 = vmatpush1.bf16.xpose.msra.mxu0 0
        %1800 = vmatprep.subr.bf16.mxu0 0
        %1801 = vmatpush1.bf16.xpose.msra.mxu0 0
        %1802 = vmatprep.subr.bf16.mxu0 0
        %1803 = vmatpush1.bf16.xpose.msra.mxu0 0
        %1804 = vmatprep.subr.bf16.mxu0 0
        %1805 = vmatpush1.bf16.xpose.msra.mxu0 0
        %1806 = vmatprep.subr.bf16.mxu0 0
        %1807 = vmatpush1.bf16.xpose.msra.mxu0 0
        %1808 = vmatprep.subr.bf16.mxu0 0
        %1809 = vmatpush1.bf16.xpose.msra.mxu0 0
        %1810 = vmatprep.subr.bf16.mxu0 0
        %1811 = vmatpush1.bf16.xpose.msra.mxu0 0
        %1812 = vmatprep.subr.bf16.mxu0 0
        %1813 = vmatpush1.bf16.xpose.msra.mxu0 0
        %1814 = vmatprep.subr.bf16.mxu0 0
        %1815 = vmatpush1.bf16.xpose.msra.mxu0 0
        %1816 = vmatprep.subr.bf16.mxu0 0
        %1817 = vmatpush1.bf16.xpose.msra.mxu0 0
        %1818 = vmatprep.subr.bf16.mxu0 0
        %1819 = vmatpush1.bf16.xpose.msra.mxu0 0
        %1820 = vmatprep.subr.bf16.mxu0 0
        %1821 = vmatpush1.bf16.xpose.msra.mxu0 0
        %1822 = vmatprep.subr.bf16.mxu0 0
        %1823 = vmatpush1.bf16.xpose.msra.mxu0 0
        %1824 = vmatprep.subr.bf16.mxu0 0
        %1825 = vmatpush1.bf16.xpose.msra.mxu0 0
        %1826 = vmatprep.subr.bf16.mxu0 0
        %1827 = vmatpush1.bf16.xpose.msra.mxu0 0
        %1828 = vmatprep.mubr.bf16.mxu0 0
        %1829 = vmatmul.mubr.bf16.gmra.mrb[0].mxu0 %v1791
        %v1830 = vpop.f32.mrb[0].mxu0
        %v1831 = vadd.f32 0.0, %v1830
        %v1832 = vpop.f32.mrb[0].mxu0
        %v1833 = vpop.f32.mrb[0].mxu0
        %v1834 = vadd.f32 0.0, %v1833
        %v1835 = vpop.f32.mrb[0].mxu0
        %1836 = vdwg.mxu0
        %1837 = vrot.lane.b32.xlu0 %v606, 64
        %v1838 = vpop.permute.xlu0 %1837
        %1839 = vrot.lane.b32.xlu0 %v607, 64
        %v1840 = vpop.permute.xlu0 %1839
        %v1842 = vsel %vm616, %v1838, 0
        %v1845 = vsel %vm616, %v1840, 0
        %1847 = vmatprep.subr.bf16.mxu0 0
        %1848 = vmatpush1.bf16.xpose.msra.mxu0 %v1845
        %1849 = vmatprep.subr.bf16.mxu0 0
        %1850 = vmatpush1.bf16.xpose.msra.mxu0 0
        %1851 = vmatprep.subr.bf16.mxu0 0
        %1852 = vmatpush1.bf16.xpose.msra.mxu0 0
        %1853 = vmatprep.subr.bf16.mxu0 0
        %1854 = vmatpush1.bf16.xpose.msra.mxu0 0
        %1855 = vmatprep.subr.bf16.mxu0 0
        %1856 = vmatpush1.bf16.xpose.msra.mxu0 0
        %1857 = vmatprep.subr.bf16.mxu0 0
        %1858 = vmatpush1.bf16.xpose.msra.mxu0 0
        %1859 = vmatprep.subr.bf16.mxu0 0
        %1860 = vmatpush1.bf16.xpose.msra.mxu0 0
        %1861 = vmatprep.subr.bf16.mxu0 0
        %1862 = vmatpush1.bf16.xpose.msra.mxu0 0
        %1863 = vmatprep.subr.bf16.mxu0 0
        %1864 = vmatpush1.bf16.xpose.msra.mxu0 0
        %1865 = vmatprep.subr.bf16.mxu0 0
        %1866 = vmatpush1.bf16.xpose.msra.mxu0 0
        %1867 = vmatprep.subr.bf16.mxu0 0
        %1868 = vmatpush1.bf16.xpose.msra.mxu0 0
        %1869 = vmatprep.subr.bf16.mxu0 0
        %1870 = vmatpush1.bf16.xpose.msra.mxu0 0
        %1871 = vmatprep.subr.bf16.mxu0 0
        %1872 = vmatpush1.bf16.xpose.msra.mxu0 0
        %1873 = vmatprep.subr.bf16.mxu0 0
        %1874 = vmatpush1.bf16.xpose.msra.mxu0 0
        %1875 = vmatprep.subr.bf16.mxu0 0
        %1876 = vmatpush1.bf16.xpose.msra.mxu0 0
        %1877 = vmatprep.subr.bf16.mxu0 0
        %1878 = vmatpush1.bf16.xpose.msra.mxu0 0
        %1879 = vmatprep.mubr.bf16.mxu0 0
        %1880 = vmatmul.mubr.bf16.gmra.mrb[0].mxu0 %v1842
        %v1881 = vpop.f32.mrb[0].mxu0
        %v1882 = vadd.f32 0.0, %v1881
        %v1883 = vpop.f32.mrb[0].mxu0
        %v1884 = vpop.f32.mrb[0].mxu0
        %v1885 = vadd.f32 0.0, %v1884
        %v1886 = vpop.f32.mrb[0].mxu0
        %1887 = vdwg.mxu0
        %1888 = vrot.lane.b32.xlu0 %v609, 64
        %v1889 = vpop.permute.xlu0 %1888
        %1890 = vrot.lane.b32.xlu0 %v610, 64
        %v1891 = vpop.permute.xlu0 %1890
        %v1893 = vsel %vm616, %v1889, 0
        %v1896 = vsel %vm616, %v1891, 0
        %1898 = vmatprep.subr.bf16.mxu0 0
        %1899 = vmatpush1.bf16.xpose.msra.mxu0 %v1896
        %1900 = vmatprep.subr.bf16.mxu0 0
        %1901 = vmatpush1.bf16.xpose.msra.mxu0 0
        %1902 = vmatprep.subr.bf16.mxu0 0
        %1903 = vmatpush1.bf16.xpose.msra.mxu0 0
        %1904 = vmatprep.subr.bf16.mxu0 0
        %1905 = vmatpush1.bf16.xpose.msra.mxu0 0
        %1906 = vmatprep.subr.bf16.mxu0 0
        %1907 = vmatpush1.bf16.xpose.msra.mxu0 0
        %1908 = vmatprep.subr.bf16.mxu0 0
        %1909 = vmatpush1.bf16.xpose.msra.mxu0 0
        %1910 = vmatprep.subr.bf16.mxu0 0
        %1911 = vmatpush1.bf16.xpose.msra.mxu0 0
        %1912 = vmatprep.subr.bf16.mxu0 0
        %1913 = vmatpush1.bf16.xpose.msra.mxu0 0
        %1914 = vmatprep.subr.bf16.mxu0 0
        %1915 = vmatpush1.bf16.xpose.msra.mxu0 0
        %1916 = vmatprep.subr.bf16.mxu0 0
        %1917 = vmatpush1.bf16.xpose.msra.mxu0 0
        %1918 = vmatprep.subr.bf16.mxu0 0
        %1919 = vmatpush1.bf16.xpose.msra.mxu0 0
        %1920 = vmatprep.subr.bf16.mxu0 0
        %1921 = vmatpush1.bf16.xpose.msra.mxu0 0
        %1922 = vmatprep.subr.bf16.mxu0 0
        %1923 = vmatpush1.bf16.xpose.msra.mxu0 0
        %1924 = vmatprep.subr.bf16.mxu0 0
        %1925 = vmatpush1.bf16.xpose.msra.mxu0 0
        %1926 = vmatprep.subr.bf16.mxu0 0
        %1927 = vmatpush1.bf16.xpose.msra.mxu0 0
        %1928 = vmatprep.subr.bf16.mxu0 0
        %1929 = vmatpush1.bf16.xpose.msra.mxu0 0
        %1930 = vmatprep.mubr.bf16.mxu0 0
        %1931 = vmatmul.mubr.bf16.gmra.mrb[0].mxu0 %v1893
        %v1932 = vpop.f32.mrb[0].mxu0
        %v1933 = vadd.f32 0.0, %v1932
        %v1934 = vpop.f32.mrb[0].mxu0
        %v1935 = vpop.f32.mrb[0].mxu0
        %v1936 = vadd.f32 0.0, %v1935
        %v1937 = vpop.f32.mrb[0].mxu0
        %1938 = vdwg.mxu0
        %1939 = vrot.lane.b32.xlu0 %v612, 64
        %v1940 = vpop.permute.xlu0 %1939
        %1941 = vrot.lane.b32.xlu0 %v613, 64
        %v1942 = vpop.permute.xlu0 %1941
        %v1944 = vsel %vm616, %v1940, 0
        %v1947 = vsel %vm616, %v1942, 0
        %1949 = vmatprep.subr.bf16.mxu0 0
        %1950 = vmatpush1.bf16.xpose.msra.mxu0 %v1947
        %1951 = vmatprep.subr.bf16.mxu0 0
        %1952 = vmatpush1.bf16.xpose.msra.mxu0 0
        %1953 = vmatprep.subr.bf16.mxu0 0
        %1954 = vmatpush1.bf16.xpose.msra.mxu0 0
        %1955 = vmatprep.subr.bf16.mxu0 0
        %1956 = vmatpush1.bf16.xpose.msra.mxu0 0
        %1957 = vmatprep.subr.bf16.mxu0 0
        %1958 = vmatpush1.bf16.xpose.msra.mxu0 0
        %1959 = vmatprep.subr.bf16.mxu0 0
        %1960 = vmatpush1.bf16.xpose.msra.mxu0 0
        %1961 = vmatprep.subr.bf16.mxu0 0
        %1962 = vmatpush1.bf16.xpose.msra.mxu0 0
        %1963 = vmatprep.subr.bf16.mxu0 0
        %1964 = vmatpush1.bf16.xpose.msra.mxu0 0
        %1965 = vmatprep.subr.bf16.mxu0 0
        %1966 = vmatpush1.bf16.xpose.msra.mxu0 0
        %1967 = vmatprep.subr.bf16.mxu0 0
        %1968 = vmatpush1.bf16.xpose.msra.mxu0 0
        %1969 = vmatprep.subr.bf16.mxu0 0
        %1970 = vmatpush1.bf16.xpose.msra.mxu0 0
        %1971 = vmatprep.subr.bf16.mxu0 0
        %1972 = vmatpush1.bf16.xpose.msra.mxu0 0
        %1973 = vmatprep.subr.bf16.mxu0 0
        %1974 = vmatpush1.bf16.xpose.msra.mxu0 0
        %1975 = vmatprep.subr.bf16.mxu0 0
        %1976 = vmatpush1.bf16.xpose.msra.mxu0 0
        %1977 = vmatprep.subr.bf16.mxu0 0
        %1978 = vmatpush1.bf16.xpose.msra.mxu0 0
        %1979 = vmatprep.subr.bf16.mxu0 0
        %1980 = vmatpush1.bf16.xpose.msra.mxu0 0
        %1981 = vmatprep.mubr.bf16.mxu0 0
        %1982 = vmatmul.mubr.bf16.gmra.mrb[0].mxu0 %v1944
        %v1983 = vpop.f32.mrb[0].mxu0
        %v1984 = vadd.f32 0.0, %v1983
        %v1985 = vpop.f32.mrb[0].mxu0
        %v1986 = vpop.f32.mrb[0].mxu0
        %v1987 = vadd.f32 0.0, %v1986
        %v1988 = vpop.f32.mrb[0].mxu0
        %1989 = vdwg.mxu0
        %v1990 = vsel %vm805, %v1831, -inf
        %1991 = vmax.xlane.f32.xlu0 %v1990
        %v1992 = vpop.xlane.xlu0 %1991
        %v1993 = vsel %vm805, %v1834, -inf
        %1994 = vmax.xlane.f32.xlu0 %v1993
        %v1995 = vpop.xlane.xlu0 %1994
        %v1996 = vsel %vm805, %v1882, -inf
        %1997 = vmax.xlane.f32.xlu0 %v1996
        %v1998 = vpop.xlane.xlu0 %1997
        %v1999 = vsel %vm805, %v1885, -inf
        %2000 = vmax.xlane.f32.xlu0 %v1999
        %v2001 = vpop.xlane.xlu0 %2000
        %v2002 = vsel %vm805, %v1933, -inf
        %2003 = vmax.xlane.f32.xlu0 %v2002
        %v2004 = vpop.xlane.xlu0 %2003
        %v2005 = vsel %vm805, %v1936, -inf
        %2006 = vmax.xlane.f32.xlu0 %v2005
        %v2007 = vpop.xlane.xlu0 %2006
        %v2008 = vsel %vm805, %v1984, -inf
        %2009 = vmax.xlane.f32.xlu0 %v2008
        %v2010 = vpop.xlane.xlu0 %2009
        %v2011 = vsel %vm805, %v1987, -inf
        %2012 = vmax.xlane.f32.xlu0 %v2011
        %v2013 = vpop.xlane.xlu0 %2012
        %v2014 = vsub.f32 %v1831, %v1992
        %v2015 = vsub.f32 %v1834, %v1995
        %v2016 = vsub.f32 %v1882, %v1998
        %v2017 = vsub.f32 %v1885, %v2001
        %v2018 = vsub.f32 %v1933, %v2004
        %v2019 = vsub.f32 %v1936, %v2007
        %v2020 = vsub.f32 %v1984, %v2010
        %v2021 = vsub.f32 %v1987, %v2013
        %v2022 = vmul.f32 %v2014, 1.442695
        %v2023 = vpow.pop %v2022
        %v2024 = vmul.f32 %v2015, 1.442695
        %v2025 = vpow.pop %v2024
        %v2026 = vmul.f32 %v2016, 1.442695
        %v2027 = vpow.pop %v2026
        %v2028 = vmul.f32 %v2017, 1.442695
        %v2029 = vpow.pop %v2028
        %v2030 = vmul.f32 %v2018, 1.442695
        %v2031 = vpow.pop %v2030
        %v2032 = vmul.f32 %v2019, 1.442695
        %v2033 = vpow.pop %v2032
        %v2034 = vmul.f32 %v2020, 1.442695
        %v2035 = vpow.pop %v2034
        %v2036 = vmul.f32 %v2021, 1.442695
        %v2037 = vpow.pop %v2036
        %v2038 = vsel %vm805, %v2023, 0.0
        %2039 = vadd.xlane.f32.xlu0 %v2038
        %v2040 = vpop.xlane.xlu0 %2039
        %v2041 = vsel %vm805, %v2025, 0.0
        %2042 = vadd.xlane.f32.xlu0 %v2041
        %v2043 = vpop.xlane.xlu0 %2042
        %v2044 = vsel %vm805, %v2027, 0.0
        %2045 = vadd.xlane.f32.xlu0 %v2044
        %v2046 = vpop.xlane.xlu0 %2045
        %v2047 = vsel %vm805, %v2029, 0.0
        %2048 = vadd.xlane.f32.xlu0 %v2047
        %v2049 = vpop.xlane.xlu0 %2048
        %v2050 = vsel %vm805, %v2031, 0.0
        %2051 = vadd.xlane.f32.xlu0 %v2050
        %v2052 = vpop.xlane.xlu0 %2051
        %v2053 = vsel %vm805, %v2033, 0.0
        %2054 = vadd.xlane.f32.xlu0 %v2053
        %v2055 = vpop.xlane.xlu0 %2054
        %v2056 = vsel %vm805, %v2035, 0.0
        %2057 = vadd.xlane.f32.xlu0 %v2056
        %v2058 = vpop.xlane.xlu0 %2057
        %v2059 = vsel %vm805, %v2037, 0.0
        %2060 = vadd.xlane.f32.xlu0 %v2059
        %v2061 = vpop.xlane.xlu0 %2060
        %v2062 = vrcp.pop %v2040
        %v2063 = vrcp.pop %v2043
        %v2064 = vrcp.pop %v2046
        %v2065 = vrcp.pop %v2049
        %v2066 = vrcp.pop %v2052
        %v2067 = vrcp.pop %v2055
        %v2068 = vrcp.pop %v2058
        %v2069 = vrcp.pop %v2061
        %v2070 = vmul.f32 %v2023, %v2062
        %v2071 = vmul.f32 %v2025, %v2063
        %v2072 = vmul.f32 %v2027, %v2064
        %v2073 = vmul.f32 %v2029, %v2065
        %v2074 = vmul.f32 %v2031, %v2066
        %v2075 = vmul.f32 %v2033, %v2067
        %v2076 = vmul.f32 %v2035, %v2068
        %v2077 = vmul.f32 %v2037, %v2069
        %v2078 = vpack.c.bf16 %v2071, %v2070
        %v2079 = vpack.c.bf16 %v2073, %v2072
        %v2080 = vpack.c.bf16 %v2075, %v2074
        %v2081 = vpack.c.bf16 %v2077, %v2076
        %2082 = vrot.lane.b32.xlu0 %v605, 64
        %v2083 = vpop.permute.xlu0 %2082
        %v2086 = vsel %vm805, %v2078, 0
        %2088 = vmatprep.subr.bf16.mxu0 0
        %2089 = vmatpush1.bf16.msra.mxu0 %v2083
        %2090 = vmatprep.subr.bf16.mxu0 0
        %2091 = vmatpush1.bf16.msra.mxu0 0
        %2092 = vmatprep.subr.bf16.mxu0 0
        %2093 = vmatpush1.bf16.msra.mxu0 0
        %2094 = vmatprep.subr.bf16.mxu0 0
        %2095 = vmatpush1.bf16.msra.mxu0 0
        %2096 = vmatprep.subr.bf16.mxu0 0
        %2097 = vmatpush1.bf16.msra.mxu0 0
        %2098 = vmatprep.subr.bf16.mxu0 0
        %2099 = vmatpush1.bf16.msra.mxu0 0
        %2100 = vmatprep.subr.bf16.mxu0 0
        %2101 = vmatpush1.bf16.msra.mxu0 0
        %2102 = vmatprep.subr.bf16.mxu0 0
        %2103 = vmatpush1.bf16.msra.mxu0 0
        %2104 = vmatprep.subr.bf16.mxu0 0
        %2105 = vmatpush1.bf16.msra.mxu0 0
        %2106 = vmatprep.subr.bf16.mxu0 0
        %2107 = vmatpush1.bf16.msra.mxu0 0
        %2108 = vmatprep.subr.bf16.mxu0 0
        %2109 = vmatpush1.bf16.msra.mxu0 0
        %2110 = vmatprep.subr.bf16.mxu0 0
        %2111 = vmatpush1.bf16.msra.mxu0 0
        %2112 = vmatprep.subr.bf16.mxu0 0
        %2113 = vmatpush1.bf16.msra.mxu0 0
        %2114 = vmatprep.subr.bf16.mxu0 0
        %2115 = vmatpush1.bf16.msra.mxu0 0
        %2116 = vmatprep.subr.bf16.mxu0 0
        %2117 = vmatpush1.bf16.msra.mxu0 0
        %2118 = vmatprep.subr.bf16.mxu0 0
        %2119 = vmatpush1.bf16.msra.mxu0 0
        %2120 = vmatprep.mubr.bf16.mxu0 0
        %2121 = vmatmul.mubr.bf16.gmra.mrb[0].mxu0 %v2086
        %v2122 = vpop.f32.mrb[0].mxu0
        %v2123 = vadd.f32 0.0, %v2122
        %v2124 = vpop.f32.mrb[0].mxu0
        %v2125 = vpop.f32.mrb[0].mxu0
        %v2126 = vadd.f32 0.0, %v2125
        %v2127 = vpop.f32.mrb[0].mxu0
        %2128 = vdwg.mxu0
        %2129 = vrot.lane.b32.xlu0 %v608, 64
        %v2130 = vpop.permute.xlu0 %2129
        %v2133 = vsel %vm805, %v2079, 0
        %2135 = vmatprep.subr.bf16.mxu0 0
        %2136 = vmatpush1.bf16.msra.mxu0 %v2130
        %2137 = vmatprep.subr.bf16.mxu0 0
        %2138 = vmatpush1.bf16.msra.mxu0 0
        %2139 = vmatprep.subr.bf16.mxu0 0
        %2140 = vmatpush1.bf16.msra.mxu0 0
        %2141 = vmatprep.subr.bf16.mxu0 0
        %2142 = vmatpush1.bf16.msra.mxu0 0
        %2143 = vmatprep.subr.bf16.mxu0 0
        %2144 = vmatpush1.bf16.msra.mxu0 0
        %2145 = vmatprep.subr.bf16.mxu0 0
        %2146 = vmatpush1.bf16.msra.mxu0 0
        %2147 = vmatprep.subr.bf16.mxu0 0
        %2148 = vmatpush1.bf16.msra.mxu0 0
        %2149 = vmatprep.subr.bf16.mxu0 0
        %2150 = vmatpush1.bf16.msra.mxu0 0
        %2151 = vmatprep.subr.bf16.mxu0 0
        %2152 = vmatpush1.bf16.msra.mxu0 0
        %2153 = vmatprep.subr.bf16.mxu0 0
        %2154 = vmatpush1.bf16.msra.mxu0 0
        %2155 = vmatprep.subr.bf16.mxu0 0
        %2156 = vmatpush1.bf16.msra.mxu0 0
        %2157 = vmatprep.subr.bf16.mxu0 0
        %2158 = vmatpush1.bf16.msra.mxu0 0
        %2159 = vmatprep.subr.bf16.mxu0 0
        %2160 = vmatpush1.bf16.msra.mxu0 0
        %2161 = vmatprep.subr.bf16.mxu0 0
        %2162 = vmatpush1.bf16.msra.mxu0 0
        %2163 = vmatprep.subr.bf16.mxu0 0
        %2164 = vmatpush1.bf16.msra.mxu0 0
        %2165 = vmatprep.subr.bf16.mxu0 0
        %2166 = vmatpush1.bf16.msra.mxu0 0
        %2167 = vmatprep.mubr.bf16.mxu0 0
        %2168 = vmatmul.mubr.bf16.gmra.mrb[0].mxu0 %v2133
        %v2169 = vpop.f32.mrb[0].mxu0
        %v2170 = vadd.f32 0.0, %v2169
        %v2171 = vpop.f32.mrb[0].mxu0
        %v2172 = vpop.f32.mrb[0].mxu0
        %v2173 = vadd.f32 0.0, %v2172
        %v2174 = vpop.f32.mrb[0].mxu0
        %2175 = vdwg.mxu0
        %2176 = vrot.lane.b32.xlu0 %v611, 64
        %v2177 = vpop.permute.xlu0 %2176
        %v2180 = vsel %vm805, %v2080, 0
        %2182 = vmatprep.subr.bf16.mxu0 0
        %2183 = vmatpush1.bf16.msra.mxu0 %v2177
        %2184 = vmatprep.subr.bf16.mxu0 0
        %2185 = vmatpush1.bf16.msra.mxu0 0
        %2186 = vmatprep.subr.bf16.mxu0 0
        %2187 = vmatpush1.bf16.msra.mxu0 0
        %2188 = vmatprep.subr.bf16.mxu0 0
        %2189 = vmatpush1.bf16.msra.mxu0 0
        %2190 = vmatprep.subr.bf16.mxu0 0
        %2191 = vmatpush1.bf16.msra.mxu0 0
        %2192 = vmatprep.subr.bf16.mxu0 0
        %2193 = vmatpush1.bf16.msra.mxu0 0
        %2194 = vmatprep.subr.bf16.mxu0 0
        %2195 = vmatpush1.bf16.msra.mxu0 0
        %2196 = vmatprep.subr.bf16.mxu0 0
        %2197 = vmatpush1.bf16.msra.mxu0 0
        %2198 = vmatprep.subr.bf16.mxu0 0
        %2199 = vmatpush1.bf16.msra.mxu0 0
        %2200 = vmatprep.subr.bf16.mxu0 0
        %2201 = vmatpush1.bf16.msra.mxu0 0
        %2202 = vmatprep.subr.bf16.mxu0 0
        %2203 = vmatpush1.bf16.msra.mxu0 0
        %2204 = vmatprep.subr.bf16.mxu0 0
        %2205 = vmatpush1.bf16.msra.mxu0 0
        %2206 = vmatprep.subr.bf16.mxu0 0
        %2207 = vmatpush1.bf16.msra.mxu0 0
        %2208 = vmatprep.subr.bf16.mxu0 0
        %2209 = vmatpush1.bf16.msra.mxu0 0
        %2210 = vmatprep.subr.bf16.mxu0 0
        %2211 = vmatpush1.bf16.msra.mxu0 0
        %2212 = vmatprep.subr.bf16.mxu0 0
        %2213 = vmatpush1.bf16.msra.mxu0 0
        %2214 = vmatprep.mubr.bf16.mxu0 0
        %2215 = vmatmul.mubr.bf16.gmra.mrb[0].mxu0 %v2180
        %v2216 = vpop.f32.mrb[0].mxu0
        %v2217 = vadd.f32 0.0, %v2216
        %v2218 = vpop.f32.mrb[0].mxu0
        %v2219 = vpop.f32.mrb[0].mxu0
        %v2220 = vadd.f32 0.0, %v2219
        %v2221 = vpop.f32.mrb[0].mxu0
        %2222 = vdwg.mxu0
        %2223 = vrot.lane.b32.xlu0 %v614, 64
        %v2224 = vpop.permute.xlu0 %2223
        %v2227 = vsel %vm805, %v2081, 0
        %2229 = vmatprep.subr.bf16.mxu0 0
        %2230 = vmatpush1.bf16.msra.mxu0 %v2224
        %2231 = vmatprep.subr.bf16.mxu0 0
        %2232 = vmatpush1.bf16.msra.mxu0 0
        %2233 = vmatprep.subr.bf16.mxu0 0
        %2234 = vmatpush1.bf16.msra.mxu0 0
        %2235 = vmatprep.subr.bf16.mxu0 0
        %2236 = vmatpush1.bf16.msra.mxu0 0
        %2237 = vmatprep.subr.bf16.mxu0 0
        %2238 = vmatpush1.bf16.msra.mxu0 0
        %2239 = vmatprep.subr.bf16.mxu0 0
        %2240 = vmatpush1.bf16.msra.mxu0 0
        %2241 = vmatprep.subr.bf16.mxu0 0
        %2242 = vmatpush1.bf16.msra.mxu0 0
        %2243 = vmatprep.subr.bf16.mxu0 0
        %2244 = vmatpush1.bf16.msra.mxu0 0
        %2245 = vmatprep.subr.bf16.mxu0 0
        %2246 = vmatpush1.bf16.msra.mxu0 0
        %2247 = vmatprep.subr.bf16.mxu0 0
        %2248 = vmatpush1.bf16.msra.mxu0 0
        %2249 = vmatprep.subr.bf16.mxu0 0
        %2250 = vmatpush1.bf16.msra.mxu0 0
        %2251 = vmatprep.subr.bf16.mxu0 0
        %2252 = vmatpush1.bf16.msra.mxu0 0
        %2253 = vmatprep.subr.bf16.mxu0 0
        %2254 = vmatpush1.bf16.msra.mxu0 0
        %2255 = vmatprep.subr.bf16.mxu0 0
        %2256 = vmatpush1.bf16.msra.mxu0 0
        %2257 = vmatprep.subr.bf16.mxu0 0
        %2258 = vmatpush1.bf16.msra.mxu0 0
        %2259 = vmatprep.subr.bf16.mxu0 0
        %2260 = vmatpush1.bf16.msra.mxu0 0
        %2261 = vmatprep.mubr.bf16.mxu0 0
        %2262 = vmatmul.mubr.bf16.gmra.mrb[0].mxu0 %v2227
        %v2263 = vpop.f32.mrb[0].mxu0
        %v2264 = vadd.f32 0.0, %v2263
        %v2265 = vpop.f32.mrb[0].mxu0
        %v2266 = vpop.f32.mrb[0].mxu0
        %v2267 = vadd.f32 0.0, %v2266
        %v2268 = vpop.f32.mrb[0].mxu0
        %2269 = vdwg.mxu0
        %v2270 = vpack.c.bf16 %v2126, %v2123
        %v2271 = vpack.c.bf16 %v2173, %v2170
        %v2272 = vpack.c.bf16 %v2220, %v2217
        %v2273 = vpack.c.bf16 %v2267, %v2264
        %v2274 = vld [vmem:[#allocation7 + $0x20] sm:$0xf]
        %v2275 = vld [vmem:[#allocation7 + $0x24] sm:$0xf]
        %v2276 = vld [vmem:[#allocation7 + $0x28] sm:$0xf]
        %v2277 = vld [vmem:[#allocation7 + $0x2c] sm:$0xf]
        %v2282 = vunpack.c.l.b16 %v2274
        %v2283 = vunpack.c.l.b16 %v2275
        %v2284 = vunpack.c.l.b16 %v2276
        %v2285 = vunpack.c.l.b16 %v2277
        %v2286 = vpack.c.b16 %v2283, %v2282
        %v2287 = vpack.c.b16 %v2285, %v2284
        %v2291 = vsel %vm616, %v2270, 0
        %v2294 = vsel %vm616, %v2271, 0
        %v2297 = vsel %vm616, %v2272, 0
        %v2300 = vsel %vm616, %v2273, 0
        %2302 = vmatprep.subr.bf16.mxu0 0
        %2303 = vmatpush1.bf16.msra.mxu0 %v2286
        %2304 = vmatprep.subr.bf16.mxu0 0
        %2305 = vmatpush1.bf16.msra.mxu0 %v2287
        %2306 = vmatprep.subr.bf16.mxu0 0
        %2307 = vmatpush1.bf16.msra.mxu0 0
        %2308 = vmatprep.subr.bf16.mxu0 0
        %2309 = vmatpush1.bf16.msra.mxu0 0
        %2310 = vmatprep.subr.bf16.mxu0 0
        %2311 = vmatpush1.bf16.msra.mxu0 0
        %2312 = vmatprep.subr.bf16.mxu0 0
        %2313 = vmatpush1.bf16.msra.mxu0 0
        %2314 = vmatprep.subr.bf16.mxu0 0
        %2315 = vmatpush1.bf16.msra.mxu0 0
        %2316 = vmatprep.subr.bf16.mxu0 0
        %2317 = vmatpush1.bf16.msra.mxu0 0
        %2318 = vmatprep.subr.bf16.mxu0 0
        %2319 = vmatpush1.bf16.msra.mxu0 0
        %2320 = vmatprep.subr.bf16.mxu0 0
        %2321 = vmatpush1.bf16.msra.mxu0 0
        %2322 = vmatprep.subr.bf16.mxu0 0
        %2323 = vmatpush1.bf16.msra.mxu0 0
        %2324 = vmatprep.subr.bf16.mxu0 0
        %2325 = vmatpush1.bf16.msra.mxu0 0
        %2326 = vmatprep.subr.bf16.mxu0 0
        %2327 = vmatpush1.bf16.msra.mxu0 0
        %2328 = vmatprep.subr.bf16.mxu0 0
        %2329 = vmatpush1.bf16.msra.mxu0 0
        %2330 = vmatprep.subr.bf16.mxu0 0
        %2331 = vmatpush1.bf16.msra.mxu0 0
        %2332 = vmatprep.subr.bf16.mxu0 0
        %2333 = vmatpush1.bf16.msra.mxu0 0
        %2334 = vmatprep.mubr.bf16.mxu0 0
        %2335 = vmatmul.mubr.bf16.gmra.mrb[0].mxu0 %v2291
        %v2336 = vpop.f32.mrb[0].mxu0
        %v2337 = vadd.f32 0.0, %v2336
        %v2338 = vpop.f32.mrb[0].mxu0
        %v2339 = vpop.f32.mrb[0].mxu0
        %v2340 = vadd.f32 0.0, %v2339
        %v2341 = vpop.f32.mrb[0].mxu0
        %2342 = vmatprep.mubr.bf16.mxu0 0
        %2343 = vmatmul.mubr.bf16.gmra.mrb[0].mxu0 %v2294
        %v2344 = vpop.f32.mrb[0].mxu0
        %v2345 = vadd.f32 0.0, %v2344
        %v2346 = vpop.f32.mrb[0].mxu0
        %v2347 = vpop.f32.mrb[0].mxu0
        %v2348 = vadd.f32 0.0, %v2347
        %v2349 = vpop.f32.mrb[0].mxu0
        %2350 = vmatprep.mubr.bf16.mxu0 0
        %2351 = vmatmul.mubr.bf16.gmra.mrb[0].mxu0 %v2297
        %v2352 = vpop.f32.mrb[0].mxu0
        %v2353 = vadd.f32 0.0, %v2352
        %v2354 = vpop.f32.mrb[0].mxu0
        %v2355 = vpop.f32.mrb[0].mxu0
        %v2356 = vadd.f32 0.0, %v2355
        %v2357 = vpop.f32.mrb[0].mxu0
        %2358 = vmatprep.mubr.bf16.mxu0 0
        %2359 = vmatmul.mubr.bf16.gmra.mrb[0].mxu0 %v2300
        %v2360 = vpop.f32.mrb[0].mxu0
        %v2361 = vadd.f32 0.0, %v2360
        %v2362 = vpop.f32.mrb[0].mxu0
        %v2363 = vpop.f32.mrb[0].mxu0
        %v2364 = vadd.f32 0.0, %v2363
        %v2365 = vpop.f32.mrb[0].mxu0
        %2366 = vdwg.mxu0
        %v2367 = vadd.f32 %v1778, %v2337
        %v2368 = vadd.f32 %v1779, %v2340
        %v2369 = vadd.f32 %v1780, %v2345
        %v2370 = vadd.f32 %v1781, %v2348
        %v2371 = vadd.f32 %v1782, %v2353
        %v2372 = vadd.f32 %v1783, %v2356
        %v2373 = vadd.f32 %v1784, %v2361
        %v2374 = vadd.f32 %v1785, %v2364
        %2375 = vrot.lane.b32.xlu0 %v603, 32
        %v2376 = vpop.permute.xlu0 %2375
        %2377 = vrot.lane.b32.xlu0 %v604, 32
        %v2378 = vpop.permute.xlu0 %2377
        %v2380 = vsel %vm616, %v2376, 0
        %v2383 = vsel %vm616, %v2378, 0
        %2385 = vmatprep.subr.bf16.mxu0 0
        %2386 = vmatpush1.bf16.xpose.msra.mxu0 %v2383
        %2387 = vmatprep.subr.bf16.mxu0 0
        %2388 = vmatpush1.bf16.xpose.msra.mxu0 0
        %2389 = vmatprep.subr.bf16.mxu0 0
        %2390 = vmatpush1.bf16.xpose.msra.mxu0 0
        %2391 = vmatprep.subr.bf16.mxu0 0
        %2392 = vmatpush1.bf16.xpose.msra.mxu0 0
        %2393 = vmatprep.subr.bf16.mxu0 0
        %2394 = vmatpush1.bf16.xpose.msra.mxu0 0
        %2395 = vmatprep.subr.bf16.mxu0 0
        %2396 = vmatpush1.bf16.xpose.msra.mxu0 0
        %2397 = vmatprep.subr.bf16.mxu0 0
        %2398 = vmatpush1.bf16.xpose.msra.mxu0 0
        %2399 = vmatprep.subr.bf16.mxu0 0
        %2400 = vmatpush1.bf16.xpose.msra.mxu0 0
        %2401 = vmatprep.subr.bf16.mxu0 0
        %2402 = vmatpush1.bf16.xpose.msra.mxu0 0
        %2403 = vmatprep.subr.bf16.mxu0 0
        %2404 = vmatpush1.bf16.xpose.msra.mxu0 0
        %2405 = vmatprep.subr.bf16.mxu0 0
        %2406 = vmatpush1.bf16.xpose.msra.mxu0 0
        %2407 = vmatprep.subr.bf16.mxu0 0
        %2408 = vmatpush1.bf16.xpose.msra.mxu0 0
        %2409 = vmatprep.subr.bf16.mxu0 0
        %2410 = vmatpush1.bf16.xpose.msra.mxu0 0
        %2411 = vmatprep.subr.bf16.mxu0 0
        %2412 = vmatpush1.bf16.xpose.msra.mxu0 0
        %2413 = vmatprep.subr.bf16.mxu0 0
        %2414 = vmatpush1.bf16.xpose.msra.mxu0 0
        %2415 = vmatprep.subr.bf16.mxu0 0
        %2416 = vmatpush1.bf16.xpose.msra.mxu0 0
        %2417 = vmatprep.mubr.bf16.mxu0 0
        %2418 = vmatmul.mubr.bf16.gmra.mrb[0].mxu0 %v2380
        %v2419 = vpop.f32.mrb[0].mxu0
        %v2420 = vadd.f32 0.0, %v2419
        %v2421 = vpop.f32.mrb[0].mxu0
        %v2422 = vpop.f32.mrb[0].mxu0
        %v2423 = vadd.f32 0.0, %v2422
        %v2424 = vpop.f32.mrb[0].mxu0
        %2425 = vdwg.mxu0
        %2426 = vrot.lane.b32.xlu0 %v606, 32
        %v2427 = vpop.permute.xlu0 %2426
        %2428 = vrot.lane.b32.xlu0 %v607, 32
        %v2429 = vpop.permute.xlu0 %2428
        %v2431 = vsel %vm616, %v2427, 0
        %v2434 = vsel %vm616, %v2429, 0
        %2436 = vmatprep.subr.bf16.mxu0 0
        %2437 = vmatpush1.bf16.xpose.msra.mxu0 %v2434
        %2438 = vmatprep.subr.bf16.mxu0 0
        %2439 = vmatpush1.bf16.xpose.msra.mxu0 0
        %2440 = vmatprep.subr.bf16.mxu0 0
        %2441 = vmatpush1.bf16.xpose.msra.mxu0 0
        %2442 = vmatprep.subr.bf16.mxu0 0
        %2443 = vmatpush1.bf16.xpose.msra.mxu0 0
        %2444 = vmatprep.subr.bf16.mxu0 0
        %2445 = vmatpush1.bf16.xpose.msra.mxu0 0
        %2446 = vmatprep.subr.bf16.mxu0 0
        %2447 = vmatpush1.bf16.xpose.msra.mxu0 0
        %2448 = vmatprep.subr.bf16.mxu0 0
        %2449 = vmatpush1.bf16.xpose.msra.mxu0 0
        %2450 = vmatprep.subr.bf16.mxu0 0
        %2451 = vmatpush1.bf16.xpose.msra.mxu0 0
        %2452 = vmatprep.subr.bf16.mxu0 0
        %2453 = vmatpush1.bf16.xpose.msra.mxu0 0
        %2454 = vmatprep.subr.bf16.mxu0 0
        %2455 = vmatpush1.bf16.xpose.msra.mxu0 0
        %2456 = vmatprep.subr.bf16.mxu0 0
        %2457 = vmatpush1.bf16.xpose.msra.mxu0 0
        %2458 = vmatprep.subr.bf16.mxu0 0
        %2459 = vmatpush1.bf16.xpose.msra.mxu0 0
        %2460 = vmatprep.subr.bf16.mxu0 0
        %2461 = vmatpush1.bf16.xpose.msra.mxu0 0
        %2462 = vmatprep.subr.bf16.mxu0 0
        %2463 = vmatpush1.bf16.xpose.msra.mxu0 0
        %2464 = vmatprep.subr.bf16.mxu0 0
        %2465 = vmatpush1.bf16.xpose.msra.mxu0 0
        %2466 = vmatprep.subr.bf16.mxu0 0
        %2467 = vmatpush1.bf16.xpose.msra.mxu0 0
        %2468 = vmatprep.mubr.bf16.mxu0 0
        %2469 = vmatmul.mubr.bf16.gmra.mrb[0].mxu0 %v2431
        %v2470 = vpop.f32.mrb[0].mxu0
        %v2471 = vadd.f32 0.0, %v2470
        %v2472 = vpop.f32.mrb[0].mxu0
        %v2473 = vpop.f32.mrb[0].mxu0
        %v2474 = vadd.f32 0.0, %v2473
        %v2475 = vpop.f32.mrb[0].mxu0
        %2476 = vdwg.mxu0
        %2477 = vrot.lane.b32.xlu0 %v609, 32
        %v2478 = vpop.permute.xlu0 %2477
        %2479 = vrot.lane.b32.xlu0 %v610, 32
        %v2480 = vpop.permute.xlu0 %2479
        %v2482 = vsel %vm616, %v2478, 0
        %v2485 = vsel %vm616, %v2480, 0
        %2487 = vmatprep.subr.bf16.mxu0 0
        %2488 = vmatpush1.bf16.xpose.msra.mxu0 %v2485
        %2489 = vmatprep.subr.bf16.mxu0 0
        %2490 = vmatpush1.bf16.xpose.msra.mxu0 0
        %2491 = vmatprep.subr.bf16.mxu0 0
        %2492 = vmatpush1.bf16.xpose.msra.mxu0 0
        %2493 = vmatprep.subr.bf16.mxu0 0
        %2494 = vmatpush1.bf16.xpose.msra.mxu0 0
        %2495 = vmatprep.subr.bf16.mxu0 0
        %2496 = vmatpush1.bf16.xpose.msra.mxu0 0
        %2497 = vmatprep.subr.bf16.mxu0 0
        %2498 = vmatpush1.bf16.xpose.msra.mxu0 0
        %2499 = vmatprep.subr.bf16.mxu0 0
        %2500 = vmatpush1.bf16.xpose.msra.mxu0 0
        %2501 = vmatprep.subr.bf16.mxu0 0
        %2502 = vmatpush1.bf16.xpose.msra.mxu0 0
        %2503 = vmatprep.subr.bf16.mxu0 0
        %2504 = vmatpush1.bf16.xpose.msra.mxu0 0
        %2505 = vmatprep.subr.bf16.mxu0 0
        %2506 = vmatpush1.bf16.xpose.msra.mxu0 0
        %2507 = vmatprep.subr.bf16.mxu0 0
        %2508 = vmatpush1.bf16.xpose.msra.mxu0 0
        %2509 = vmatprep.subr.bf16.mxu0 0
        %2510 = vmatpush1.bf16.xpose.msra.mxu0 0
        %2511 = vmatprep.subr.bf16.mxu0 0
        %2512 = vmatpush1.bf16.xpose.msra.mxu0 0
        %2513 = vmatprep.subr.bf16.mxu0 0
        %2514 = vmatpush1.bf16.xpose.msra.mxu0 0
        %2515 = vmatprep.subr.bf16.mxu0 0
        %2516 = vmatpush1.bf16.xpose.msra.mxu0 0
        %2517 = vmatprep.subr.bf16.mxu0 0
        %2518 = vmatpush1.bf16.xpose.msra.mxu0 0
        %2519 = vmatprep.mubr.bf16.mxu0 0
        %2520 = vmatmul.mubr.bf16.gmra.mrb[0].mxu0 %v2482
        %v2521 = vpop.f32.mrb[0].mxu0
        %v2522 = vadd.f32 0.0, %v2521
        %v2523 = vpop.f32.mrb[0].mxu0
        %v2524 = vpop.f32.mrb[0].mxu0
        %v2525 = vadd.f32 0.0, %v2524
        %v2526 = vpop.f32.mrb[0].mxu0
        %2527 = vdwg.mxu0
        %2528 = vrot.lane.b32.xlu0 %v612, 32
        %v2529 = vpop.permute.xlu0 %2528
        %2530 = vrot.lane.b32.xlu0 %v613, 32
        %v2531 = vpop.permute.xlu0 %2530
        %v2533 = vsel %vm616, %v2529, 0
        %v2536 = vsel %vm616, %v2531, 0
        %2538 = vmatprep.subr.bf16.mxu0 0
        %2539 = vmatpush1.bf16.xpose.msra.mxu0 %v2536
        %2540 = vmatprep.subr.bf16.mxu0 0
        %2541 = vmatpush1.bf16.xpose.msra.mxu0 0
        %2542 = vmatprep.subr.bf16.mxu0 0
        %2543 = vmatpush1.bf16.xpose.msra.mxu0 0
        %2544 = vmatprep.subr.bf16.mxu0 0
        %2545 = vmatpush1.bf16.xpose.msra.mxu0 0
        %2546 = vmatprep.subr.bf16.mxu0 0
        %2547 = vmatpush1.bf16.xpose.msra.mxu0 0
        %2548 = vmatprep.subr.bf16.mxu0 0
        %2549 = vmatpush1.bf16.xpose.msra.mxu0 0
        %2550 = vmatprep.subr.bf16.mxu0 0
        %2551 = vmatpush1.bf16.xpose.msra.mxu0 0
        %2552 = vmatprep.subr.bf16.mxu0 0
        %2553 = vmatpush1.bf16.xpose.msra.mxu0 0
        %2554 = vmatprep.subr.bf16.mxu0 0
        %2555 = vmatpush1.bf16.xpose.msra.mxu0 0
        %2556 = vmatprep.subr.bf16.mxu0 0
        %2557 = vmatpush1.bf16.xpose.msra.mxu0 0
        %2558 = vmatprep.subr.bf16.mxu0 0
        %2559 = vmatpush1.bf16.xpose.msra.mxu0 0
        %2560 = vmatprep.subr.bf16.mxu0 0
        %2561 = vmatpush1.bf16.xpose.msra.mxu0 0
        %2562 = vmatprep.subr.bf16.mxu0 0
        %2563 = vmatpush1.bf16.xpose.msra.mxu0 0
        %2564 = vmatprep.subr.bf16.mxu0 0
        %2565 = vmatpush1.bf16.xpose.msra.mxu0 0
        %2566 = vmatprep.subr.bf16.mxu0 0
        %2567 = vmatpush1.bf16.xpose.msra.mxu0 0
        %2568 = vmatprep.subr.bf16.mxu0 0
        %2569 = vmatpush1.bf16.xpose.msra.mxu0 0
        %2570 = vmatprep.mubr.bf16.mxu0 0
        %2571 = vmatmul.mubr.bf16.gmra.mrb[0].mxu0 %v2533
        %v2572 = vpop.f32.mrb[0].mxu0
        %v2573 = vadd.f32 0.0, %v2572
        %v2574 = vpop.f32.mrb[0].mxu0
        %v2575 = vpop.f32.mrb[0].mxu0
        %v2576 = vadd.f32 0.0, %v2575
        %v2577 = vpop.f32.mrb[0].mxu0
        %2578 = vdwg.mxu0
        %v2579 = vsel %vm805, %v2420, -inf
        %2580 = vmax.xlane.f32.xlu0 %v2579
        %v2581 = vpop.xlane.xlu0 %2580
        %v2582 = vsel %vm805, %v2423, -inf
        %2583 = vmax.xlane.f32.xlu0 %v2582
        %v2584 = vpop.xlane.xlu0 %2583
        %v2585 = vsel %vm805, %v2471, -inf
        %2586 = vmax.xlane.f32.xlu0 %v2585
        %v2587 = vpop.xlane.xlu0 %2586
        %v2588 = vsel %vm805, %v2474, -inf
        %2589 = vmax.xlane.f32.xlu0 %v2588
        %v2590 = vpop.xlane.xlu0 %2589
        %v2591 = vsel %vm805, %v2522, -inf
        %2592 = vmax.xlane.f32.xlu0 %v2591
        %v2593 = vpop.xlane.xlu0 %2592
        %v2594 = vsel %vm805, %v2525, -inf
        %2595 = vmax.xlane.f32.xlu0 %v2594
        %v2596 = vpop.xlane.xlu0 %2595
        %v2597 = vsel %vm805, %v2573, -inf
        %2598 = vmax.xlane.f32.xlu0 %v2597
        %v2599 = vpop.xlane.xlu0 %2598
        %v2600 = vsel %vm805, %v2576, -inf
        %2601 = vmax.xlane.f32.xlu0 %v2600
        %v2602 = vpop.xlane.xlu0 %2601
        %v2603 = vsub.f32 %v2420, %v2581
        %v2604 = vsub.f32 %v2423, %v2584
        %v2605 = vsub.f32 %v2471, %v2587
        %v2606 = vsub.f32 %v2474, %v2590
        %v2607 = vsub.f32 %v2522, %v2593
        %v2608 = vsub.f32 %v2525, %v2596
        %v2609 = vsub.f32 %v2573, %v2599
        %v2610 = vsub.f32 %v2576, %v2602
        %v2611 = vmul.f32 %v2603, 1.442695
        %v2612 = vpow.pop %v2611
        %v2613 = vmul.f32 %v2604, 1.442695
        %v2614 = vpow.pop %v2613
        %v2615 = vmul.f32 %v2605, 1.442695
        %v2616 = vpow.pop %v2615
        %v2617 = vmul.f32 %v2606, 1.442695
        %v2618 = vpow.pop %v2617
        %v2619 = vmul.f32 %v2607, 1.442695
        %v2620 = vpow.pop %v2619
        %v2621 = vmul.f32 %v2608, 1.442695
        %v2622 = vpow.pop %v2621
        %v2623 = vmul.f32 %v2609, 1.442695
        %v2624 = vpow.pop %v2623
        %v2625 = vmul.f32 %v2610, 1.442695
        %v2626 = vpow.pop %v2625
        %v2627 = vsel %vm805, %v2612, 0.0
        %2628 = vadd.xlane.f32.xlu0 %v2627
        %v2629 = vpop.xlane.xlu0 %2628
        %v2630 = vsel %vm805, %v2614, 0.0
        %2631 = vadd.xlane.f32.xlu0 %v2630
        %v2632 = vpop.xlane.xlu0 %2631
        %v2633 = vsel %vm805, %v2616, 0.0
        %2634 = vadd.xlane.f32.xlu0 %v2633
        %v2635 = vpop.xlane.xlu0 %2634
        %v2636 = vsel %vm805, %v2618, 0.0
        %2637 = vadd.xlane.f32.xlu0 %v2636
        %v2638 = vpop.xlane.xlu0 %2637
        %v2639 = vsel %vm805, %v2620, 0.0
        %2640 = vadd.xlane.f32.xlu0 %v2639
        %v2641 = vpop.xlane.xlu0 %2640
        %v2642 = vsel %vm805, %v2622, 0.0
        %2643 = vadd.xlane.f32.xlu0 %v2642
        %v2644 = vpop.xlane.xlu0 %2643
        %v2645 = vsel %vm805, %v2624, 0.0
        %2646 = vadd.xlane.f32.xlu0 %v2645
        %v2647 = vpop.xlane.xlu0 %2646
        %v2648 = vsel %vm805, %v2626, 0.0
        %2649 = vadd.xlane.f32.xlu0 %v2648
        %v2650 = vpop.xlane.xlu0 %2649
        %v2651 = vrcp.pop %v2629
        %v2652 = vrcp.pop %v2632
        %v2653 = vrcp.pop %v2635
        %v2654 = vrcp.pop %v2638
        %v2655 = vrcp.pop %v2641
        %v2656 = vrcp.pop %v2644
        %v2657 = vrcp.pop %v2647
        %v2658 = vrcp.pop %v2650
        %v2659 = vmul.f32 %v2612, %v2651
        %v2660 = vmul.f32 %v2614, %v2652
        %v2661 = vmul.f32 %v2616, %v2653
        %v2662 = vmul.f32 %v2618, %v2654
        %v2663 = vmul.f32 %v2620, %v2655
        %v2664 = vmul.f32 %v2622, %v2656
        %v2665 = vmul.f32 %v2624, %v2657
        %v2666 = vmul.f32 %v2626, %v2658
        %v2667 = vpack.c.bf16 %v2660, %v2659
        %v2668 = vpack.c.bf16 %v2662, %v2661
        %v2669 = vpack.c.bf16 %v2664, %v2663
        %v2670 = vpack.c.bf16 %v2666, %v2665
        %2671 = vrot.lane.b32.xlu0 %v605, 32
        %v2672 = vpop.permute.xlu0 %2671
        %v2675 = vsel %vm805, %v2667, 0
        %2677 = vmatprep.subr.bf16.mxu0 0
        %2678 = vmatpush1.bf16.msra.mxu0 %v2672
        %2679 = vmatprep.subr.bf16.mxu0 0
        %2680 = vmatpush1.bf16.msra.mxu0 0
        %2681 = vmatprep.subr.bf16.mxu0 0
        %2682 = vmatpush1.bf16.msra.mxu0 0
        %2683 = vmatprep.subr.bf16.mxu0 0
        %2684 = vmatpush1.bf16.msra.mxu0 0
        %2685 = vmatprep.subr.bf16.mxu0 0
        %2686 = vmatpush1.bf16.msra.mxu0 0
        %2687 = vmatprep.subr.bf16.mxu0 0
        %2688 = vmatpush1.bf16.msra.mxu0 0
        %2689 = vmatprep.subr.bf16.mxu0 0
        %2690 = vmatpush1.bf16.msra.mxu0 0
        %2691 = vmatprep.subr.bf16.mxu0 0
        %2692 = vmatpush1.bf16.msra.mxu0 0
        %2693 = vmatprep.subr.bf16.mxu0 0
        %2694 = vmatpush1.bf16.msra.mxu0 0
        %2695 = vmatprep.subr.bf16.mxu0 0
        %2696 = vmatpush1.bf16.msra.mxu0 0
        %2697 = vmatprep.subr.bf16.mxu0 0
        %2698 = vmatpush1.bf16.msra.mxu0 0
        %2699 = vmatprep.subr.bf16.mxu0 0
        %2700 = vmatpush1.bf16.msra.mxu0 0
        %2701 = vmatprep.subr.bf16.mxu0 0
        %2702 = vmatpush1.bf16.msra.mxu0 0
        %2703 = vmatprep.subr.bf16.mxu0 0
        %2704 = vmatpush1.bf16.msra.mxu0 0
        %2705 = vmatprep.subr.bf16.mxu0 0
        %2706 = vmatpush1.bf16.msra.mxu0 0
        %2707 = vmatprep.subr.bf16.mxu0 0
        %2708 = vmatpush1.bf16.msra.mxu0 0
        %2709 = vmatprep.mubr.bf16.mxu0 0
        %2710 = vmatmul.mubr.bf16.gmra.mrb[0].mxu0 %v2675
        %v2711 = vpop.f32.mrb[0].mxu0
        %v2712 = vadd.f32 0.0, %v2711
        %v2713 = vpop.f32.mrb[0].mxu0
        %v2714 = vpop.f32.mrb[0].mxu0
        %v2715 = vadd.f32 0.0, %v2714
        %v2716 = vpop.f32.mrb[0].mxu0
        %2717 = vdwg.mxu0
        %2718 = vrot.lane.b32.xlu0 %v608, 32
        %v2719 = vpop.permute.xlu0 %2718
        %v2722 = vsel %vm805, %v2668, 0
        %2724 = vmatprep.subr.bf16.mxu0 0
        %2725 = vmatpush1.bf16.msra.mxu0 %v2719
        %2726 = vmatprep.subr.bf16.mxu0 0
        %2727 = vmatpush1.bf16.msra.mxu0 0
        %2728 = vmatprep.subr.bf16.mxu0 0
        %2729 = vmatpush1.bf16.msra.mxu0 0
        %2730 = vmatprep.subr.bf16.mxu0 0
        %2731 = vmatpush1.bf16.msra.mxu0 0
        %2732 = vmatprep.subr.bf16.mxu0 0
        %2733 = vmatpush1.bf16.msra.mxu0 0
        %2734 = vmatprep.subr.bf16.mxu0 0
        %2735 = vmatpush1.bf16.msra.mxu0 0
        %2736 = vmatprep.subr.bf16.mxu0 0
        %2737 = vmatpush1.bf16.msra.mxu0 0
        %2738 = vmatprep.subr.bf16.mxu0 0
        %2739 = vmatpush1.bf16.msra.mxu0 0
        %2740 = vmatprep.subr.bf16.mxu0 0
        %2741 = vmatpush1.bf16.msra.mxu0 0
        %2742 = vmatprep.subr.bf16.mxu0 0
        %2743 = vmatpush1.bf16.msra.mxu0 0
        %2744 = vmatprep.subr.bf16.mxu0 0
        %2745 = vmatpush1.bf16.msra.mxu0 0
        %2746 = vmatprep.subr.bf16.mxu0 0
        %2747 = vmatpush1.bf16.msra.mxu0 0
        %2748 = vmatprep.subr.bf16.mxu0 0
        %2749 = vmatpush1.bf16.msra.mxu0 0
        %2750 = vmatprep.subr.bf16.mxu0 0
        %2751 = vmatpush1.bf16.msra.mxu0 0
        %2752 = vmatprep.subr.bf16.mxu0 0
        %2753 = vmatpush1.bf16.msra.mxu0 0
        %2754 = vmatprep.subr.bf16.mxu0 0
        %2755 = vmatpush1.bf16.msra.mxu0 0
        %2756 = vmatprep.mubr.bf16.mxu0 0
        %2757 = vmatmul.mubr.bf16.gmra.mrb[0].mxu0 %v2722
        %v2758 = vpop.f32.mrb[0].mxu0
        %v2759 = vadd.f32 0.0, %v2758
        %v2760 = vpop.f32.mrb[0].mxu0
        %v2761 = vpop.f32.mrb[0].mxu0
        %v2762 = vadd.f32 0.0, %v2761
        %v2763 = vpop.f32.mrb[0].mxu0
        %2764 = vdwg.mxu0
        %2765 = vrot.lane.b32.xlu0 %v611, 32
        %v2766 = vpop.permute.xlu0 %2765
        %v2769 = vsel %vm805, %v2669, 0
        %2771 = vmatprep.subr.bf16.mxu0 0
        %2772 = vmatpush1.bf16.msra.mxu0 %v2766
        %2773 = vmatprep.subr.bf16.mxu0 0
        %2774 = vmatpush1.bf16.msra.mxu0 0
        %2775 = vmatprep.subr.bf16.mxu0 0
        %2776 = vmatpush1.bf16.msra.mxu0 0
        %2777 = vmatprep.subr.bf16.mxu0 0
        %2778 = vmatpush1.bf16.msra.mxu0 0
        %2779 = vmatprep.subr.bf16.mxu0 0
        %2780 = vmatpush1.bf16.msra.mxu0 0
        %2781 = vmatprep.subr.bf16.mxu0 0
        %2782 = vmatpush1.bf16.msra.mxu0 0
        %2783 = vmatprep.subr.bf16.mxu0 0
        %2784 = vmatpush1.bf16.msra.mxu0 0
        %2785 = vmatprep.subr.bf16.mxu0 0
        %2786 = vmatpush1.bf16.msra.mxu0 0
        %2787 = vmatprep.subr.bf16.mxu0 0
        %2788 = vmatpush1.bf16.msra.mxu0 0
        %2789 = vmatprep.subr.bf16.mxu0 0
        %2790 = vmatpush1.bf16.msra.mxu0 0
        %2791 = vmatprep.subr.bf16.mxu0 0
        %2792 = vmatpush1.bf16.msra.mxu0 0
        %2793 = vmatprep.subr.bf16.mxu0 0
        %2794 = vmatpush1.bf16.msra.mxu0 0
        %2795 = vmatprep.subr.bf16.mxu0 0
        %2796 = vmatpush1.bf16.msra.mxu0 0
        %2797 = vmatprep.subr.bf16.mxu0 0
        %2798 = vmatpush1.bf16.msra.mxu0 0
        %2799 = vmatprep.subr.bf16.mxu0 0
        %2800 = vmatpush1.bf16.msra.mxu0 0
        %2801 = vmatprep.subr.bf16.mxu0 0
        %2802 = vmatpush1.bf16.msra.mxu0 0
        %2803 = vmatprep.mubr.bf16.mxu0 0
        %2804 = vmatmul.mubr.bf16.gmra.mrb[0].mxu0 %v2769
        %v2805 = vpop.f32.mrb[0].mxu0
        %v2806 = vadd.f32 0.0, %v2805
        %v2807 = vpop.f32.mrb[0].mxu0
        %v2808 = vpop.f32.mrb[0].mxu0
        %v2809 = vadd.f32 0.0, %v2808
        %v2810 = vpop.f32.mrb[0].mxu0
        %2811 = vdwg.mxu0
        %2812 = vrot.lane.b32.xlu0 %v614, 32
        %v2813 = vpop.permute.xlu0 %2812
        %v2816 = vsel %vm805, %v2670, 0
        %2818 = vmatprep.subr.bf16.mxu0 0
        %2819 = vmatpush1.bf16.msra.mxu0 %v2813
        %2820 = vmatprep.subr.bf16.mxu0 0
        %2821 = vmatpush1.bf16.msra.mxu0 0
        %2822 = vmatprep.subr.bf16.mxu0 0
        %2823 = vmatpush1.bf16.msra.mxu0 0
        %2824 = vmatprep.subr.bf16.mxu0 0
        %2825 = vmatpush1.bf16.msra.mxu0 0
        %2826 = vmatprep.subr.bf16.mxu0 0
        %2827 = vmatpush1.bf16.msra.mxu0 0
        %2828 = vmatprep.subr.bf16.mxu0 0
        %2829 = vmatpush1.bf16.msra.mxu0 0
        %2830 = vmatprep.subr.bf16.mxu0 0
        %2831 = vmatpush1.bf16.msra.mxu0 0
        %2832 = vmatprep.subr.bf16.mxu0 0
        %2833 = vmatpush1.bf16.msra.mxu0 0
        %2834 = vmatprep.subr.bf16.mxu0 0
        %2835 = vmatpush1.bf16.msra.mxu0 0
        %2836 = vmatprep.subr.bf16.mxu0 0
        %2837 = vmatpush1.bf16.msra.mxu0 0
        %2838 = vmatprep.subr.bf16.mxu0 0
        %2839 = vmatpush1.bf16.msra.mxu0 0
        %2840 = vmatprep.subr.bf16.mxu0 0
        %2841 = vmatpush1.bf16.msra.mxu0 0
        %2842 = vmatprep.subr.bf16.mxu0 0
        %2843 = vmatpush1.bf16.msra.mxu0 0
        %2844 = vmatprep.subr.bf16.mxu0 0
        %2845 = vmatpush1.bf16.msra.mxu0 0
        %2846 = vmatprep.subr.bf16.mxu0 0
        %2847 = vmatpush1.bf16.msra.mxu0 0
        %2848 = vmatprep.subr.bf16.mxu0 0
        %2849 = vmatpush1.bf16.msra.mxu0 0
        %2850 = vmatprep.mubr.bf16.mxu0 0
        %2851 = vmatmul.mubr.bf16.gmra.mrb[0].mxu0 %v2816
        %v2852 = vpop.f32.mrb[0].mxu0
        %v2853 = vadd.f32 0.0, %v2852
        %v2854 = vpop.f32.mrb[0].mxu0
        %v2855 = vpop.f32.mrb[0].mxu0
        %v2856 = vadd.f32 0.0, %v2855
        %v2857 = vpop.f32.mrb[0].mxu0
        %2858 = vdwg.mxu0
        %v2859 = vpack.c.bf16 %v2715, %v2712
        %v2860 = vpack.c.bf16 %v2762, %v2759
        %v2861 = vpack.c.bf16 %v2809, %v2806
        %v2862 = vpack.c.bf16 %v2856, %v2853
        %v2863 = vld [vmem:[#allocation7 + $0x30] sm:$0xf]
        %v2864 = vld [vmem:[#allocation7 + $0x34] sm:$0xf]
        %v2865 = vld [vmem:[#allocation7 + $0x38] sm:$0xf]
        %v2866 = vld [vmem:[#allocation7 + $0x3c] sm:$0xf]
        %v2871 = vunpack.c.l.b16 %v2863
        %v2872 = vunpack.c.l.b16 %v2864
        %v2873 = vunpack.c.l.b16 %v2865
        %v2874 = vunpack.c.l.b16 %v2866
        %v2875 = vpack.c.b16 %v2872, %v2871
        %v2876 = vpack.c.b16 %v2874, %v2873
        %v2880 = vsel %vm616, %v2859, 0
        %v2883 = vsel %vm616, %v2860, 0
        %v2886 = vsel %vm616, %v2861, 0
        %v2889 = vsel %vm616, %v2862, 0
        %2891 = vmatprep.subr.bf16.mxu0 0
        %2892 = vmatpush1.bf16.msra.mxu0 %v2875
        %2893 = vmatprep.subr.bf16.mxu0 0
        %2894 = vmatpush1.bf16.msra.mxu0 %v2876
        %2895 = vmatprep.subr.bf16.mxu0 0
        %2896 = vmatpush1.bf16.msra.mxu0 0
        %2897 = vmatprep.subr.bf16.mxu0 0
        %2898 = vmatpush1.bf16.msra.mxu0 0
        %2899 = vmatprep.subr.bf16.mxu0 0
        %2900 = vmatpush1.bf16.msra.mxu0 0
        %2901 = vmatprep.subr.bf16.mxu0 0
        %2902 = vmatpush1.bf16.msra.mxu0 0
        %2903 = vmatprep.subr.bf16.mxu0 0
        %2904 = vmatpush1.bf16.msra.mxu0 0
        %2905 = vmatprep.subr.bf16.mxu0 0
        %2906 = vmatpush1.bf16.msra.mxu0 0
        %2907 = vmatprep.subr.bf16.mxu0 0
        %2908 = vmatpush1.bf16.msra.mxu0 0
        %2909 = vmatprep.subr.bf16.mxu0 0
        %2910 = vmatpush1.bf16.msra.mxu0 0
        %2911 = vmatprep.subr.bf16.mxu0 0
        %2912 = vmatpush1.bf16.msra.mxu0 0
        %2913 = vmatprep.subr.bf16.mxu0 0
        %2914 = vmatpush1.bf16.msra.mxu0 0
        %2915 = vmatprep.subr.bf16.mxu0 0
        %2916 = vmatpush1.bf16.msra.mxu0 0
        %2917 = vmatprep.subr.bf16.mxu0 0
        %2918 = vmatpush1.bf16.msra.mxu0 0
        %2919 = vmatprep.subr.bf16.mxu0 0
        %2920 = vmatpush1.bf16.msra.mxu0 0
        %2921 = vmatprep.subr.bf16.mxu0 0
        %2922 = vmatpush1.bf16.msra.mxu0 0
        %2923 = vmatprep.mubr.bf16.mxu0 0
        %2924 = vmatmul.mubr.bf16.gmra.mrb[0].mxu0 %v2880
        %v2925 = vpop.f32.mrb[0].mxu0
        %v2926 = vadd.f32 0.0, %v2925
        %v2927 = vpop.f32.mrb[0].mxu0
        %v2928 = vpop.f32.mrb[0].mxu0
        %v2929 = vadd.f32 0.0, %v2928
        %v2930 = vpop.f32.mrb[0].mxu0
        %2931 = vmatprep.mubr.bf16.mxu0 0
        %2932 = vmatmul.mubr.bf16.gmra.mrb[0].mxu0 %v2883
        %v2933 = vpop.f32.mrb[0].mxu0
        %v2934 = vadd.f32 0.0, %v2933
        %v2935 = vpop.f32.mrb[0].mxu0
        %v2936 = vpop.f32.mrb[0].mxu0
        %v2937 = vadd.f32 0.0, %v2936
        %v2938 = vpop.f32.mrb[0].mxu0
        %2939 = vmatprep.mubr.bf16.mxu0 0
        %2940 = vmatmul.mubr.bf16.gmra.mrb[0].mxu0 %v2886
        %v2941 = vpop.f32.mrb[0].mxu0
        %v2942 = vadd.f32 0.0, %v2941
        %v2943 = vpop.f32.mrb[0].mxu0
        %v2944 = vpop.f32.mrb[0].mxu0
        %v2945 = vadd.f32 0.0, %v2944
        %v2946 = vpop.f32.mrb[0].mxu0
        %2947 = vmatprep.mubr.bf16.mxu0 0
        %2948 = vmatmul.mubr.bf16.gmra.mrb[0].mxu0 %v2889
        %v2949 = vpop.f32.mrb[0].mxu0
        %v2950 = vadd.f32 0.0, %v2949
        %v2951 = vpop.f32.mrb[0].mxu0
        %v2952 = vpop.f32.mrb[0].mxu0
        %v2953 = vadd.f32 0.0, %v2952
        %v2954 = vpop.f32.mrb[0].mxu0
        %2955 = vdwg.mxu0
        %v2956 = vadd.f32 %v2367, %v2926
        %v2957 = vadd.f32 %v2368, %v2929
        %v2958 = vadd.f32 %v2369, %v2934
        %v2959 = vadd.f32 %v2370, %v2937
        %v2960 = vadd.f32 %v2371, %v2942
        %v2961 = vadd.f32 %v2372, %v2945
        %v2962 = vadd.f32 %v2373, %v2950
        %v2963 = vadd.f32 %v2374, %v2953
        %vm2964 = vcmp.ge.f32.partialorder %v2956, 0.0
        %vm2965 = vcmp.ge.f32.partialorder %v2957, 0.0
        %vm2966 = vcmp.ge.f32.partialorder %v2958, 0.0
        %vm2967 = vcmp.ge.f32.partialorder %v2959, 0.0
        %vm2968 = vcmp.ge.f32.partialorder %v2960, 0.0
        %vm2969 = vcmp.ge.f32.partialorder %v2961, 0.0
        %vm2970 = vcmp.ge.f32.partialorder %v2962, 0.0
        %vm2971 = vcmp.ge.f32.partialorder %v2963, 0.0
        %v2972 = vmul.f32 %v2956, 0.2
        %v2973 = vmul.f32 %v2957, 0.2
        %v2974 = vmul.f32 %v2958, 0.2
        %v2975 = vmul.f32 %v2959, 0.2
        %v2976 = vmul.f32 %v2960, 0.2
        %v2977 = vmul.f32 %v2961, 0.2
        %v2978 = vmul.f32 %v2962, 0.2
        %v2979 = vmul.f32 %v2963, 0.2
        %v2980 = vsel %vm2964, %v2956, %v2972
        %v2981 = vsel %vm2965, %v2957, %v2973
        %v2982 = vsel %vm2966, %v2958, %v2974
        %v2983 = vsel %vm2967, %v2959, %v2975
        %v2984 = vsel %vm2968, %v2960, %v2976
        %v2985 = vsel %vm2969, %v2961, %v2977
        %v2986 = vsel %vm2970, %v2962, %v2978
        %v2987 = vsel %vm2971, %v2963, %v2979
        %2988 = vst [vmem:[%s272] sm:$0xff] %v2980
        %2989 = vst [vmem:[%s272 + $0x8] sm:$0xff] %v2981
        %2990 = vst [vmem:[%s272 + $0x10] sm:$0xff] %v2982
        %2991 = vst [vmem:[%s272 + $0x18] sm:$0xff] %v2983
        %2992 = vst [vmem:[%s272 + $0x20] sm:$0xff] %v2984
        %2993 = vst [vmem:[%s272 + $0x28] sm:$0xff] %v2985
        %2994 = vst [vmem:[%s272 + $0x30] sm:$0xff] %v2986
        %2995 = vst [vmem:[%s272 + $0x38] sm:$0xff] %v2987
        %s2996 = sand.u32 %s141, 1
        %s2997 = scalar_lea.sflag [#allocation4], %s2996
        %s2998 = sand.u32 %s141, 1
        %s2999 = smul.addr %s2998, 64
        %s3000 = scalar_lea.vmem [#allocation8], %s2999
        // Predicated region
        $region53: #{tpu_custom_call.1} parent=39 // pred_check
          %p3001 = pneg %p151
        $region54: #{tpu_custom_call.1} parent=39 // pred_check_branch
          %3003 = sbr.rel (%p3001) target = $region56
        $region55: #{tpu_custom_call.1} parent=39 // pred_region
          %s3004 = smul.u32 4, %s23
          %s3006 = ssub.s32 1024, 1024
          %3007 = vsyncadd %s2997, %s3006
          %s3008 = smul.addr %s3004, 2
          %s3009 = smul.addr %s3008, 128
          %s3010 = scalar_lea.hbm %s5, %s3009
          %s3011 = sshll.u32 %s3000, 4
          %s3012 = int_to_ptr.vmem [resolvable:$true] %s3011
          %3017 = dma.vmem_to_hbm [thread:$0]  %s3012, 1024, %s3010, %s2997, 128, 128, 8
        $region56: #{tpu_custom_call.1} parent=39 // pred_fallthru
          _
      $region40: #{tpu_custom_call.1} parent=5 // pred_fallthru
        _
      %p3018 = scmp.le.s32.totalorder 2, %s18
      // Predicated region
      $region57: #{tpu_custom_call.1} parent=5 // pred_check
        %p3019 = pneg %p3018
      $region58: #{tpu_custom_call.1} parent=5 // pred_check_branch
        %3021 = sbr.rel (%p3019) target = $region60
      $region59: #{tpu_custom_call.1} parent=5 // pred_region
        %s3022 = ssub.s32 %s18, 2
        // Predicated region
        $region61: #{tpu_custom_call.1} parent=59 // pred_check
          %p3023 = pneg %p157
        $region62: #{tpu_custom_call.1} parent=59 // pred_check_branch
          %3025 = sbr.rel (%p3023) target = $region64
        $region63: #{tpu_custom_call.1} parent=59 // pred_region
          %s3026 = sand.u32 %s142, 1
          %s3027 = scalar_lea.sflag [#allocation4], %s3026
          %s3028 = sand.u32 %s142, 1
          %s3029 = smul.addr %s3028, 64
          %s3030 = scalar_lea.vmem [#allocation8], %s3029
          %3031 = dma.done %s3027, 1024
        $region64: #{tpu_custom_call.1} parent=59 // pred_fallthru
          _
      $region60: #{tpu_custom_call.1} parent=5 // pred_fallthru
        _
    $region6: #{tpu_custom_call.1} parent=1 // loop_footer
      %s22 = sadd.s32 1, %s18
    $region7: #{tpu_custom_call.1} parent=1 // loop_footer_branch
      %17 = sbr.rel target = $region3
    $region8: #{tpu_custom_call.1} parent=1 // loop_exit
      _
    %3032 = vsyncpa [#allocation3], 1
    %s3033 = scalar_lea.sflag [#allocation3], 1
    %3034 = vsyncpa %s3033, 1
    %3035 = vsyncpa [#allocation6], 1
    %3036 = vsyncpa [#allocation4], 1
    %s3037 = scalar_lea.sflag [#allocation4], 1
    %3038 = vsyncpa %s3037, 1

</llo_original>
